<compile_context>
chip_gen: v7x
topology: tpu7x:2x2x1
jax: 0.10.0
libtpu: 0.0.40
codegen_flags: <defaults>
</compile_context>

<pallas_src>
import functools
import math

import jax
import jax.numpy as jnp
from jax import lax
from jax.experimental import pallas as pl
from jax.experimental.pallas import tpu as pltpu

F32 = jnp.float32
BF16 = jnp.bfloat16
LN_EPS = 1e-8      # LayerNormalization(eps=1e-08) in the reference
D_EPS = 1e-8       # torch.sqrt(d_sq + 1e-08)


# --------------------------------------------------------------------------- helpers

@functools.lru_cache(maxsize=None)
def _vmem_limit_bytes():
    """Per-generation scoped-VMEM limit (v7x has only 64 MiB physical)."""
    try:
        cap = int(pltpu.get_tpu_info().vmem_capacity_bytes)
    except Exception:
        cap = 64 * 1024 * 1024
    return int(min(max(cap - 16 * 1024 * 1024, 32 * 1024 * 1024), 100 * 1024 * 1024))


def _pick_block(n, target):
    """Largest power-of-two tile (>=8, <=target) dividing n with >=2 grid steps,
    else the full extent (full dims are always legal block dims)."""
    c = target
    while c >= 8:
        if c < n and n % c == 0:
            return c
        c //= 2
    return n


def _silu(x):
    return x * jax.nn.sigmoid(x)


def _bf16_dot(a, b):
    # bf16 MXU operands, f32 accumulation.
    return jnp.dot(a.astype(BF16), b.astype(BF16), preferred_element_type=F32)


# --------------------------------------------------------------------------- fused EnBaseLayer kernel

def _en_layer_kernel(hi_ref, hj_ref, side_ref, dst_ref,
                     h_ref, x_ref, mask_ref,
                     w1hi_ref, w1hj_ref, w1g_ref, w1et_ref, b1_ref,
                     w2_ref, b2_ref, infw_ref, infb_ref,
                     xw1_ref, xb1_ref, xw2_ref,
                     nw1a_ref, nw1b_ref, nb1_ref, nw2_ref, nb2_ref,
                     off_ref,
                     ho_ref, xo_ref,
                     acc_mi, acc_dx,
                     *, coeff):
    """Edge geometry + edge MLP + edge_inf + x_mlp + index-based scatter (one-hot
    built in-kernel from dst indices) + node MLP / residual / coord-update epilogue.

    grid = (node-row tiles [parallel], edge tiles [arbitrary reduction])."""
    i = pl.program_id(0)                      # node-row tile
    j = pl.program_id(1)                      # edge tile (reduction)

    @pl.when(j == 0)
    def _():
        acc_mi[...] = jnp.zeros_like(acc_mi)
        acc_dx[...] = jnp.zeros_like(acc_dx)

    hi = hi_ref[...]                           # (tE, H)
    hj = hj_ref[...]                           # (tE, H)
    side = side_ref[...]                       # (tE, 8) = [rel_x | edge_type | pad]
    rx = side[:, 0:3]
    et = side[:, 3:7]

    # --- geometry: |rel_x|, Gaussian smearing ---
    d_sq = jnp.sum(rx * rx, axis=-1, keepdims=True)          # (tE, 1)
    d = jnp.sqrt(d_sq + D_EPS)
    diff = d - off_ref[...]                                    # (tE, G)
    d_feat = jnp.exp(coeff * diff * diff)

    # --- edge MLP: split-weight matmuls replace cat([hi, hj, d_feat, edge_type]) ---
    pre1 = (_bf16_dot(hi, w1hi_ref[...]) + _bf16_dot(hj, w1hj_ref[...])
            + _bf16_dot(d_feat, w1g_ref[...]) + _bf16_dot(et, w1et_ref[...])
            + b1_ref[...])
    mij = _silu(_bf16_dot(_silu(pre1), w2_ref[...]) + b2_ref[...])   # act_last=True

    # --- edge_inf / x_mlp heads ---
    eij = jax.nn.sigmoid(_bf16_dot(mij, infw_ref[...]) + infb_ref[...])   # (tE, 1)
    xm = _silu(_bf16_dot(mij, xw1_ref[...]) + xb1_ref[...])
    xgate = jnp.tanh(_bf16_dot(xm, xw2_ref[...]))                          # (tE, 1)

    # --- index-based scatter: one-hot built from dst indices (no HBM one-hot) ---
    tn = h_ref.shape[0]
    te = hi.shape[0]
    row_ids = i * tn + lax.broadcasted_iota(jnp.int32, (tn, te), 0)
    onehot = (row_ids == dst_ref[...]).astype(F32)             # (tn, tE)

    acc_mi[...] += jnp.dot(onehot.astype(BF16), (mij * eij).astype(BF16),
                           preferred_element_type=F32)          # (tn, H)
    wgt = 1.0 / (d + 1.0)
    acc_dx[...] += jnp.dot(onehot, rx * (wgt * xgate),
                           preferred_element_type=F32)          # (tn, 3) f32 for coords

    # --- epilogue: node MLP + h residual + coordinate update on resident accumulators ---
    @pl.when(j == pl.num_programs(1) - 1)
    def _():
        mi = acc_mi[...]
        hrow = h_ref[...]
        t = _silu(_bf16_dot(mi, nw1a_ref[...]) + _bf16_dot(hrow, nw1b_ref[...])
                  + nb1_ref[...])
        ho_ref[...] = hrow + _bf16_dot(t, nw2_ref[...]) + nb2_ref[...]
        xo_ref[...] = x_ref[...] + acc_dx[...] * mask_ref[...]


def pallas_en_layer(h, x, src, dst, edge_type, mask_ligand, p, offset, coeff):
    n, hidden = h.shape
    e = dst.shape[0]
    g = offset.shape[0]

    hi = h[dst]
    hj = h[src]
    rel_x = x[dst] - x[src]
    # pack the narrow per-edge side inputs [rel_x(3) | edge_type(4) | pad(1)] -> (E, 8)
    side = jnp.concatenate([rel_x, edge_type, jnp.zeros((e, 1), F32)], axis=-1)

    te = _pick_block(e, 512)
    nb_e = e // te
    tn = _pick_block(n, 256)
    nb_n = n // tn

    dst3 = dst.astype(jnp.int32).reshape(nb_e, 1, te)

    w1 = p["edge_w1"]
    w1hi, w1hj = w1[:hidden], w1[hidden:2 * hidden]
    w1g, w1et = w1[2 * hidden:2 * hidden + g], w1[2 * hidden + g:]
    b1 = p["edge_b1"].reshape(1, hidden)
    w2, b2 = p["edge_w2"], p["edge_b2"].reshape(1, hidden)
    infw, infb = p["inf_w"], p["inf_b"].reshape(1, 1)
    xw1, xb1, xw2 = p["x_w1"], p["x_b1"].reshape(1, hidden), p["x_w2"]
    nw1 = p["node_w1"]
    nw1a, nw1b = nw1[:hidden], nw1[hidden:]
    nb1 = p["node_b1"].reshape(1, hidden)
    nw2, nb2 = p["node_w2"], p["node_b2"].reshape(1, hidden)
    off2 = offset.reshape(1, g)
    mask2 = mask_ligand.reshape(n, 1).astype(F32)

    def edge_blk(feat):
        return pl.BlockSpec((te, feat), lambda i, j: (j, 0))

    def row_blk(feat):
        return pl.BlockSpec((tn, feat), lambda i, j: (i, 0))

    def full2(shape):
        return pl.BlockSpec(shape, lambda i, j: (0, 0))

    ho, xo = pl.pallas_call(
        functools.partial(_en_layer_kernel, coeff=coeff),
        out_shape=(jax.ShapeDtypeStruct((n, hidden), F32),
                   jax.ShapeDtypeStruct((n, 3), F32)),
        grid=(nb_n, nb_e),
        in_specs=[
            edge_blk(hidden),                                     # hi
            edge_blk(hidden),                                     # hj
            edge_blk(8),                                          # [rel_x | edge_type | pad]
            pl.BlockSpec((None, 1, te), lambda i, j: (j, 0, 0)),  # dst indices
            row_blk(hidden),                                      # h (residual)
            row_blk(3),                                           # x
            row_blk(1),                                           # mask_ligand
            full2((hidden, hidden)),                              # edge w1[hi rows]
            full2((hidden, hidden)),                              # edge w1[hj rows]
            full2((g, hidden)),                                   # edge w1[d_feat rows]
            full2((4, hidden)),                                   # edge w1[edge_type rows]
            full2((1, hidden)),                                   # edge b1
            full2((hidden, hidden)),                              # edge w2
            full2((1, hidden)),                                   # edge b2
            full2((hidden, 1)),                                   # edge_inf w
            full2((1, 1)),                                        # edge_inf b
            full2((hidden, hidden)),                              # x_mlp w1
            full2((1, hidden)),                                   # x_mlp b1
            full2((hidden, 1)),                                   # x_mlp w2
            full2((hidden, hidden)),                              # node w1[mi rows]
            full2((hidden, hidden)),                              # node w1[h rows]
            full2((1, hidden)),                                   # node b1
            full2((hidden, hidden)),                              # node w2
            full2((1, hidden)),                                   # node b2
            full2((1, g)),                                        # gaussian offsets
        ],
        out_specs=(pl.BlockSpec((tn, hidden), lambda i, j: (i, 0)),
                   pl.BlockSpec((tn, 3), lambda i, j: (i, 0))),
        scratch_shapes=[pltpu.VMEM((tn, hidden), F32),            # scatter(mij*eij)
                        pltpu.VMEM((tn, 3), F32)],                # scatter(rel_x*w*xw)
        compiler_params=pltpu.CompilerParams(
            dimension_semantics=("parallel", "arbitrary"),
            vmem_limit_bytes=_vmem_limit_bytes()),
    )(hi, hj, side, dst3, h, x, mask2,
      w1hi, w1hj, w1g, w1et, b1, w2, b2, infw, infb, xw1, xb1, xw2,
      nw1a, nw1b, nb1, nw2, nb2, off2)
    return ho, xo


# --------------------------------------------------------------------------- encoder kernels

def _qkv_heads_kernel(h_ref, wq_ref, wk_ref, wv_ref, bq_ref, bk_ref, bv_ref,
                      q_ref, k_ref, v_ref):
    """Per-(head, row-tile) qkv projection; outputs land directly in (heads, N, hd)
    layout so the flash kernel can batch heads without any XLA transpose."""
    hrow = h_ref[...]
    q_ref[...] = _bf16_dot(hrow, wq_ref[...]) + bq_ref[...]
    k_ref[...] = _bf16_dot(hrow, wk_ref[...]) + bk_ref[...]
    v_ref[...] = _bf16_dot(hrow, wv_ref[...]) + bv_ref[...]


def pallas_qkv_heads(h, qkv_w, qkv_b, num_heads):
    n, d_model = h.shape
    hd = d_model // num_heads
    tn = _pick_block(n, 256)

    # Reference layout: qkv = Linear(h) -> reshape(B, S, heads, 3*hd) -> chunk(q, k, v).
    w4 = qkv_w.reshape(d_model, num_heads, 3, hd)
    b4 = qkv_b.reshape(num_heads, 3, hd)
    wq = jnp.transpose(w4[:, :, 0, :], (1, 0, 2))   # (heads, d_model, hd)
    wk = jnp.transpose(w4[:, :, 1, :], (1, 0, 2))
    wv = jnp.transpose(w4[:, :, 2, :], (1, 0, 2))
    bq = b4[:, 0, :].reshape(num_heads, 1, hd)
    bk = b4[:, 1, :].reshape(num_heads, 1, hd)
    bv = b4[:, 2, :].reshape(num_heads, 1, hd)

    head_w = pl.BlockSpec((None, d_model, hd), lambda hh, i: (hh, 0, 0))
    head_b = pl.BlockSpec((None, 1, hd), lambda hh, i: (hh, 0, 0))
    row = pl.BlockSpec((tn, d_model), lambda hh, i: (i, 0))
    out = pl.BlockSpec((None, tn, hd), lambda hh, i: (hh, i, 0))
    oshape = jax.ShapeDtypeStruct((num_heads, n, hd), F32)

    return pl.pallas_call(
        _qkv_heads_kernel,
        out_shape=(oshape, oshape, oshape),
        grid=(num_heads, n // tn),
        in_specs=[row, head_w, head_w, head_w, head_b, head_b, head_b],
        out_specs=(out, out, out),
        compiler_params=pltpu.CompilerParams(
            dimension_semantics=("parallel", "parallel"),
            vmem_limit_bytes=_vmem_limit_bytes()),
    )(h, wq, wk, wv, bq, bk, bv)


def _flash_kernel(q_ref, k_ref, v_ref, o_ref, m_sc, l_sc, acc_sc, *, scale):
    """Flash attention: Q tiles ("parallel") x KV tiles ("arbitrary"), heads batched
    in a single lax.dot_general, online softmax with VMEM-resident running stats."""
    ki = pl.program_id(1)

    @pl.when(ki == 0)
    def _():
        m_sc[...] = jnp.full(m_sc.shape, -jnp.inf, m_sc.dtype)
        l_sc[...] = jnp.zeros_like(l_sc)
        acc_sc[...] = jnp.zeros_like(acc_sc)

    q = q_ref[...].astype(BF16)                    # (heads, tq, hd)
    k = k_ref[...].astype(BF16)                    # (heads, tk, hd)
    v = v_ref[...].astype(BF16)

    s = lax.dot_general(q, k, (((2,), (2,)), ((0,), (0,))),
                        preferred_element_type=F32) * scale        # (heads, tq, tk)
    m_prev = m_sc[...]
    m_new = jnp.maximum(m_prev, jnp.max(s, axis=-1, keepdims=True))
    alpha = jnp.exp(m_prev - m_new)
    p = jnp.exp(s - m_new)
    l_sc[...] = alpha * l_sc[...] + jnp.sum(p, axis=-1, keepdims=True)
    acc_sc[...] = alpha * acc_sc[...] + lax.dot_general(
        p.astype(BF16), v, (((2,), (1,)), ((0,), (0,))),
        preferred_element_type=F32)
    m_sc[...] = m_new

    @pl.when(ki == pl.num_programs(1) - 1)
    def _():
        # exact division for the softmax denominator (approx reciprocal was flagged).
        o_ref[...] = (acc_sc[...] / l_sc[...]).astype(o_ref.dtype)


def pallas_flash_attention(q, k, v):
    num_heads, n, hd = q.shape
    tq = _pick_block(n, 256)
    tk = _pick_block(n, 512)
    scale = 1.0 / math.sqrt(hd)
    qspec = pl.BlockSpec((num_heads, tq, hd), lambda qi, ki: (0, qi, 0))
    kspec = pl.BlockSpec((num_heads, tk, hd), lambda qi, ki: (0, ki, 0))
    return pl.pallas_call(
        functools.partial(_flash_kernel, scale=scale),
        out_shape=jax.ShapeDtypeStruct((num_heads, n, hd), F32),
        grid=(n // tq, n // tk),
        in_specs=[qspec, kspec, kspec],
        out_specs=qspec,
        scratch_shapes=[pltpu.VMEM((num_heads, tq, 1), F32),
                        pltpu.VMEM((num_heads, tq, 1), F32),
                        pltpu.VMEM((num_heads, tq, hd), F32)],
        compiler_params=pltpu.CompilerParams(
            dimension_semantics=("parallel", "arbitrary"),
            vmem_limit_bytes=_vmem_limit_bytes()),
    )(q, k, v)


def _encoder_tail_kernel(vals_ref, res_ref, ow_ref, ob_ref, g1_ref, be1_ref,
                         fw1_ref, fb1_ref, fw2_ref, fb2_ref, g2_ref, be2_ref,
                         o_ref, *, eps):
    """Fused out-projection + residual + LN1 + FFN (Linear->ReLU->Linear) + residual + LN2."""
    y = _bf16_dot(vals_ref[...], ow_ref[...]) + ob_ref[...] + res_ref[...]
    mean = jnp.mean(y, axis=-1, keepdims=True)
    var = jnp.mean((y - mean) ** 2, axis=-1, keepdims=True)
    y = g1_ref[...] * ((y - mean) * lax.rsqrt(var + eps)) + be1_ref[...]

    t = jnp.maximum(_bf16_dot(y, fw1_ref[...]) + fb1_ref[...], 0.0)
    z = _bf16_dot(t, fw2_ref[...]) + fb2_ref[...] + y
    mean = jnp.mean(z, axis=-1, keepdims=True)
    var = jnp.mean((z - mean) ** 2, axis=-1, keepdims=True)
    o_ref[...] = g2_ref[...] * ((z - mean) * lax.rsqrt(var + eps)) + be2_ref[...]


def pallas_encoder_tail(vals, h_res, p, eps=LN_EPS):
    n, d_model = vals.shape
    d_ffn = p["ffn_w1"].shape[1]
    tn = _pick_block(n, 256)
    row = pl.BlockSpec((tn, d_model), lambda i: (i, 0))

    def full2(shape):
        return pl.BlockSpec(shape, lambda i: (0, 0))

    return pl.pallas_call(
        functools.partial(_encoder_tail_kernel, eps=eps),
        out_shape=jax.ShapeDtypeStruct((n, d_model), F32),
        grid=(n // tn,),
        in_specs=[row, row,
                  full2((d_model, d_model)), full2((1, d_model)),
                  full2((1, d_model)), full2((1, d_model)),
                  full2((d_model, d_ffn)), full2((1, d_ffn)),
                  full2((d_ffn, d_model)), full2((1, d_model)),
                  full2((1, d_model)), full2((1, d_model))],
        out_specs=row,
        compiler_params=pltpu.CompilerParams(
            dimension_semantics=("parallel",),
            vmem_limit_bytes=_vmem_limit_bytes()),
    )(vals, h_res,
      p["out_w"], p["out_b"].reshape(1, d_model),
      p["g1"].reshape(1, d_model), p["be1"].reshape(1, d_model),
      p["ffn_w1"], p["ffn_b1"].reshape(1, d_ffn),
      p["ffn_w2"], p["ffn_b2"].reshape(1, d_model),
      p["g2"].reshape(1, d_model), p["be2"].reshape(1, d_model))


# --------------------------------------------------------------------------- graph glue (plain JAX)

def knn_graph(x, batch, k):
    # TODO(synk): top-k neighbor search has no clean Pallas equivalent; done in JAX.
    # TODO(synk): graphs with fewer than k same-batch neighbors would pick masked
    # (inf-distance) entries; fine for the toy sizes used here.
    n = x.shape[0]
    d2 = jnp.sum((x[:, None, :] - x[None, :, :]) ** 2, axis=-1)
    same = batch[:, None] == batch[None, :]
    eye = jnp.eye(n, dtype=bool)
    d2 = jnp.where(same & ~eye, d2, jnp.inf)
    _, idx = lax.top_k(-d2, k)                                 # k nearest sources per target
    src = idx.reshape(-1)
    dst = jnp.repeat(jnp.arange(n), k)
    return src, dst                                            # flow: source_to_target


def build_edge_type(src, dst, mask_ligand):
    n_src = mask_ligand[src] == 1.0
    n_dst = mask_ligand[dst] == 1.0
    et = jnp.where(n_src & n_dst, 0,
         jnp.where(n_src & ~n_dst, 1,
         jnp.where(~n_src & n_dst, 2, 3)))
    return jax.nn.one_hot(et, 4, dtype=F32)


# --------------------------------------------------------------------------- model layers

def encoder_layer(p, h, num_heads):
    n, d_model = h.shape
    q, k, v = pallas_qkv_heads(h, p["qkv_w"], p["qkv_b"], num_heads)
    vals3 = pallas_flash_attention(q, k, v)                    # (heads, N, hd)
    # Faithful to the reference MultiHeadAttention: values.reshape(B, S, H*hd) is
    # applied to the (B, H, S, hd) tensor WITHOUT permuting heads back (row-major
    # reshape reproduces the reference bit-for-bit with batch = 1).
    vals = vals3.reshape(n, d_model)
    return pallas_encoder_tail(vals, h, p)


def egtf_forward(params, h, x, mask_ligand, batch, *, k, num_r_gaussian,
                 r_max=10.0, num_heads=4):
    g = num_r_gaussian
    offset = jnp.linspace(0.0, r_max, g).astype(F32)
    step = r_max / (g - 1)
    coeff = -0.5 / (step * step)

    for lp in params["layers"]:
        src, dst = knn_graph(x, batch, k)
        edge_type = build_edge_type(src, dst, mask_ligand)
        h, x = pallas_en_layer(h, x, src, dst, edge_type, mask_ligand, lp, offset, coeff)

    for ep in params["encoders"]:
        h = encoder_layer(ep, h, num_heads)

    # torch EncoderLayer unsqueezes a 2-D input to batch=1, so final h is (1, N, H)
    return {"x": x, "h": h[None]}


# --------------------------------------------------------------------------- parameter init

def init_params(key, hidden_dim, edge_feat_dim, num_r_gaussian,
                num_layers, num_encoder, num_ffn):
    keys = iter(jax.random.split(key, 512))

    def dense(shape, scale=None):
        s = scale if scale is not None else (1.0 / math.sqrt(shape[0]))
        return (s * jax.random.normal(next(keys), shape)).astype(F32)

    def zeros(shape):
        return jnp.zeros(shape, F32)

    h = hidden_dim
    e_in = 2 * h + edge_feat_dim + num_r_gaussian
    layers = []
    for _ in range(num_layers):
        layers.append(dict(
            edge_w1=dense((e_in, h)), edge_b1=zeros((h,)),
            edge_w2=dense((h, h)), edge_b2=zeros((h,)),
            inf_w=dense((h, 1)), inf_b=zeros((1,)),
            x_w1=dense((h, h)), x_b1=zeros((h,)),
            x_w2=dense((h, 1), scale=0.001 / math.sqrt(h)),   # xavier gain=0.001 analogue
            node_w1=dense((2 * h, h)), node_b1=zeros((h,)),
            node_w2=dense((h, h)), node_b2=zeros((h,)),
        ))
    encoders = []
    for _ in range(num_encoder):
        encoders.append(dict(
            qkv_w=dense((h, 3 * h)), qkv_b=zeros((3 * h,)),
            out_w=dense((h, h)), out_b=zeros((h,)),
            g1=jnp.ones((h,), F32), be1=zeros((h,)),
            ffn_w1=dense((h, num_ffn)), ffn_b1=zeros((num_ffn,)),
            ffn_w2=dense((num_ffn, h)), ffn_b2=zeros((h,)),
            g2=jnp.ones((h,), F32), be2=zeros((h,)),
        ))
    return dict(layers=layers, encoders=encoders)


# --------------------------------------------------------------------------- main

if __name__ == "__main__":
    N = 16            # total nodes (2 graphs of 8)
    HIDDEN = 32       # hidden_dim / d_model
    NUM_GAUSS = 16    # num_r_gaussian
    EDGE_FEAT = 4     # edge_type one-hot
    K = 4             # knn k  -> E = 64
    NUM_LAYERS = 2
    NUM_ENCODER = 1
    NUM_HEADS = 4
    NUM_FFN = 64

    key = jax.random.PRNGKey(0)
    k_h, k_x, k_p = jax.random.split(key, 3)

    h = jax.random.normal(k_h, (N, HIDDEN), F32)
    x = 3.0 * jax.random.normal(k_x, (N, 3), F32)
    batch = jnp.repeat(jnp.arange(2), N // 2)                    # two graphs
    mask_ligand = (jnp.arange(N) % 2).astype(F32)                # alternating ligand/protein

    params = init_params(k_p, HIDDEN, EDGE_FEAT, NUM_GAUSS,
                         NUM_LAYERS, NUM_ENCODER, NUM_FFN)

    fwd = jax.jit(functools.partial(
        egtf_forward, k=K, num_r_gaussian=NUM_GAUSS, r_max=10.0, num_heads=NUM_HEADS))
    out = fwd(params, h, x, mask_ligand, batch)

    jax.block_until_ready(out["h"])
    jax.block_until_ready(out["x"])
    assert out["h"].shape == (1, N, HIDDEN)
    assert out["x"].shape == (N, 3)
    assert bool(jnp.isfinite(out["h"]).all()) and bool(jnp.isfinite(out["x"]).all())
    print("KERNEL_OK")
</pallas_src>

<mosaic_0001>
module attributes {stable_mosaic.version = 11 : i64} {
  func.func @_en_layer_kernel(%arg0: i32, %arg1: i32, %arg2: memref<32x32xf32, #tpu.memory_space<vmem>>, %arg3: memref<32x32xf32, #tpu.memory_space<vmem>>, %arg4: memref<32x8xf32, #tpu.memory_space<vmem>>, %arg5: memref<1x1x32xi32, #tpu.memory_space<vmem>>, %arg6: memref<8x32xf32, #tpu.memory_space<vmem>>, %arg7: memref<8x3xf32, #tpu.memory_space<vmem>>, %arg8: memref<8x1xf32, #tpu.memory_space<vmem>>, %arg9: memref<32x32xf32, #tpu.memory_space<vmem>>, %arg10: memref<32x32xf32, #tpu.memory_space<vmem>>, %arg11: memref<16x32xf32, #tpu.memory_space<vmem>>, %arg12: memref<4x32xf32, #tpu.memory_space<vmem>>, %arg13: memref<1x32xf32, #tpu.memory_space<vmem>>, %arg14: memref<32x32xf32, #tpu.memory_space<vmem>>, %arg15: memref<1x32xf32, #tpu.memory_space<vmem>>, %arg16: memref<32x1xf32, #tpu.memory_space<vmem>>, %arg17: memref<1x1xf32, #tpu.memory_space<vmem>>, %arg18: memref<32x32xf32, #tpu.memory_space<vmem>>, %arg19: memref<1x32xf32, #tpu.memory_space<vmem>>, %arg20: memref<32x1xf32, #tpu.memory_space<vmem>>, %arg21: memref<32x32xf32, #tpu.memory_space<vmem>>, %arg22: memref<32x32xf32, #tpu.memory_space<vmem>>, %arg23: memref<1x32xf32, #tpu.memory_space<vmem>>, %arg24: memref<32x32xf32, #tpu.memory_space<vmem>>, %arg25: memref<1x32xf32, #tpu.memory_space<vmem>>, %arg26: memref<1x16xf32, #tpu.memory_space<vmem>>, %arg27: memref<8x32xf32, #tpu.memory_space<vmem>>, %arg28: memref<8x3xf32, #tpu.memory_space<vmem>>, %arg29: memref<8x32xf32, #tpu.memory_space<vmem>>, %arg30: memref<8x3xf32, #tpu.memory_space<vmem>>) attributes {dimension_semantics = [#tpu.dimension_semantics<parallel>, #tpu.dimension_semantics<arbitrary>], iteration_bounds = array<i64: 2, 2>, scalar_prefetch = 0 : i64, scratch_operands = 2 : i64, tpu.core_type = #tpu.core_type<tc>, window_params = [{transform_indices = @transform_0, window_bounds = array<i64: 32, 32>}, {transform_indices = @transform_1, window_bounds = array<i64: 32, 32>}, {transform_indices = @transform_2, window_bounds = array<i64: 32, 8>}, {transform_indices = @transform_3, window_bounds = array<i64: 1, 1, 32>}, {transform_indices = @transform_4, window_bounds = array<i64: 8, 32>}, {transform_indices = @transform_5, window_bounds = array<i64: 8, 3>}, {transform_indices = @transform_6, window_bounds = array<i64: 8, 1>}, {pipeline_mode = #tpu.pipeline_mode<synchronous>, transform_indices = @transform_7, window_bounds = array<i64: 32, 32>}, {pipeline_mode = #tpu.pipeline_mode<synchronous>, transform_indices = @transform_8, window_bounds = array<i64: 32, 32>}, {pipeline_mode = #tpu.pipeline_mode<synchronous>, transform_indices = @transform_9, window_bounds = array<i64: 16, 32>}, {pipeline_mode = #tpu.pipeline_mode<synchronous>, transform_indices = @transform_10, window_bounds = array<i64: 4, 32>}, {pipeline_mode = #tpu.pipeline_mode<synchronous>, transform_indices = @transform_11, window_bounds = array<i64: 1, 32>}, {pipeline_mode = #tpu.pipeline_mode<synchronous>, transform_indices = @transform_12, window_bounds = array<i64: 32, 32>}, {pipeline_mode = #tpu.pipeline_mode<synchronous>, transform_indices = @transform_13, window_bounds = array<i64: 1, 32>}, {pipeline_mode = #tpu.pipeline_mode<synchronous>, transform_indices = @transform_14, window_bounds = array<i64: 32, 1>}, {pipeline_mode = #tpu.pipeline_mode<synchronous>, transform_indices = @transform_15, window_bounds = array<i64: 1, 1>}, {pipeline_mode = #tpu.pipeline_mode<synchronous>, transform_indices = @transform_16, window_bounds = array<i64: 32, 32>}, {pipeline_mode = #tpu.pipeline_mode<synchronous>, transform_indices = @transform_17, window_bounds = array<i64: 1, 32>}, {pipeline_mode = #tpu.pipeline_mode<synchronous>, transform_indices = @transform_18, window_bounds = array<i64: 32, 1>}, {pipeline_mode = #tpu.pipeline_mode<synchronous>, transform_indices = @transform_19, window_bounds = array<i64: 32, 32>}, {pipeline_mode = #tpu.pipeline_mode<synchronous>, transform_indices = @transform_20, window_bounds = array<i64: 32, 32>}, {pipeline_mode = #tpu.pipeline_mode<synchronous>, transform_indices = @transform_21, window_bounds = array<i64: 1, 32>}, {pipeline_mode = #tpu.pipeline_mode<synchronous>, transform_indices = @transform_22, window_bounds = array<i64: 32, 32>}, {pipeline_mode = #tpu.pipeline_mode<synchronous>, transform_indices = @transform_23, window_bounds = array<i64: 1, 32>}, {pipeline_mode = #tpu.pipeline_mode<synchronous>, transform_indices = @transform_24, window_bounds = array<i64: 1, 16>}, {transform_indices = @transform_25, window_bounds = array<i64: 8, 32>}, {transform_indices = @transform_26, window_bounds = array<i64: 8, 3>}]} {
    %c0_i32 = arith.constant 0 : i32
    %0 = arith.cmpi eq, %arg1, %c0_i32 : i32
    %1 = arith.extui %0 : i1 to i32
    %c0_i32_0 = arith.constant 0 : i32
    %2 = arith.cmpi ne, %1, %c0_i32_0 : i32
    scf.if %2 {
      %cst_62 = arith.constant 0.000000e+00 : f32
      %125 = vector.broadcast %cst_62 : f32 to vector<8x32xf32>
      %c0_63 = arith.constant 0 : index
      %c0_64 = arith.constant 0 : index
      %126 = vector.load %arg29[%c0_63, %c0_64] : memref<8x32xf32, #tpu.memory_space<vmem>>, vector<8x32xf32>
      tpu.vector_store %arg29[%c0_63, %c0_64], %125 {strides = array<i32>} : memref<8x32xf32, #tpu.memory_space<vmem>>, vector<8x32xf32>,
      %cst_65 = arith.constant 0.000000e+00 : f32
      %127 = vector.broadcast %cst_65 : f32 to vector<8x3xf32>
      %c0_66 = arith.constant 0 : index
      %c0_67 = arith.constant 0 : index
      %128 = vector.load %arg30[%c0_66, %c0_67] : memref<8x3xf32, #tpu.memory_space<vmem>>, vector<8x3xf32>
      tpu.vector_store %arg30[%c0_66, %c0_67], %127 {strides = array<i32>} : memref<8x3xf32, #tpu.memory_space<vmem>>, vector<8x3xf32>,
    } else {
    }
    %c0 = arith.constant 0 : index
    %c0_1 = arith.constant 0 : index
    %3 = vector.load %arg2[%c0, %c0_1] : memref<32x32xf32, #tpu.memory_space<vmem>>, vector<32x32xf32>
    %c0_2 = arith.constant 0 : index
    %c0_3 = arith.constant 0 : index
    %4 = vector.load %arg3[%c0_2, %c0_3] : memref<32x32xf32, #tpu.memory_space<vmem>>, vector<32x32xf32>
    %c0_4 = arith.constant 0 : index
    %c0_5 = arith.constant 0 : index
    %5 = vector.load %arg4[%c0_4, %c0_5] : memref<32x8xf32, #tpu.memory_space<vmem>>, vector<32x8xf32>
    %6 = vector.extract_strided_slice %5 {offsets = [0, 0], sizes = [32, 3], strides = [1, 1]} : vector<32x8xf32> to vector<32x3xf32>
    %7 = vector.extract_strided_slice %5 {offsets = [0, 3], sizes = [32, 4], strides = [1, 1]} : vector<32x8xf32> to vector<32x4xf32>
    %8 = arith.mulf %6, %6 : vector<32x3xf32>
    %cst = arith.constant dense<0.000000e+00> : vector<32xf32>
    %9 = vector.multi_reduction <add>, %8, %cst [1] : vector<32x3xf32> to vector<32xf32>
    %10 = vector.shape_cast %9 : vector<32xf32> to vector<32x1xf32>
    %cst_6 = arith.constant 9.99999993E-9 : f32
    %11 = vector.broadcast %cst_6 : f32 to vector<32x1xf32>
    %12 = arith.addf %10, %11 : vector<32x1xf32>
    %13 = math.sqrt %12 : vector<32x1xf32>
    %c0_7 = arith.constant 0 : index
    %c0_8 = arith.constant 0 : index
    %14 = vector.load %arg26[%c0_7, %c0_8] : memref<1x16xf32, #tpu.memory_space<vmem>>, vector<1x16xf32>
    %15 = vector.broadcast %13 : vector<32x1xf32> to vector<32x16xf32>
    %16 = vector.broadcast %14 : vector<1x16xf32> to vector<32x16xf32>
    %17 = arith.subf %15, %16 : vector<32x16xf32>
    %cst_9 = arith.constant -1.125000e+00 : f32
    %18 = vector.broadcast %cst_9 : f32 to vector<32x16xf32>
    %19 = arith.mulf %18, %17 : vector<32x16xf32>
    %20 = arith.mulf %19, %17 : vector<32x16xf32>
    %21 = math.exp %20 : vector<32x16xf32>
    %c0_10 = arith.constant 0 : index
    %c0_11 = arith.constant 0 : index
    %22 = vector.load %arg9[%c0_10, %c0_11] : memref<32x32xf32, #tpu.memory_space<vmem>>, vector<32x32xf32>
    %23 = arith.truncf %3 : vector<32x32xf32> to vector<32x32xbf16>
    %24 = arith.truncf %22 : vector<32x32xf32> to vector<32x32xbf16>
    %cst_12 = arith.constant dense<0.000000e+00> : vector<32x32xf32>
    %25 = tpu.matmul %23, %24, %cst_12 {dimension_numbers = #tpu.dot_dimension_numbers<[1], [0], [0], [1], [0, 0, 1, 1], [], []>} : vector<32x32xbf16>, vector<32x32xbf16>, vector<32x32xf32> -> vector<32x32xf32>
    %c0_13 = arith.constant 0 : index
    %c0_14 = arith.constant 0 : index
    %26 = vector.load %arg10[%c0_13, %c0_14] : memref<32x32xf32, #tpu.memory_space<vmem>>, vector<32x32xf32>
    %27 = arith.truncf %4 : vector<32x32xf32> to vector<32x32xbf16>
    %28 = arith.truncf %26 : vector<32x32xf32> to vector<32x32xbf16>
    %cst_15 = arith.constant dense<0.000000e+00> : vector<32x32xf32>
    %29 = tpu.matmul %27, %28, %cst_15 {dimension_numbers = #tpu.dot_dimension_numbers<[1], [0], [0], [1], [0, 0, 1, 1], [], []>} : vector<32x32xbf16>, vector<32x32xbf16>, vector<32x32xf32> -> vector<32x32xf32>
    %30 = arith.addf %25, %29 : vector<32x32xf32>
    %c0_16 = arith.constant 0 : index
    %c0_17 = arith.constant 0 : index
    %31 = vector.load %arg11[%c0_16, %c0_17] : memref<16x32xf32, #tpu.memory_space<vmem>>, vector<16x32xf32>
    %32 = arith.truncf %21 : vector<32x16xf32> to vector<32x16xbf16>
    %33 = arith.truncf %31 : vector<16x32xf32> to vector<16x32xbf16>
    %cst_18 = arith.constant dense<0.000000e+00> : vector<32x32xf32>
    %34 = tpu.matmul %32, %33, %cst_18 {dimension_numbers = #tpu.dot_dimension_numbers<[1], [0], [0], [1], [0, 0, 1, 1], [], []>} : vector<32x16xbf16>, vector<16x32xbf16>, vector<32x32xf32> -> vector<32x32xf32>
    %35 = arith.addf %30, %34 : vector<32x32xf32>
    %c0_19 = arith.constant 0 : index
    %c0_20 = arith.constant 0 : index
    %36 = vector.load %arg12[%c0_19, %c0_20] : memref<4x32xf32, #tpu.memory_space<vmem>>, vector<4x32xf32>
    %37 = arith.truncf %7 : vector<32x4xf32> to vector<32x4xbf16>
    %38 = arith.truncf %36 : vector<4x32xf32> to vector<4x32xbf16>
    %cst_21 = arith.constant dense<0.000000e+00> : vector<32x32xf32>
    %39 = tpu.matmul %37, %38, %cst_21 {dimension_numbers = #tpu.dot_dimension_numbers<[1], [0], [0], [1], [0, 0, 1, 1], [], []>} : vector<32x4xbf16>, vector<4x32xbf16>, vector<32x32xf32> -> vector<32x32xf32>
    %40 = arith.addf %35, %39 : vector<32x32xf32>
    %c0_22 = arith.constant 0 : index
    %c0_23 = arith.constant 0 : index
    %41 = vector.load %arg13[%c0_22, %c0_23] : memref<1x32xf32, #tpu.memory_space<vmem>>, vector<1x32xf32>
    %42 = vector.broadcast %41 : vector<1x32xf32> to vector<32x32xf32>
    %43 = arith.addf %40, %42 : vector<32x32xf32>
    %44 = arith.negf %43 : vector<32x32xf32>
    %45 = math.exp %44 : vector<32x32xf32>
    %cst_24 = arith.constant 1.000000e+00 : f32
    %46 = vector.broadcast %cst_24 : f32 to vector<32x32xf32>
    %47 = arith.addf %46, %45 : vector<32x32xf32>
    %48 = arith.divf %46, %47 : vector<32x32xf32>
    %49 = arith.mulf %43, %48 : vector<32x32xf32>
    %c0_25 = arith.constant 0 : index
    %c0_26 = arith.constant 0 : index
    %50 = vector.load %arg14[%c0_25, %c0_26] : memref<32x32xf32, #tpu.memory_space<vmem>>, vector<32x32xf32>
    %51 = arith.truncf %49 : vector<32x32xf32> to vector<32x32xbf16>
    %52 = arith.truncf %50 : vector<32x32xf32> to vector<32x32xbf16>
    %cst_27 = arith.constant dense<0.000000e+00> : vector<32x32xf32>
    %53 = tpu.matmul %51, %52, %cst_27 {dimension_numbers = #tpu.dot_dimension_numbers<[1], [0], [0], [1], [0, 0, 1, 1], [], []>} : vector<32x32xbf16>, vector<32x32xbf16>, vector<32x32xf32> -> vector<32x32xf32>
    %c0_28 = arith.constant 0 : index
    %c0_29 = arith.constant 0 : index
    %54 = vector.load %arg15[%c0_28, %c0_29] : memref<1x32xf32, #tpu.memory_space<vmem>>, vector<1x32xf32>
    %55 = vector.broadcast %54 : vector<1x32xf32> to vector<32x32xf32>
    %56 = arith.addf %53, %55 : vector<32x32xf32>
    %57 = arith.negf %56 : vector<32x32xf32>
    %58 = math.exp %57 : vector<32x32xf32>
    %cst_30 = arith.constant 1.000000e+00 : f32
    %59 = vector.broadcast %cst_30 : f32 to vector<32x32xf32>
    %60 = arith.addf %59, %58 : vector<32x32xf32>
    %61 = arith.divf %59, %60 : vector<32x32xf32>
    %62 = arith.mulf %56, %61 : vector<32x32xf32>
    %c0_31 = arith.constant 0 : index
    %c0_32 = arith.constant 0 : index
    %63 = vector.load %arg16[%c0_31, %c0_32] : memref<32x1xf32, #tpu.memory_space<vmem>>, vector<32x1xf32>
    %64 = arith.truncf %62 : vector<32x32xf32> to vector<32x32xbf16>
    %65 = arith.truncf %63 : vector<32x1xf32> to vector<32x1xbf16>
    %cst_33 = arith.constant dense<0.000000e+00> : vector<32x1xf32>
    %66 = tpu.matmul %64, %65, %cst_33 {dimension_numbers = #tpu.dot_dimension_numbers<[1], [0], [0], [1], [0, 0, 1, 1], [], []>} : vector<32x32xbf16>, vector<32x1xbf16>, vector<32x1xf32> -> vector<32x1xf32>
    %c0_34 = arith.constant 0 : index
    %c0_35 = arith.constant 0 : index
    %67 = vector.load %arg17[%c0_34, %c0_35] : memref<1x1xf32, #tpu.memory_space<vmem>>, vector<1x1xf32>
    %68 = vector.broadcast %67 : vector<1x1xf32> to vector<32x1xf32>
    %69 = arith.addf %66, %68 : vector<32x1xf32>
    %70 = arith.negf %69 : vector<32x1xf32>
    %71 = math.exp %70 : vector<32x1xf32>
    %cst_36 = arith.constant 1.000000e+00 : f32
    %72 = vector.broadcast %cst_36 : f32 to vector<32x1xf32>
    %73 = arith.addf %72, %71 : vector<32x1xf32>
    %74 = arith.divf %72, %73 : vector<32x1xf32>
    %c0_37 = arith.constant 0 : index
    %c0_38 = arith.constant 0 : index
    %75 = vector.load %arg18[%c0_37, %c0_38] : memref<32x32xf32, #tpu.memory_space<vmem>>, vector<32x32xf32>
    %76 = arith.truncf %62 : vector<32x32xf32> to vector<32x32xbf16>
    %77 = arith.truncf %75 : vector<32x32xf32> to vector<32x32xbf16>
    %cst_39 = arith.constant dense<0.000000e+00> : vector<32x32xf32>
    %78 = tpu.matmul %76, %77, %cst_39 {dimension_numbers = #tpu.dot_dimension_numbers<[1], [0], [0], [1], [0, 0, 1, 1], [], []>} : vector<32x32xbf16>, vector<32x32xbf16>, vector<32x32xf32> -> vector<32x32xf32>
    %c0_40 = arith.constant 0 : index
    %c0_41 = arith.constant 0 : index
    %79 = vector.load %arg19[%c0_40, %c0_41] : memref<1x32xf32, #tpu.memory_space<vmem>>, vector<1x32xf32>
    %80 = vector.broadcast %79 : vector<1x32xf32> to vector<32x32xf32>
    %81 = arith.addf %78, %80 : vector<32x32xf32>
    %82 = arith.negf %81 : vector<32x32xf32>
    %83 = math.exp %82 : vector<32x32xf32>
    %cst_42 = arith.constant 1.000000e+00 : f32
    %84 = vector.broadcast %cst_42 : f32 to vector<32x32xf32>
    %85 = arith.addf %84, %83 : vector<32x32xf32>
    %86 = arith.divf %84, %85 : vector<32x32xf32>
    %87 = arith.mulf %81, %86 : vector<32x32xf32>
    %c0_43 = arith.constant 0 : index
    %c0_44 = arith.constant 0 : index
    %88 = vector.load %arg20[%c0_43, %c0_44] : memref<32x1xf32, #tpu.memory_space<vmem>>, vector<32x1xf32>
    %89 = arith.truncf %87 : vector<32x32xf32> to vector<32x32xbf16>
    %90 = arith.truncf %88 : vector<32x1xf32> to vector<32x1xbf16>
    %cst_45 = arith.constant dense<0.000000e+00> : vector<32x1xf32>
    %91 = tpu.matmul %89, %90, %cst_45 {dimension_numbers = #tpu.dot_dimension_numbers<[1], [0], [0], [1], [0, 0, 1, 1], [], []>} : vector<32x32xbf16>, vector<32x1xbf16>, vector<32x1xf32> -> vector<32x1xf32>
    %92 = math.tanh %91 : vector<32x1xf32>
    %c8_i32 = arith.constant 8 : i32
    %93 = arith.muli %arg0, %c8_i32 : i32
    %94 = tpu.iota {dimensions = array<i32: 0>} : vector<8x32xi32>
    %95 = vector.broadcast %93 : i32 to vector<8x32xi32>
    %96 = arith.addi %95, %94 : vector<8x32xi32>
    %c0_46 = arith.constant 0 : index
    %c0_47 = arith.constant 0 : index
    %c0_48 = arith.constant 0 : index
    %97 = vector.load %arg5[%c0_46, %c0_47, %c0_48] : memref<1x1x32xi32, #tpu.memory_space<vmem>>, vector<1x1x32xi32>
    %98 = vector.shape_cast %97 : vector<1x1x32xi32> to vector<1x32xi32>
    %99 = vector.broadcast %98 : vector<1x32xi32> to vector<8x32xi32>
    %100 = arith.cmpi eq, %96, %99 : vector<8x32xi32>
    %101 = arith.extui %100 : vector<8x32xi1> to vector<8x32xi32>
    %102 = arith.sitofp %101 : vector<8x32xi32> to vector<8x32xf32>
    %c0_49 = arith.constant 0 : index
    %c0_50 = arith.constant 0 : index
    %103 = vector.load %arg29[%c0_49, %c0_50] : memref<8x32xf32, #tpu.memory_space<vmem>>, vector<8x32xf32>
    %104 = arith.truncf %102 : vector<8x32xf32> to vector<8x32xbf16>
    %105 = vector.broadcast %74 : vector<32x1xf32> to vector<32x32xf32>
    %106 = arith.mulf %62, %105 : vector<32x32xf32>
    %107 = arith.truncf %106 : vector<32x32xf32> to vector<32x32xbf16>
    %cst_51 = arith.constant dense<0.000000e+00> : vector<8x32xf32>
    %108 = tpu.matmul %104, %107, %cst_51 {dimension_numbers = #tpu.dot_dimension_numbers<[1], [0], [0], [1], [0, 0, 1, 1], [], []>} : vector<8x32xbf16>, vector<32x32xbf16>, vector<8x32xf32> -> vector<8x32xf32>
    %109 = arith.addf %103, %108 : vector<8x32xf32>
    %c0_52 = arith.constant 0 : index
    %c0_53 = arith.constant 0 : index
    %110 = vector.load %arg29[%c0_52, %c0_53] : memref<8x32xf32, #tpu.memory_space<vmem>>, vector<8x32xf32>
    tpu.vector_store %arg29[%c0_52, %c0_53], %109 {strides = array<i32>} : memref<8x32xf32, #tpu.memory_space<vmem>>, vector<8x32xf32>,
    %cst_54 = arith.constant 1.000000e+00 : f32
    %111 = vector.broadcast %cst_54 : f32 to vector<32x1xf32>
    %112 = arith.addf %13, %111 : vector<32x1xf32>
    %cst_55 = arith.constant 1.000000e+00 : f32
    %113 = vector.broadcast %cst_55 : f32 to vector<32x1xf32>
    %114 = arith.divf %113, %112 : vector<32x1xf32>
    %c0_56 = arith.constant 0 : index
    %c0_57 = arith.constant 0 : index
    %115 = vector.load %arg30[%c0_56, %c0_57] : memref<8x3xf32, #tpu.memory_space<vmem>>, vector<8x3xf32>
    %116 = arith.mulf %114, %92 : vector<32x1xf32>
    %117 = vector.broadcast %116 : vector<32x1xf32> to vector<32x3xf32>
    %118 = arith.mulf %6, %117 : vector<32x3xf32>
    %cst_58 = arith.constant dense<0.000000e+00> : vector<8x3xf32>
    %119 = tpu.matmul %102, %118, %cst_58 {dimension_numbers = #tpu.dot_dimension_numbers<[1], [0], [0], [1], [0, 0, 1, 1], [], []>} : vector<8x32xf32>, vector<32x3xf32>, vector<8x3xf32> -> vector<8x3xf32>
    %120 = arith.addf %115, %119 : vector<8x3xf32>
    %c0_59 = arith.constant 0 : index
    %c0_60 = arith.constant 0 : index
    %121 = vector.load %arg30[%c0_59, %c0_60] : memref<8x3xf32, #tpu.memory_space<vmem>>, vector<8x3xf32>
    tpu.vector_store %arg30[%c0_59, %c0_60], %120 {strides = array<i32>} : memref<8x3xf32, #tpu.memory_space<vmem>>, vector<8x3xf32>,
    %c1_i32 = arith.constant 1 : i32
    %122 = arith.cmpi eq, %arg1, %c1_i32 : i32
    %123 = arith.extui %122 : i1 to i32
    %c0_i32_61 = arith.constant 0 : i32
    %124 = arith.cmpi ne, %123, %c0_i32_61 : i32
    scf.if %124 {
      %c0_62 = arith.constant 0 : index
      %c0_63 = arith.constant 0 : index
      %125 = vector.load %arg29[%c0_62, %c0_63] : memref<8x32xf32, #tpu.memory_space<vmem>>, vector<8x32xf32>
      %c0_64 = arith.constant 0 : index
      %c0_65 = arith.constant 0 : index
      %126 = vector.load %arg6[%c0_64, %c0_65] : memref<8x32xf32, #tpu.memory_space<vmem>>, vector<8x32xf32>
      %c0_66 = arith.constant 0 : index
      %c0_67 = arith.constant 0 : index
      %127 = vector.load %arg21[%c0_66, %c0_67] : memref<32x32xf32, #tpu.memory_space<vmem>>, vector<32x32xf32>
      %128 = arith.truncf %125 : vector<8x32xf32> to vector<8x32xbf16>
      %129 = arith.truncf %127 : vector<32x32xf32> to vector<32x32xbf16>
      %cst_68 = arith.constant dense<0.000000e+00> : vector<8x32xf32>
      %130 = tpu.matmul %128, %129, %cst_68 {dimension_numbers = #tpu.dot_dimension_numbers<[1], [0], [0], [1], [0, 0, 1, 1], [], []>} : vector<8x32xbf16>, vector<32x32xbf16>, vector<8x32xf32> -> vector<8x32xf32>
      %c0_69 = arith.constant 0 : index
      %c0_70 = arith.constant 0 : index
      %131 = vector.load %arg22[%c0_69, %c0_70] : memref<32x32xf32, #tpu.memory_space<vmem>>, vector<32x32xf32>
      %132 = arith.truncf %126 : vector<8x32xf32> to vector<8x32xbf16>
      %133 = arith.truncf %131 : vector<32x32xf32> to vector<32x32xbf16>
      %cst_71 = arith.constant dense<0.000000e+00> : vector<8x32xf32>
      %134 = tpu.matmul %132, %133, %cst_71 {dimension_numbers = #tpu.dot_dimension_numbers<[1], [0], [0], [1], [0, 0, 1, 1], [], []>} : vector<8x32xbf16>, vector<32x32xbf16>, vector<8x32xf32> -> vector<8x32xf32>
      %135 = arith.addf %130, %134 : vector<8x32xf32>
      %c0_72 = arith.constant 0 : index
      %c0_73 = arith.constant 0 : index
      %136 = vector.load %arg23[%c0_72, %c0_73] : memref<1x32xf32, #tpu.memory_space<vmem>>, vector<1x32xf32>
      %137 = vector.broadcast %136 : vector<1x32xf32> to vector<8x32xf32>
      %138 = arith.addf %135, %137 : vector<8x32xf32>
      %139 = arith.negf %138 : vector<8x32xf32>
      %140 = math.exp %139 : vector<8x32xf32>
      %cst_74 = arith.constant 1.000000e+00 : f32
      %141 = vector.broadcast %cst_74 : f32 to vector<8x32xf32>
      %142 = arith.addf %141, %140 : vector<8x32xf32>
      %143 = arith.divf %141, %142 : vector<8x32xf32>
      %144 = arith.mulf %138, %143 : vector<8x32xf32>
      %c0_75 = arith.constant 0 : index
      %c0_76 = arith.constant 0 : index
      %145 = vector.load %arg24[%c0_75, %c0_76] : memref<32x32xf32, #tpu.memory_space<vmem>>, vector<32x32xf32>
      %146 = arith.truncf %144 : vector<8x32xf32> to vector<8x32xbf16>
      %147 = arith.truncf %145 : vector<32x32xf32> to vector<32x32xbf16>
      %cst_77 = arith.constant dense<0.000000e+00> : vector<8x32xf32>
      %148 = tpu.matmul %146, %147, %cst_77 {dimension_numbers = #tpu.dot_dimension_numbers<[1], [0], [0], [1], [0, 0, 1, 1], [], []>} : vector<8x32xbf16>, vector<32x32xbf16>, vector<8x32xf32> -> vector<8x32xf32>
      %149 = arith.addf %126, %148 : vector<8x32xf32>
      %c0_78 = arith.constant 0 : index
      %c0_79 = arith.constant 0 : index
      %150 = vector.load %arg25[%c0_78, %c0_79] : memref<1x32xf32, #tpu.memory_space<vmem>>, vector<1x32xf32>
      %151 = vector.broadcast %150 : vector<1x32xf32> to vector<8x32xf32>
      %152 = arith.addf %149, %151 : vector<8x32xf32>
      %c0_80 = arith.constant 0 : index
      %c0_81 = arith.constant 0 : index
      %153 = vector.load %arg27[%c0_80, %c0_81] : memref<8x32xf32, #tpu.memory_space<vmem>>, vector<8x32xf32>
      tpu.vector_store %arg27[%c0_80, %c0_81], %152 {strides = array<i32>} : memref<8x32xf32, #tpu.memory_space<vmem>>, vector<8x32xf32>,
      %c0_82 = arith.constant 0 : index
      %c0_83 = arith.constant 0 : index
      %154 = vector.load %arg7[%c0_82, %c0_83] : memref<8x3xf32, #tpu.memory_space<vmem>>, vector<8x3xf32>
      %c0_84 = arith.constant 0 : index
      %c0_85 = arith.constant 0 : index
      %155 = vector.load %arg30[%c0_84, %c0_85] : memref<8x3xf32, #tpu.memory_space<vmem>>, vector<8x3xf32>
      %c0_86 = arith.constant 0 : index
      %c0_87 = arith.constant 0 : index
      %156 = vector.load %arg8[%c0_86, %c0_87] : memref<8x1xf32, #tpu.memory_space<vmem>>, vector<8x1xf32>
      %157 = vector.broadcast %156 : vector<8x1xf32> to vector<8x3xf32>
      %158 = arith.mulf %155, %157 : vector<8x3xf32>
      %159 = arith.addf %154, %158 : vector<8x3xf32>
      %c0_88 = arith.constant 0 : index
      %c0_89 = arith.constant 0 : index
      %160 = vector.load %arg28[%c0_88, %c0_89] : memref<8x3xf32, #tpu.memory_space<vmem>>, vector<8x3xf32>
      tpu.vector_store %arg28[%c0_88, %c0_89], %159 {strides = array<i32>} : memref<8x3xf32, #tpu.memory_space<vmem>>, vector<8x3xf32>,
    } else {
    }
    return
  }
  func.func @transform_0(%arg0: i32, %arg1: i32) -> (i32, i32) {
    %c0_i32 = arith.constant 0 : i32
    %c0_i32_0 = arith.constant 0 : i32
    return %arg1, %c0_i32 : i32, i32
  }
  func.func @transform_1(%arg0: i32, %arg1: i32) -> (i32, i32) {
    %c0_i32 = arith.constant 0 : i32
    %c0_i32_0 = arith.constant 0 : i32
    return %arg1, %c0_i32 : i32, i32
  }
  func.func @transform_2(%arg0: i32, %arg1: i32) -> (i32, i32) {
    %c0_i32 = arith.constant 0 : i32
    %c0_i32_0 = arith.constant 0 : i32
    return %arg1, %c0_i32 : i32, i32
  }
  func.func @transform_3(%arg0: i32, %arg1: i32) -> (i32, i32, i32) {
    %c0_i32 = arith.constant 0 : i32
    %c0_i32_0 = arith.constant 0 : i32
    %c0_i32_1 = arith.constant 0 : i32
    return %arg1, %c0_i32, %c0_i32_0 : i32, i32, i32
  }
  func.func @transform_4(%arg0: i32, %arg1: i32) -> (i32, i32) {
    %c0_i32 = arith.constant 0 : i32
    %c0_i32_0 = arith.constant 0 : i32
    return %arg0, %c0_i32 : i32, i32
  }
  func.func @transform_5(%arg0: i32, %arg1: i32) -> (i32, i32) {
    %c0_i32 = arith.constant 0 : i32
    %c0_i32_0 = arith.constant 0 : i32
    return %arg0, %c0_i32 : i32, i32
  }
  func.func @transform_6(%arg0: i32, %arg1: i32) -> (i32, i32) {
    %c0_i32 = arith.constant 0 : i32
    %c0_i32_0 = arith.constant 0 : i32
    return %arg0, %c0_i32 : i32, i32
  }
  func.func @transform_7(%arg0: i32, %arg1: i32) -> (i32, i32) {
    %c0_i32 = arith.constant 0 : i32
    %c0_i32_0 = arith.constant 0 : i32
    %c0_i32_1 = arith.constant 0 : i32
    return %c0_i32, %c0_i32_0 : i32, i32
  }
  func.func @transform_8(%arg0: i32, %arg1: i32) -> (i32, i32) {
    %c0_i32 = arith.constant 0 : i32
    %c0_i32_0 = arith.constant 0 : i32
    %c0_i32_1 = arith.constant 0 : i32
    return %c0_i32, %c0_i32_0 : i32, i32
  }
  func.func @transform_9(%arg0: i32, %arg1: i32) -> (i32, i32) {
    %c0_i32 = arith.constant 0 : i32
    %c0_i32_0 = arith.constant 0 : i32
    %c0_i32_1 = arith.constant 0 : i32
    return %c0_i32, %c0_i32_0 : i32, i32
  }
  func.func @transform_10(%arg0: i32, %arg1: i32) -> (i32, i32) {
    %c0_i32 = arith.constant 0 : i32
    %c0_i32_0 = arith.constant 0 : i32
    %c0_i32_1 = arith.constant 0 : i32
    return %c0_i32, %c0_i32_0 : i32, i32
  }
  func.func @transform_11(%arg0: i32, %arg1: i32) -> (i32, i32) {
    %c0_i32 = arith.constant 0 : i32
    %c0_i32_0 = arith.constant 0 : i32
    %c0_i32_1 = arith.constant 0 : i32
    return %c0_i32, %c0_i32_0 : i32, i32
  }
  func.func @transform_12(%arg0: i32, %arg1: i32) -> (i32, i32) {
    %c0_i32 = arith.constant 0 : i32
    %c0_i32_0 = arith.constant 0 : i32
    %c0_i32_1 = arith.constant 0 : i32
    return %c0_i32, %c0_i32_0 : i32, i32
  }
  func.func @transform_13(%arg0: i32, %arg1: i32) -> (i32, i32) {
    %c0_i32 = arith.constant 0 : i32
    %c0_i32_0 = arith.constant 0 : i32
    %c0_i32_1 = arith.constant 0 : i32
    return %c0_i32, %c0_i32_0 : i32, i32
  }
  func.func @transform_14(%arg0: i32, %arg1: i32) -> (i32, i32) {
    %c0_i32 = arith.constant 0 : i32
    %c0_i32_0 = arith.constant 0 : i32
    %c0_i32_1 = arith.constant 0 : i32
    return %c0_i32, %c0_i32_0 : i32, i32
  }
  func.func @transform_15(%arg0: i32, %arg1: i32) -> (i32, i32) {
    %c0_i32 = arith.constant 0 : i32
    %c0_i32_0 = arith.constant 0 : i32
    %c0_i32_1 = arith.constant 0 : i32
    return %c0_i32, %c0_i32_0 : i32, i32
  }
  func.func @transform_16(%arg0: i32, %arg1: i32) -> (i32, i32) {
    %c0_i32 = arith.constant 0 : i32
    %c0_i32_0 = arith.constant 0 : i32
    %c0_i32_1 = arith.constant 0 : i32
    return %c0_i32, %c0_i32_0 : i32, i32
  }
  func.func @transform_17(%arg0: i32, %arg1: i32) -> (i32, i32) {
    %c0_i32 = arith.constant 0 : i32
    %c0_i32_0 = arith.constant 0 : i32
    %c0_i32_1 = arith.constant 0 : i32
    return %c0_i32, %c0_i32_0 : i32, i32
  }
  func.func @transform_18(%arg0: i32, %arg1: i32) -> (i32, i32) {
    %c0_i32 = arith.constant 0 : i32
    %c0_i32_0 = arith.constant 0 : i32
    %c0_i32_1 = arith.constant 0 : i32
    return %c0_i32, %c0_i32_0 : i32, i32
  }
  func.func @transform_19(%arg0: i32, %arg1: i32) -> (i32, i32) {
    %c0_i32 = arith.constant 0 : i32
    %c0_i32_0 = arith.constant 0 : i32
    %c0_i32_1 = arith.constant 0 : i32
    return %c0_i32, %c0_i32_0 : i32, i32
  }
  func.func @transform_20(%arg0: i32, %arg1: i32) -> (i32, i32) {
    %c0_i32 = arith.constant 0 : i32
    %c0_i32_0 = arith.constant 0 : i32
    %c0_i32_1 = arith.constant 0 : i32
    return %c0_i32, %c0_i32_0 : i32, i32
  }
  func.func @transform_21(%arg0: i32, %arg1: i32) -> (i32, i32) {
    %c0_i32 = arith.constant 0 : i32
    %c0_i32_0 = arith.constant 0 : i32
    %c0_i32_1 = arith.constant 0 : i32
    return %c0_i32, %c0_i32_0 : i32, i32
  }
  func.func @transform_22(%arg0: i32, %arg1: i32) -> (i32, i32) {
    %c0_i32 = arith.constant 0 : i32
    %c0_i32_0 = arith.constant 0 : i32
    %c0_i32_1 = arith.constant 0 : i32
    return %c0_i32, %c0_i32_0 : i32, i32
  }
  func.func @transform_23(%arg0: i32, %arg1: i32) -> (i32, i32) {
    %c0_i32 = arith.constant 0 : i32
    %c0_i32_0 = arith.constant 0 : i32
    %c0_i32_1 = arith.constant 0 : i32
    return %c0_i32, %c0_i32_0 : i32, i32
  }
  func.func @transform_24(%arg0: i32, %arg1: i32) -> (i32, i32) {
    %c0_i32 = arith.constant 0 : i32
    %c0_i32_0 = arith.constant 0 : i32
    %c0_i32_1 = arith.constant 0 : i32
    return %c0_i32, %c0_i32_0 : i32, i32
  }
  func.func @transform_25(%arg0: i32, %arg1: i32) -> (i32, i32) {
    %c0_i32 = arith.constant 0 : i32
    %c0_i32_0 = arith.constant 0 : i32
    return %arg0, %c0_i32 : i32, i32
  }
  func.func @transform_26(%arg0: i32, %arg1: i32) -> (i32, i32) {
    %c0_i32 = arith.constant 0 : i32
    %c0_i32_0 = arith.constant 0 : i32
    return %arg0, %c0_i32 : i32, i32
  }
}

module attributes {stable_mosaic.version = 11 : i64} {
  func.func @_flash_kernel(%arg0: i32, %arg1: i32, %arg2: memref<4x8x8xf32, #tpu.memory_space<vmem>>, %arg3: memref<4x8x8xf32, #tpu.memory_space<vmem>>, %arg4: memref<4x8x8xf32, #tpu.memory_space<vmem>>, %arg5: memref<4x8x8xf32, #tpu.memory_space<vmem>>, %arg6: memref<4x8x1xf32, #tpu.memory_space<vmem>>, %arg7: memref<4x8x1xf32, #tpu.memory_space<vmem>>, %arg8: memref<4x8x8xf32, #tpu.memory_space<vmem>>) attributes {dimension_semantics = [#tpu.dimension_semantics<parallel>, #tpu.dimension_semantics<arbitrary>], iteration_bounds = array<i64: 2, 2>, scalar_prefetch = 0 : i64, scratch_operands = 3 : i64, tpu.core_type = #tpu.core_type<tc>, window_params = [{transform_indices = @transform_0, window_bounds = array<i64: 4, 8, 8>}, {transform_indices = @transform_1, window_bounds = array<i64: 4, 8, 8>}, {transform_indices = @transform_2, window_bounds = array<i64: 4, 8, 8>}, {transform_indices = @transform_3, window_bounds = array<i64: 4, 8, 8>}]} {
    %c0_i32 = arith.constant 0 : i32
    %0 = arith.cmpi eq, %arg1, %c0_i32 : i32
    %1 = arith.extui %0 : i1 to i32
    %c0_i32_0 = arith.constant 0 : i32
    %2 = arith.cmpi ne, %1, %c0_i32_0 : i32
    scf.if %2 {
      %cst_32 = arith.constant 0xFF800000 : f32
      %38 = vector.broadcast %cst_32 : f32 to vector<4x8x1xf32>
      %c0_33 = arith.constant 0 : index
      %c0_34 = arith.constant 0 : index
      %c0_35 = arith.constant 0 : index
      %39 = vector.load %arg6[%c0_33, %c0_34, %c0_35] : memref<4x8x1xf32, #tpu.memory_space<vmem>>, vector<4x8x1xf32>
      tpu.vector_store %arg6[%c0_33, %c0_34, %c0_35], %38 {strides = array<i32>} : memref<4x8x1xf32, #tpu.memory_space<vmem>>, vector<4x8x1xf32>,
      %cst_36 = arith.constant 0.000000e+00 : f32
      %40 = vector.broadcast %cst_36 : f32 to vector<4x8x1xf32>
      %c0_37 = arith.constant 0 : index
      %c0_38 = arith.constant 0 : index
      %c0_39 = arith.constant 0 : index
      %41 = vector.load %arg7[%c0_37, %c0_38, %c0_39] : memref<4x8x1xf32, #tpu.memory_space<vmem>>, vector<4x8x1xf32>
      tpu.vector_store %arg7[%c0_37, %c0_38, %c0_39], %40 {strides = array<i32>} : memref<4x8x1xf32, #tpu.memory_space<vmem>>, vector<4x8x1xf32>,
      %cst_40 = arith.constant 0.000000e+00 : f32
      %42 = vector.broadcast %cst_40 : f32 to vector<4x8x8xf32>
      %c0_41 = arith.constant 0 : index
      %c0_42 = arith.constant 0 : index
      %c0_43 = arith.constant 0 : index
      %43 = vector.load %arg8[%c0_41, %c0_42, %c0_43] : memref<4x8x8xf32, #tpu.memory_space<vmem>>, vector<4x8x8xf32>
      tpu.vector_store %arg8[%c0_41, %c0_42, %c0_43], %42 {strides = array<i32>} : memref<4x8x8xf32, #tpu.memory_space<vmem>>, vector<4x8x8xf32>,
    } else {
    }
    %c0 = arith.constant 0 : index
    %c0_1 = arith.constant 0 : index
    %c0_2 = arith.constant 0 : index
    %3 = vector.load %arg2[%c0, %c0_1, %c0_2] : memref<4x8x8xf32, #tpu.memory_space<vmem>>, vector<4x8x8xf32>
    %4 = arith.truncf %3 : vector<4x8x8xf32> to vector<4x8x8xbf16>
    %c0_3 = arith.constant 0 : index
    %c0_4 = arith.constant 0 : index
    %c0_5 = arith.constant 0 : index
    %5 = vector.load %arg3[%c0_3, %c0_4, %c0_5] : memref<4x8x8xf32, #tpu.memory_space<vmem>>, vector<4x8x8xf32>
    %6 = arith.truncf %5 : vector<4x8x8xf32> to vector<4x8x8xbf16>
    %c0_6 = arith.constant 0 : index
    %c0_7 = arith.constant 0 : index
    %c0_8 = arith.constant 0 : index
    %7 = vector.load %arg4[%c0_6, %c0_7, %c0_8] : memref<4x8x8xf32, #tpu.memory_space<vmem>>, vector<4x8x8xf32>
    %8 = arith.truncf %7 : vector<4x8x8xf32> to vector<4x8x8xbf16>
    %cst = arith.constant dense<0.000000e+00> : vector<4x8x8xf32>
    %9 = tpu.matmul %4, %6, %cst {dimension_numbers = #tpu.dot_dimension_numbers<[2], [2], [1], [1], [0, 0, 0, 1, 1, 1], [0], [0]>} : vector<4x8x8xbf16>, vector<4x8x8xbf16>, vector<4x8x8xf32> -> vector<4x8x8xf32>
    %cst_9 = arith.constant 0.353553385 : f32
    %10 = vector.broadcast %cst_9 : f32 to vector<4x8x8xf32>
    %11 = arith.mulf %9, %10 : vector<4x8x8xf32>
    %c0_10 = arith.constant 0 : index
    %c0_11 = arith.constant 0 : index
    %c0_12 = arith.constant 0 : index
    %12 = vector.load %arg6[%c0_10, %c0_11, %c0_12] : memref<4x8x1xf32, #tpu.memory_space<vmem>>, vector<4x8x1xf32>
    %cst_13 = arith.constant dense<0xFF800000> : vector<4x8xf32>
    %13 = vector.multi_reduction <maximumf>, %11, %cst_13 [2] : vector<4x8x8xf32> to vector<4x8xf32>
    %14 = vector.shape_cast %13 : vector<4x8xf32> to vector<4x8x1xf32>
    %15 = arith.maximumf %12, %14 : vector<4x8x1xf32>
    %16 = arith.subf %12, %15 : vector<4x8x1xf32>
    %17 = math.exp %16 : vector<4x8x1xf32>
    %18 = vector.broadcast %15 : vector<4x8x1xf32> to vector<4x8x8xf32>
    %19 = arith.subf %11, %18 : vector<4x8x8xf32>
    %20 = math.exp %19 : vector<4x8x8xf32>
    %c0_14 = arith.constant 0 : index
    %c0_15 = arith.constant 0 : index
    %c0_16 = arith.constant 0 : index
    %21 = vector.load %arg7[%c0_14, %c0_15, %c0_16] : memref<4x8x1xf32, #tpu.memory_space<vmem>>, vector<4x8x1xf32>
    %22 = arith.mulf %17, %21 : vector<4x8x1xf32>
    %cst_17 = arith.constant dense<0.000000e+00> : vector<4x8xf32>
    %23 = vector.multi_reduction <add>, %20, %cst_17 [2] : vector<4x8x8xf32> to vector<4x8xf32>
    %24 = vector.shape_cast %23 : vector<4x8xf32> to vector<4x8x1xf32>
    %25 = arith.addf %22, %24 : vector<4x8x1xf32>
    %c0_18 = arith.constant 0 : index
    %c0_19 = arith.constant 0 : index
    %c0_20 = arith.constant 0 : index
    %26 = vector.load %arg7[%c0_18, %c0_19, %c0_20] : memref<4x8x1xf32, #tpu.memory_space<vmem>>, vector<4x8x1xf32>
    tpu.vector_store %arg7[%c0_18, %c0_19, %c0_20], %25 {strides = array<i32>} : memref<4x8x1xf32, #tpu.memory_space<vmem>>, vector<4x8x1xf32>,
    %c0_21 = arith.constant 0 : index
    %c0_22 = arith.constant 0 : index
    %c0_23 = arith.constant 0 : index
    %27 = vector.load %arg8[%c0_21, %c0_22, %c0_23] : memref<4x8x8xf32, #tpu.memory_space<vmem>>, vector<4x8x8xf32>
    %28 = vector.broadcast %17 : vector<4x8x1xf32> to vector<4x8x8xf32>
    %29 = arith.mulf %28, %27 : vector<4x8x8xf32>
    %30 = arith.truncf %20 : vector<4x8x8xf32> to vector<4x8x8xbf16>
    %cst_24 = arith.constant dense<0.000000e+00> : vector<4x8x8xf32>
    %31 = tpu.matmul %30, %8, %cst_24 {dimension_numbers = #tpu.dot_dimension_numbers<[2], [1], [1], [2], [0, 0, 0, 1, 1, 2], [0], [0]>} : vector<4x8x8xbf16>, vector<4x8x8xbf16>, vector<4x8x8xf32> -> vector<4x8x8xf32>
    %32 = arith.addf %29, %31 : vector<4x8x8xf32>
    %c0_25 = arith.constant 0 : index
    %c0_26 = arith.constant 0 : index
    %c0_27 = arith.constant 0 : index
    %33 = vector.load %arg8[%c0_25, %c0_26, %c0_27] : memref<4x8x8xf32, #tpu.memory_space<vmem>>, vector<4x8x8xf32>
    tpu.vector_store %arg8[%c0_25, %c0_26, %c0_27], %32 {strides = array<i32>} : memref<4x8x8xf32, #tpu.memory_space<vmem>>, vector<4x8x8xf32>,
    %c0_28 = arith.constant 0 : index
    %c0_29 = arith.constant 0 : index
    %c0_30 = arith.constant 0 : index
    %34 = vector.load %arg6[%c0_28, %c0_29, %c0_30] : memref<4x8x1xf32, #tpu.memory_space<vmem>>, vector<4x8x1xf32>
    tpu.vector_store %arg6[%c0_28, %c0_29, %c0_30], %15 {strides = array<i32>} : memref<4x8x1xf32, #tpu.memory_space<vmem>>, vector<4x8x1xf32>,
    %c1_i32 = arith.constant 1 : i32
    %35 = arith.cmpi eq, %arg1, %c1_i32 : i32
    %36 = arith.extui %35 : i1 to i32
    %c0_i32_31 = arith.constant 0 : i32
    %37 = arith.cmpi ne, %36, %c0_i32_31 : i32
    scf.if %37 {
      %c0_32 = arith.constant 0 : index
      %c0_33 = arith.constant 0 : index
      %c0_34 = arith.constant 0 : index
      %38 = vector.load %arg8[%c0_32, %c0_33, %c0_34] : memref<4x8x8xf32, #tpu.memory_space<vmem>>, vector<4x8x8xf32>
      %c0_35 = arith.constant 0 : index
      %c0_36 = arith.constant 0 : index
      %c0_37 = arith.constant 0 : index
      %39 = vector.load %arg7[%c0_35, %c0_36, %c0_37] : memref<4x8x1xf32, #tpu.memory_space<vmem>>, vector<4x8x1xf32>
      %40 = vector.broadcast %39 : vector<4x8x1xf32> to vector<4x8x8xf32>
      %41 = arith.divf %38, %40 : vector<4x8x8xf32>
      %c0_38 = arith.constant 0 : index
      %c0_39 = arith.constant 0 : index
      %c0_40 = arith.constant 0 : index
      %42 = vector.load %arg5[%c0_38, %c0_39, %c0_40] : memref<4x8x8xf32, #tpu.memory_space<vmem>>, vector<4x8x8xf32>
      tpu.vector_store %arg5[%c0_38, %c0_39, %c0_40], %41 {strides = array<i32>} : memref<4x8x8xf32, #tpu.memory_space<vmem>>, vector<4x8x8xf32>,
    } else {
    }
    return
  }
  func.func @transform_0(%arg0: i32, %arg1: i32) -> (i32, i32, i32) {
    %c0_i32 = arith.constant 0 : i32
    %c0_i32_0 = arith.constant 0 : i32
    %c0_i32_1 = arith.constant 0 : i32
    return %c0_i32, %arg0, %c0_i32_0 : i32, i32, i32
  }
  func.func @transform_1(%arg0: i32, %arg1: i32) -> (i32, i32, i32) {
    %c0_i32 = arith.constant 0 : i32
    %c0_i32_0 = arith.constant 0 : i32
    %c0_i32_1 = arith.constant 0 : i32
    return %c0_i32, %arg1, %c0_i32_0 : i32, i32, i32
  }
  func.func @transform_2(%arg0: i32, %arg1: i32) -> (i32, i32, i32) {
    %c0_i32 = arith.constant 0 : i32
    %c0_i32_0 = arith.constant 0 : i32
    %c0_i32_1 = arith.constant 0 : i32
    return %c0_i32, %arg1, %c0_i32_0 : i32, i32, i32
  }
  func.func @transform_3(%arg0: i32, %arg1: i32) -> (i32, i32, i32) {
    %c0_i32 = arith.constant 0 : i32
    %c0_i32_0 = arith.constant 0 : i32
    %c0_i32_1 = arith.constant 0 : i32
    return %c0_i32, %arg0, %c0_i32_0 : i32, i32, i32
  }
}

module attributes {stable_mosaic.version = 11 : i64} {
  func.func @_qkv_heads_kernel(%arg0: i32, %arg1: i32, %arg2: memref<8x32xf32, #tpu.memory_space<vmem>>, %arg3: memref<1x32x8xf32, #tpu.memory_space<vmem>>, %arg4: memref<1x32x8xf32, #tpu.memory_space<vmem>>, %arg5: memref<1x32x8xf32, #tpu.memory_space<vmem>>, %arg6: memref<1x1x8xf32, #tpu.memory_space<vmem>>, %arg7: memref<1x1x8xf32, #tpu.memory_space<vmem>>, %arg8: memref<1x1x8xf32, #tpu.memory_space<vmem>>, %arg9: memref<1x8x8xf32, #tpu.memory_space<vmem>>, %arg10: memref<1x8x8xf32, #tpu.memory_space<vmem>>, %arg11: memref<1x8x8xf32, #tpu.memory_space<vmem>>) attributes {dimension_semantics = [#tpu.dimension_semantics<parallel>, #tpu.dimension_semantics<parallel>], iteration_bounds = array<i64: 4, 2>, scalar_prefetch = 0 : i64, scratch_operands = 0 : i64, tpu.core_type = #tpu.core_type<tc>, window_params = [{transform_indices = @transform_0, window_bounds = array<i64: 8, 32>}, {transform_indices = @transform_1, window_bounds = array<i64: 1, 32, 8>}, {transform_indices = @transform_2, window_bounds = array<i64: 1, 32, 8>}, {transform_indices = @transform_3, window_bounds = array<i64: 1, 32, 8>}, {transform_indices = @transform_4, window_bounds = array<i64: 1, 1, 8>}, {transform_indices = @transform_5, window_bounds = array<i64: 1, 1, 8>}, {transform_indices = @transform_6, window_bounds = array<i64: 1, 1, 8>}, {transform_indices = @transform_7, window_bounds = array<i64: 1, 8, 8>}, {transform_indices = @transform_8, window_bounds = array<i64: 1, 8, 8>}, {transform_indices = @transform_9, window_bounds = array<i64: 1, 8, 8>}]} {
    %c0 = arith.constant 0 : index
    %c0_0 = arith.constant 0 : index
    %0 = vector.load %arg2[%c0, %c0_0] : memref<8x32xf32, #tpu.memory_space<vmem>>, vector<8x32xf32>
    %c0_1 = arith.constant 0 : index
    %c0_2 = arith.constant 0 : index
    %c0_3 = arith.constant 0 : index
    %1 = vector.load %arg3[%c0_1, %c0_2, %c0_3] : memref<1x32x8xf32, #tpu.memory_space<vmem>>, vector<1x32x8xf32>
    %2 = vector.shape_cast %1 : vector<1x32x8xf32> to vector<32x8xf32>
    %3 = arith.truncf %0 : vector<8x32xf32> to vector<8x32xbf16>
    %4 = arith.truncf %2 : vector<32x8xf32> to vector<32x8xbf16>
    %cst = arith.constant dense<0.000000e+00> : vector<8x8xf32>
    %5 = tpu.matmul %3, %4, %cst {dimension_numbers = #tpu.dot_dimension_numbers<[1], [0], [0], [1], [0, 0, 1, 1], [], []>} : vector<8x32xbf16>, vector<32x8xbf16>, vector<8x8xf32> -> vector<8x8xf32>
    %c0_4 = arith.constant 0 : index
    %c0_5 = arith.constant 0 : index
    %c0_6 = arith.constant 0 : index
    %6 = vector.load %arg6[%c0_4, %c0_5, %c0_6] : memref<1x1x8xf32, #tpu.memory_space<vmem>>, vector<1x1x8xf32>
    %7 = vector.shape_cast %6 : vector<1x1x8xf32> to vector<1x8xf32>
    %8 = vector.broadcast %7 : vector<1x8xf32> to vector<8x8xf32>
    %9 = arith.addf %5, %8 : vector<8x8xf32>
    %c0_7 = arith.constant 0 : index
    %c0_8 = arith.constant 0 : index
    %c0_9 = arith.constant 0 : index
    %10 = vector.load %arg9[%c0_7, %c0_8, %c0_9] : memref<1x8x8xf32, #tpu.memory_space<vmem>>, vector<1x8x8xf32>
    %11 = vector.shape_cast %10 : vector<1x8x8xf32> to vector<8x8xf32>
    %12 = vector.shape_cast %9 : vector<8x8xf32> to vector<1x8x8xf32>
    tpu.vector_store %arg9[%c0_7, %c0_8, %c0_9], %12 {strides = array<i32>} : memref<1x8x8xf32, #tpu.memory_space<vmem>>, vector<1x8x8xf32>,
    %c0_10 = arith.constant 0 : index
    %c0_11 = arith.constant 0 : index
    %c0_12 = arith.constant 0 : index
    %13 = vector.load %arg4[%c0_10, %c0_11, %c0_12] : memref<1x32x8xf32, #tpu.memory_space<vmem>>, vector<1x32x8xf32>
    %14 = vector.shape_cast %13 : vector<1x32x8xf32> to vector<32x8xf32>
    %15 = arith.truncf %0 : vector<8x32xf32> to vector<8x32xbf16>
    %16 = arith.truncf %14 : vector<32x8xf32> to vector<32x8xbf16>
    %cst_13 = arith.constant dense<0.000000e+00> : vector<8x8xf32>
    %17 = tpu.matmul %15, %16, %cst_13 {dimension_numbers = #tpu.dot_dimension_numbers<[1], [0], [0], [1], [0, 0, 1, 1], [], []>} : vector<8x32xbf16>, vector<32x8xbf16>, vector<8x8xf32> -> vector<8x8xf32>
    %c0_14 = arith.constant 0 : index
    %c0_15 = arith.constant 0 : index
    %c0_16 = arith.constant 0 : index
    %18 = vector.load %arg7[%c0_14, %c0_15, %c0_16] : memref<1x1x8xf32, #tpu.memory_space<vmem>>, vector<1x1x8xf32>
    %19 = vector.shape_cast %18 : vector<1x1x8xf32> to vector<1x8xf32>
    %20 = vector.broadcast %19 : vector<1x8xf32> to vector<8x8xf32>
    %21 = arith.addf %17, %20 : vector<8x8xf32>
    %c0_17 = arith.constant 0 : index
    %c0_18 = arith.constant 0 : index
    %c0_19 = arith.constant 0 : index
    %22 = vector.load %arg10[%c0_17, %c0_18, %c0_19] : memref<1x8x8xf32, #tpu.memory_space<vmem>>, vector<1x8x8xf32>
    %23 = vector.shape_cast %22 : vector<1x8x8xf32> to vector<8x8xf32>
    %24 = vector.shape_cast %21 : vector<8x8xf32> to vector<1x8x8xf32>
    tpu.vector_store %arg10[%c0_17, %c0_18, %c0_19], %24 {strides = array<i32>} : memref<1x8x8xf32, #tpu.memory_space<vmem>>, vector<1x8x8xf32>,
    %c0_20 = arith.constant 0 : index
    %c0_21 = arith.constant 0 : index
    %c0_22 = arith.constant 0 : index
    %25 = vector.load %arg5[%c0_20, %c0_21, %c0_22] : memref<1x32x8xf32, #tpu.memory_space<vmem>>, vector<1x32x8xf32>
    %26 = vector.shape_cast %25 : vector<1x32x8xf32> to vector<32x8xf32>
    %27 = arith.truncf %0 : vector<8x32xf32> to vector<8x32xbf16>
    %28 = arith.truncf %26 : vector<32x8xf32> to vector<32x8xbf16>
    %cst_23 = arith.constant dense<0.000000e+00> : vector<8x8xf32>
    %29 = tpu.matmul %27, %28, %cst_23 {dimension_numbers = #tpu.dot_dimension_numbers<[1], [0], [0], [1], [0, 0, 1, 1], [], []>} : vector<8x32xbf16>, vector<32x8xbf16>, vector<8x8xf32> -> vector<8x8xf32>
    %c0_24 = arith.constant 0 : index
    %c0_25 = arith.constant 0 : index
    %c0_26 = arith.constant 0 : index
    %30 = vector.load %arg8[%c0_24, %c0_25, %c0_26] : memref<1x1x8xf32, #tpu.memory_space<vmem>>, vector<1x1x8xf32>
    %31 = vector.shape_cast %30 : vector<1x1x8xf32> to vector<1x8xf32>
    %32 = vector.broadcast %31 : vector<1x8xf32> to vector<8x8xf32>
    %33 = arith.addf %29, %32 : vector<8x8xf32>
    %c0_27 = arith.constant 0 : index
    %c0_28 = arith.constant 0 : index
    %c0_29 = arith.constant 0 : index
    %34 = vector.load %arg11[%c0_27, %c0_28, %c0_29] : memref<1x8x8xf32, #tpu.memory_space<vmem>>, vector<1x8x8xf32>
    %35 = vector.shape_cast %34 : vector<1x8x8xf32> to vector<8x8xf32>
    %36 = vector.shape_cast %33 : vector<8x8xf32> to vector<1x8x8xf32>
    tpu.vector_store %arg11[%c0_27, %c0_28, %c0_29], %36 {strides = array<i32>} : memref<1x8x8xf32, #tpu.memory_space<vmem>>, vector<1x8x8xf32>,
    return
  }
  func.func @transform_0(%arg0: i32, %arg1: i32) -> (i32, i32) {
    %c0_i32 = arith.constant 0 : i32
    %c0_i32_0 = arith.constant 0 : i32
    return %arg1, %c0_i32 : i32, i32
  }
  func.func @transform_1(%arg0: i32, %arg1: i32) -> (i32, i32, i32) {
    %c0_i32 = arith.constant 0 : i32
    %c0_i32_0 = arith.constant 0 : i32
    %c0_i32_1 = arith.constant 0 : i32
    return %arg0, %c0_i32, %c0_i32_0 : i32, i32, i32
  }
  func.func @transform_2(%arg0: i32, %arg1: i32) -> (i32, i32, i32) {
    %c0_i32 = arith.constant 0 : i32
    %c0_i32_0 = arith.constant 0 : i32
    %c0_i32_1 = arith.constant 0 : i32
    return %arg0, %c0_i32, %c0_i32_0 : i32, i32, i32
  }
  func.func @transform_3(%arg0: i32, %arg1: i32) -> (i32, i32, i32) {
    %c0_i32 = arith.constant 0 : i32
    %c0_i32_0 = arith.constant 0 : i32
    %c0_i32_1 = arith.constant 0 : i32
    return %arg0, %c0_i32, %c0_i32_0 : i32, i32, i32
  }
  func.func @transform_4(%arg0: i32, %arg1: i32) -> (i32, i32, i32) {
    %c0_i32 = arith.constant 0 : i32
    %c0_i32_0 = arith.constant 0 : i32
    %c0_i32_1 = arith.constant 0 : i32
    return %arg0, %c0_i32, %c0_i32_0 : i32, i32, i32
  }
  func.func @transform_5(%arg0: i32, %arg1: i32) -> (i32, i32, i32) {
    %c0_i32 = arith.constant 0 : i32
    %c0_i32_0 = arith.constant 0 : i32
    %c0_i32_1 = arith.constant 0 : i32
    return %arg0, %c0_i32, %c0_i32_0 : i32, i32, i32
  }
  func.func @transform_6(%arg0: i32, %arg1: i32) -> (i32, i32, i32) {
    %c0_i32 = arith.constant 0 : i32
    %c0_i32_0 = arith.constant 0 : i32
    %c0_i32_1 = arith.constant 0 : i32
    return %arg0, %c0_i32, %c0_i32_0 : i32, i32, i32
  }
  func.func @transform_7(%arg0: i32, %arg1: i32) -> (i32, i32, i32) {
    %c0_i32 = arith.constant 0 : i32
    %c0_i32_0 = arith.constant 0 : i32
    return %arg0, %arg1, %c0_i32 : i32, i32, i32
  }
  func.func @transform_8(%arg0: i32, %arg1: i32) -> (i32, i32, i32) {
    %c0_i32 = arith.constant 0 : i32
    %c0_i32_0 = arith.constant 0 : i32
    return %arg0, %arg1, %c0_i32 : i32, i32, i32
  }
  func.func @transform_9(%arg0: i32, %arg1: i32) -> (i32, i32, i32) {
    %c0_i32 = arith.constant 0 : i32
    %c0_i32_0 = arith.constant 0 : i32
    return %arg0, %arg1, %c0_i32 : i32, i32, i32
  }
}

module attributes {stable_mosaic.version = 11 : i64} {
  func.func @_encoder_tail_kernel(%arg0: i32, %arg1: memref<8x32xf32, #tpu.memory_space<vmem>>, %arg2: memref<8x32xf32, #tpu.memory_space<vmem>>, %arg3: memref<32x32xf32, #tpu.memory_space<vmem>>, %arg4: memref<1x32xf32, #tpu.memory_space<vmem>>, %arg5: memref<1x32xf32, #tpu.memory_space<vmem>>, %arg6: memref<1x32xf32, #tpu.memory_space<vmem>>, %arg7: memref<32x64xf32, #tpu.memory_space<vmem>>, %arg8: memref<1x64xf32, #tpu.memory_space<vmem>>, %arg9: memref<64x32xf32, #tpu.memory_space<vmem>>, %arg10: memref<1x32xf32, #tpu.memory_space<vmem>>, %arg11: memref<1x32xf32, #tpu.memory_space<vmem>>, %arg12: memref<1x32xf32, #tpu.memory_space<vmem>>, %arg13: memref<8x32xf32, #tpu.memory_space<vmem>>) attributes {dimension_semantics = [#tpu.dimension_semantics<parallel>], iteration_bounds = array<i64: 2>, scalar_prefetch = 0 : i64, scratch_operands = 0 : i64, tpu.core_type = #tpu.core_type<tc>, window_params = [{transform_indices = @transform_0, window_bounds = array<i64: 8, 32>}, {transform_indices = @transform_1, window_bounds = array<i64: 8, 32>}, {pipeline_mode = #tpu.pipeline_mode<synchronous>, transform_indices = @transform_2, window_bounds = array<i64: 32, 32>}, {pipeline_mode = #tpu.pipeline_mode<synchronous>, transform_indices = @transform_3, window_bounds = array<i64: 1, 32>}, {pipeline_mode = #tpu.pipeline_mode<synchronous>, transform_indices = @transform_4, window_bounds = array<i64: 1, 32>}, {pipeline_mode = #tpu.pipeline_mode<synchronous>, transform_indices = @transform_5, window_bounds = array<i64: 1, 32>}, {pipeline_mode = #tpu.pipeline_mode<synchronous>, transform_indices = @transform_6, window_bounds = array<i64: 32, 64>}, {pipeline_mode = #tpu.pipeline_mode<synchronous>, transform_indices = @transform_7, window_bounds = array<i64: 1, 64>}, {pipeline_mode = #tpu.pipeline_mode<synchronous>, transform_indices = @transform_8, window_bounds = array<i64: 64, 32>}, {pipeline_mode = #tpu.pipeline_mode<synchronous>, transform_indices = @transform_9, window_bounds = array<i64: 1, 32>}, {pipeline_mode = #tpu.pipeline_mode<synchronous>, transform_indices = @transform_10, window_bounds = array<i64: 1, 32>}, {pipeline_mode = #tpu.pipeline_mode<synchronous>, transform_indices = @transform_11, window_bounds = array<i64: 1, 32>}, {transform_indices = @transform_12, window_bounds = array<i64: 8, 32>}]} {
    %c0 = arith.constant 0 : index
    %c0_0 = arith.constant 0 : index
    %0 = vector.load %arg1[%c0, %c0_0] : memref<8x32xf32, #tpu.memory_space<vmem>>, vector<8x32xf32>
    %c0_1 = arith.constant 0 : index
    %c0_2 = arith.constant 0 : index
    %1 = vector.load %arg3[%c0_1, %c0_2] : memref<32x32xf32, #tpu.memory_space<vmem>>, vector<32x32xf32>
    %2 = arith.truncf %0 : vector<8x32xf32> to vector<8x32xbf16>
    %3 = arith.truncf %1 : vector<32x32xf32> to vector<32x32xbf16>
    %cst = arith.constant dense<0.000000e+00> : vector<8x32xf32>
    %4 = tpu.matmul %2, %3, %cst {dimension_numbers = #tpu.dot_dimension_numbers<[1], [0], [0], [1], [0, 0, 1, 1], [], []>} : vector<8x32xbf16>, vector<32x32xbf16>, vector<8x32xf32> -> vector<8x32xf32>
    %c0_3 = arith.constant 0 : index
    %c0_4 = arith.constant 0 : index
    %5 = vector.load %arg4[%c0_3, %c0_4] : memref<1x32xf32, #tpu.memory_space<vmem>>, vector<1x32xf32>
    %6 = vector.broadcast %5 : vector<1x32xf32> to vector<8x32xf32>
    %7 = arith.addf %4, %6 : vector<8x32xf32>
    %c0_5 = arith.constant 0 : index
    %c0_6 = arith.constant 0 : index
    %8 = vector.load %arg2[%c0_5, %c0_6] : memref<8x32xf32, #tpu.memory_space<vmem>>, vector<8x32xf32>
    %9 = arith.addf %7, %8 : vector<8x32xf32>
    %cst_7 = arith.constant dense<0.000000e+00> : vector<8xf32>
    %10 = vector.multi_reduction <add>, %9, %cst_7 [1] : vector<8x32xf32> to vector<8xf32>
    %11 = vector.shape_cast %10 : vector<8xf32> to vector<8x1xf32>
    %cst_8 = arith.constant 3.200000e+01 : f32
    %12 = vector.broadcast %cst_8 : f32 to vector<8x1xf32>
    %13 = arith.divf %11, %12 : vector<8x1xf32>
    %14 = vector.broadcast %13 : vector<8x1xf32> to vector<8x32xf32>
    %15 = arith.subf %9, %14 : vector<8x32xf32>
    %16 = arith.mulf %15, %15 : vector<8x32xf32>
    %cst_9 = arith.constant dense<0.000000e+00> : vector<8xf32>
    %17 = vector.multi_reduction <add>, %16, %cst_9 [1] : vector<8x32xf32> to vector<8xf32>
    %18 = vector.shape_cast %17 : vector<8xf32> to vector<8x1xf32>
    %cst_10 = arith.constant 3.200000e+01 : f32
    %19 = vector.broadcast %cst_10 : f32 to vector<8x1xf32>
    %20 = arith.divf %18, %19 : vector<8x1xf32>
    %c0_11 = arith.constant 0 : index
    %c0_12 = arith.constant 0 : index
    %21 = vector.load %arg5[%c0_11, %c0_12] : memref<1x32xf32, #tpu.memory_space<vmem>>, vector<1x32xf32>
    %22 = vector.broadcast %13 : vector<8x1xf32> to vector<8x32xf32>
    %23 = arith.subf %9, %22 : vector<8x32xf32>
    %cst_13 = arith.constant 9.99999993E-9 : f32
    %24 = vector.broadcast %cst_13 : f32 to vector<8x1xf32>
    %25 = arith.addf %20, %24 : vector<8x1xf32>
    %26 = math.rsqrt %25 : vector<8x1xf32>
    %27 = vector.broadcast %26 : vector<8x1xf32> to vector<8x32xf32>
    %28 = arith.mulf %23, %27 : vector<8x32xf32>
    %29 = vector.broadcast %21 : vector<1x32xf32> to vector<8x32xf32>
    %30 = arith.mulf %29, %28 : vector<8x32xf32>
    %c0_14 = arith.constant 0 : index
    %c0_15 = arith.constant 0 : index
    %31 = vector.load %arg6[%c0_14, %c0_15] : memref<1x32xf32, #tpu.memory_space<vmem>>, vector<1x32xf32>
    %32 = vector.broadcast %31 : vector<1x32xf32> to vector<8x32xf32>
    %33 = arith.addf %30, %32 : vector<8x32xf32>
    %c0_16 = arith.constant 0 : index
    %c0_17 = arith.constant 0 : index
    %34 = vector.load %arg7[%c0_16, %c0_17] : memref<32x64xf32, #tpu.memory_space<vmem>>, vector<32x64xf32>
    %35 = arith.truncf %33 : vector<8x32xf32> to vector<8x32xbf16>
    %36 = arith.truncf %34 : vector<32x64xf32> to vector<32x64xbf16>
    %cst_18 = arith.constant dense<0.000000e+00> : vector<8x64xf32>
    %37 = tpu.matmul %35, %36, %cst_18 {dimension_numbers = #tpu.dot_dimension_numbers<[1], [0], [0], [1], [0, 0, 1, 1], [], []>} : vector<8x32xbf16>, vector<32x64xbf16>, vector<8x64xf32> -> vector<8x64xf32>
    %c0_19 = arith.constant 0 : index
    %c0_20 = arith.constant 0 : index
    %38 = vector.load %arg8[%c0_19, %c0_20] : memref<1x64xf32, #tpu.memory_space<vmem>>, vector<1x64xf32>
    %39 = vector.broadcast %38 : vector<1x64xf32> to vector<8x64xf32>
    %40 = arith.addf %37, %39 : vector<8x64xf32>
    %cst_21 = arith.constant 0.000000e+00 : f32
    %41 = vector.broadcast %cst_21 : f32 to vector<8x64xf32>
    %42 = arith.maximumf %40, %41 : vector<8x64xf32>
    %c0_22 = arith.constant 0 : index
    %c0_23 = arith.constant 0 : index
    %43 = vector.load %arg9[%c0_22, %c0_23] : memref<64x32xf32, #tpu.memory_space<vmem>>, vector<64x32xf32>
    %44 = arith.truncf %42 : vector<8x64xf32> to vector<8x64xbf16>
    %45 = arith.truncf %43 : vector<64x32xf32> to vector<64x32xbf16>
    %cst_24 = arith.constant dense<0.000000e+00> : vector<8x32xf32>
    %46 = tpu.matmul %44, %45, %cst_24 {dimension_numbers = #tpu.dot_dimension_numbers<[1], [0], [0], [1], [0, 0, 1, 1], [], []>} : vector<8x64xbf16>, vector<64x32xbf16>, vector<8x32xf32> -> vector<8x32xf32>
    %c0_25 = arith.constant 0 : index
    %c0_26 = arith.constant 0 : index
    %47 = vector.load %arg10[%c0_25, %c0_26] : memref<1x32xf32, #tpu.memory_space<vmem>>, vector<1x32xf32>
    %48 = vector.broadcast %47 : vector<1x32xf32> to vector<8x32xf32>
    %49 = arith.addf %46, %48 : vector<8x32xf32>
    %50 = arith.addf %49, %33 : vector<8x32xf32>
    %cst_27 = arith.constant dense<0.000000e+00> : vector<8xf32>
    %51 = vector.multi_reduction <add>, %50, %cst_27 [1] : vector<8x32xf32> to vector<8xf32>
    %52 = vector.shape_cast %51 : vector<8xf32> to vector<8x1xf32>
    %cst_28 = arith.constant 3.200000e+01 : f32
    %53 = vector.broadcast %cst_28 : f32 to vector<8x1xf32>
    %54 = arith.divf %52, %53 : vector<8x1xf32>
    %55 = vector.broadcast %54 : vector<8x1xf32> to vector<8x32xf32>
    %56 = arith.subf %50, %55 : vector<8x32xf32>
    %57 = arith.mulf %56, %56 : vector<8x32xf32>
    %cst_29 = arith.constant dense<0.000000e+00> : vector<8xf32>
    %58 = vector.multi_reduction <add>, %57, %cst_29 [1] : vector<8x32xf32> to vector<8xf32>
    %59 = vector.shape_cast %58 : vector<8xf32> to vector<8x1xf32>
    %cst_30 = arith.constant 3.200000e+01 : f32
    %60 = vector.broadcast %cst_30 : f32 to vector<8x1xf32>
    %61 = arith.divf %59, %60 : vector<8x1xf32>
    %c0_31 = arith.constant 0 : index
    %c0_32 = arith.constant 0 : index
    %62 = vector.load %arg11[%c0_31, %c0_32] : memref<1x32xf32, #tpu.memory_space<vmem>>, vector<1x32xf32>
    %63 = vector.broadcast %54 : vector<8x1xf32> to vector<8x32xf32>
    %64 = arith.subf %50, %63 : vector<8x32xf32>
    %cst_33 = arith.constant 9.99999993E-9 : f32
    %65 = vector.broadcast %cst_33 : f32 to vector<8x1xf32>
    %66 = arith.addf %61, %65 : vector<8x1xf32>
    %67 = math.rsqrt %66 : vector<8x1xf32>
    %68 = vector.broadcast %67 : vector<8x1xf32> to vector<8x32xf32>
    %69 = arith.mulf %64, %68 : vector<8x32xf32>
    %70 = vector.broadcast %62 : vector<1x32xf32> to vector<8x32xf32>
    %71 = arith.mulf %70, %69 : vector<8x32xf32>
    %c0_34 = arith.constant 0 : index
    %c0_35 = arith.constant 0 : index
    %72 = vector.load %arg12[%c0_34, %c0_35] : memref<1x32xf32, #tpu.memory_space<vmem>>, vector<1x32xf32>
    %73 = vector.broadcast %72 : vector<1x32xf32> to vector<8x32xf32>
    %74 = arith.addf %71, %73 : vector<8x32xf32>
    %c0_36 = arith.constant 0 : index
    %c0_37 = arith.constant 0 : index
    %75 = vector.load %arg13[%c0_36, %c0_37] : memref<8x32xf32, #tpu.memory_space<vmem>>, vector<8x32xf32>
    tpu.vector_store %arg13[%c0_36, %c0_37], %74 {strides = array<i32>} : memref<8x32xf32, #tpu.memory_space<vmem>>, vector<8x32xf32>,
    return
  }
  func.func @transform_0(%arg0: i32) -> (i32, i32) {
    %c0_i32 = arith.constant 0 : i32
    %c0_i32_0 = arith.constant 0 : i32
    return %arg0, %c0_i32 : i32, i32
  }
  func.func @transform_1(%arg0: i32) -> (i32, i32) {
    %c0_i32 = arith.constant 0 : i32
    %c0_i32_0 = arith.constant 0 : i32
    return %arg0, %c0_i32 : i32, i32
  }
  func.func @transform_2(%arg0: i32) -> (i32, i32) {
    %c0_i32 = arith.constant 0 : i32
    %c0_i32_0 = arith.constant 0 : i32
    %c0_i32_1 = arith.constant 0 : i32
    return %c0_i32, %c0_i32_0 : i32, i32
  }
  func.func @transform_3(%arg0: i32) -> (i32, i32) {
    %c0_i32 = arith.constant 0 : i32
    %c0_i32_0 = arith.constant 0 : i32
    %c0_i32_1 = arith.constant 0 : i32
    return %c0_i32, %c0_i32_0 : i32, i32
  }
  func.func @transform_4(%arg0: i32) -> (i32, i32) {
    %c0_i32 = arith.constant 0 : i32
    %c0_i32_0 = arith.constant 0 : i32
    %c0_i32_1 = arith.constant 0 : i32
    return %c0_i32, %c0_i32_0 : i32, i32
  }
  func.func @transform_5(%arg0: i32) -> (i32, i32) {
    %c0_i32 = arith.constant 0 : i32
    %c0_i32_0 = arith.constant 0 : i32
    %c0_i32_1 = arith.constant 0 : i32
    return %c0_i32, %c0_i32_0 : i32, i32
  }
  func.func @transform_6(%arg0: i32) -> (i32, i32) {
    %c0_i32 = arith.constant 0 : i32
    %c0_i32_0 = arith.constant 0 : i32
    %c0_i32_1 = arith.constant 0 : i32
    return %c0_i32, %c0_i32_0 : i32, i32
  }
  func.func @transform_7(%arg0: i32) -> (i32, i32) {
    %c0_i32 = arith.constant 0 : i32
    %c0_i32_0 = arith.constant 0 : i32
    %c0_i32_1 = arith.constant 0 : i32
    return %c0_i32, %c0_i32_0 : i32, i32
  }
  func.func @transform_8(%arg0: i32) -> (i32, i32) {
    %c0_i32 = arith.constant 0 : i32
    %c0_i32_0 = arith.constant 0 : i32
    %c0_i32_1 = arith.constant 0 : i32
    return %c0_i32, %c0_i32_0 : i32, i32
  }
  func.func @transform_9(%arg0: i32) -> (i32, i32) {
    %c0_i32 = arith.constant 0 : i32
    %c0_i32_0 = arith.constant 0 : i32
    %c0_i32_1 = arith.constant 0 : i32
    return %c0_i32, %c0_i32_0 : i32, i32
  }
  func.func @transform_10(%arg0: i32) -> (i32, i32) {
    %c0_i32 = arith.constant 0 : i32
    %c0_i32_0 = arith.constant 0 : i32
    %c0_i32_1 = arith.constant 0 : i32
    return %c0_i32, %c0_i32_0 : i32, i32
  }
  func.func @transform_11(%arg0: i32) -> (i32, i32) {
    %c0_i32 = arith.constant 0 : i32
    %c0_i32_0 = arith.constant 0 : i32
    %c0_i32_1 = arith.constant 0 : i32
    return %c0_i32, %c0_i32_0 : i32, i32
  }
  func.func @transform_12(%arg0: i32) -> (i32, i32) {
    %c0_i32 = arith.constant 0 : i32
    %c0_i32_0 = arith.constant 0 : i32
    return %arg0, %c0_i32 : i32, i32
  }
}

</mosaic_0001>

<llo_original>
// kernel: sub.25
$region0: #{sub.25}
  #allocation0 [shape = 's32[1]{0}', space=sflag, size = 0x4, scoped, tag = 'scoped memory for sub.25']
  %s0 = inlined_call_operand.vmem [shape: f32[64,3], index: 0, kind: input, shape index: {}]
  %s1 = inlined_call_operand.vmem [shape: f32[64,3], index: 1, kind: input, shape index: {}]
  %s2 = inlined_call_operand.vmem [shape: f32[64,3], index: 2, kind: output, shape index: {}]
  %v3 = vld [vmem:[%s0] sm:$0xff]
  %v4 = vld [vmem:[%s1] sm:$0xff]
  %5 = xla_tuple %v3, %v4
  %6 = xla_tuple %5
  %v7 = vsub.f32 %v3, %v4
  %8 = xla_tuple %v7
  %9 = vst [vmem:[%s2] sm:$0xff] %v7
  %s10 = scalar_lea.vmem %s0, 8
  %v11 = vld [vmem:[%s10] sm:$0xff]
  %s12 = scalar_lea.vmem %s1, 8
  %v13 = vld [vmem:[%s12] sm:$0xff]
  %14 = xla_tuple %v11, %v13
  %15 = xla_tuple %14
  %v16 = vsub.f32 %v11, %v13
  %17 = xla_tuple %v16
  %s18 = scalar_lea.vmem %s2, 8
  %19 = vst [vmem:[%s18] sm:$0xff] %v16
  %s20 = scalar_lea.vmem %s0, 16
  %v21 = vld [vmem:[%s20] sm:$0xff]
  %s22 = scalar_lea.vmem %s1, 16
  %v23 = vld [vmem:[%s22] sm:$0xff]
  %24 = xla_tuple %v21, %v23
  %25 = xla_tuple %24
  %v26 = vsub.f32 %v21, %v23
  %27 = xla_tuple %v26
  %s28 = scalar_lea.vmem %s2, 16
  %29 = vst [vmem:[%s28] sm:$0xff] %v26
  %s30 = scalar_lea.vmem %s0, 24
  %v31 = vld [vmem:[%s30] sm:$0xff]
  %s32 = scalar_lea.vmem %s1, 24
  %v33 = vld [vmem:[%s32] sm:$0xff]
  %34 = xla_tuple %v31, %v33
  %35 = xla_tuple %34
  %v36 = vsub.f32 %v31, %v33
  %37 = xla_tuple %v36
  %s38 = scalar_lea.vmem %s2, 24
  %39 = vst [vmem:[%s38] sm:$0xff] %v36
  %s40 = scalar_lea.vmem %s0, 32
  %v41 = vld [vmem:[%s40] sm:$0xff]
  %s42 = scalar_lea.vmem %s1, 32
  %v43 = vld [vmem:[%s42] sm:$0xff]
  %44 = xla_tuple %v41, %v43
  %45 = xla_tuple %44
  %v46 = vsub.f32 %v41, %v43
  %47 = xla_tuple %v46
  %s48 = scalar_lea.vmem %s2, 32
  %49 = vst [vmem:[%s48] sm:$0xff] %v46
  %s50 = scalar_lea.vmem %s0, 40
  %v51 = vld [vmem:[%s50] sm:$0xff]
  %s52 = scalar_lea.vmem %s1, 40
  %v53 = vld [vmem:[%s52] sm:$0xff]
  %54 = xla_tuple %v51, %v53
  %55 = xla_tuple %54
  %v56 = vsub.f32 %v51, %v53
  %57 = xla_tuple %v56
  %s58 = scalar_lea.vmem %s2, 40
  %59 = vst [vmem:[%s58] sm:$0xff] %v56
  %s60 = scalar_lea.vmem %s0, 48
  %v61 = vld [vmem:[%s60] sm:$0xff]
  %s62 = scalar_lea.vmem %s1, 48
  %v63 = vld [vmem:[%s62] sm:$0xff]
  %64 = xla_tuple %v61, %v63
  %65 = xla_tuple %64
  %v66 = vsub.f32 %v61, %v63
  %67 = xla_tuple %v66
  %s68 = scalar_lea.vmem %s2, 48
  %69 = vst [vmem:[%s68] sm:$0xff] %v66
  %s70 = scalar_lea.vmem %s0, 56
  %v71 = vld [vmem:[%s70] sm:$0xff]
  %s72 = scalar_lea.vmem %s1, 56
  %v73 = vld [vmem:[%s72] sm:$0xff]
  %74 = xla_tuple %v71, %v73
  %75 = xla_tuple %74
  %v76 = vsub.f32 %v71, %v73
  %77 = xla_tuple %v76
  %s78 = scalar_lea.vmem %s2, 56
  %79 = vst [vmem:[%s78] sm:$0xff] %v76

// kernel: egtf_forward.7
$region0: #{egtf_forward.7}
  #allocation0 [shape = 'u32[]', space=smem, size = 0x4, offset = 0x4, fixed_abs, tag = 'smem constant byte address 0x4 - core index']
  #allocation1 [shape = 'u32[144,128]{1,0:T(1,128)}', space=vmem, size = 0x12000, scoped, tag = 'internal scratch']
  %s0 = inlined_call_operand.vmem [shape: f32[16,32], index: 0, kind: input, shape index: {}]
  %s1 = inlined_call_operand.vmem [shape: f32[4,32,8], index: 1, kind: input, shape index: {}]
  %s2 = inlined_call_operand.vmem [shape: f32[4,32,8], index: 2, kind: input, shape index: {}]
  %s3 = inlined_call_operand.vmem [shape: f32[4,32,8], index: 3, kind: input, shape index: {}]
  %s4 = inlined_call_operand.vmem [shape: f32[4,1,8], index: 4, kind: input, shape index: {}]
  %s5 = inlined_call_operand.vmem [shape: f32[4,1,8], index: 5, kind: input, shape index: {}]
  %s6 = inlined_call_operand.vmem [shape: f32[4,1,8], index: 6, kind: input, shape index: {}]
  %s7 = inlined_call_operand.vmem [shape: f32[4,16,8], index: 7, kind: output, shape index: {0}]
  %s8 = inlined_call_operand.vmem [shape: f32[4,16,8], index: 8, kind: output, shape index: {1}]
  %s9 = inlined_call_operand.vmem [shape: f32[4,16,8], index: 9, kind: output, shape index: {2}]
  %10 = xla_tuple %s7, %s8, %s9
  %s11 = sld [smem:[#allocation0]]
  $region77: #{egtf_forward.7} parent=0
    _
  %s13 = ssub.s32 1, %s11
  %s14 = scalar_select 0, %s13, %s11
  loop: start=0, step=1, limit=10
  $region2: #{egtf_forward.7} parent=0 // loop_pre_header
    _
  $region3: #{egtf_forward.7} parent=0 // loop_header
    %s16 = sphi 0, %s20
    %p17 = scmp.ge.s32.totalorder %s16, 10
    %s23 = sphi 0, %s35
    %s24 = sphi 0, %s31
    %s25 = sphi 0, %s23
    %s26 = sphi 0, %s24
    %s27 = sphi 0, %s25
    %s28 = sphi 0, %s26
    %s38 = sphi 0, %s40
    %s41 = sphi 0, %s38
    %s42 = sphi 0, %s41
    %s58 = sphi 0, %s42
    %s64 = sphi 0, %s66
    %s67 = sphi 0, %s64
    %s68 = sphi 0, %s67
    %s84 = sphi 0, %s68
    %s90 = sphi 0, %s92
    %s93 = sphi 0, %s90
    %s94 = sphi 0, %s93
    %s110 = sphi 0, %s94
    %s116 = sphi 0, %s118
    %s119 = sphi 0, %s116
    %s120 = sphi 0, %s119
    %s136 = sphi 0, %s120
    %s142 = sphi 0, %s144
    %s145 = sphi 0, %s142
    %s146 = sphi 0, %s145
    %s162 = sphi 0, %s146
    %s168 = sphi 0, %s170
    %s171 = sphi 0, %s168
    %s172 = sphi 0, %s171
    %s188 = sphi 0, %s172
    %s194 = sphi 0, %s196
    %s197 = sphi 0, %s194
    %s198 = sphi 0, %s197
    %s214 = sphi 0, %s198
    %s222 = sphi 0, %s224
    %s225 = sphi 0, %s222
    %s226 = sphi 0, %s225
    %s242 = sphi 0, %s226
    %s250 = sphi 0, %s252
    %s253 = sphi 0, %s250
    %s254 = sphi 0, %s253
    %s270 = sphi 0, %s254
    %s278 = sphi 0, %s280
    %s281 = sphi 0, %s278
    %s282 = sphi 0, %s281
    %s298 = sphi 0, %s282
  $region4: #{egtf_forward.7} parent=0 // loop_header_branch
    %19 = sbr.rel (%p17) target = $region8
  $region5: #{egtf_forward.7} parent=0 // loop_body
    %s21 = ssub.s32 %s16, 1
    %s22 = ssub.s32 %s16, 2
    %s29 = sadd.s32 1, %s24
    %p30 = scmp.ge.s32.totalorder %s29, 2
    %s31 = scalar_select %p30, 0, %s29
    %s32 = sadd.s32 1, %s23
    %s33 = scalar_select %p30, %s32, %s23
    %p34 = scmp.ge.s32.totalorder %s33, 4
    %s35 = scalar_select %p34, 0, %s33
    %s36 = ssub.s32 %s24, %s31
    %p37 = scmp.eq.s32.totalorder %s36, 0
    %s39 = sadd.s32 %s38, 1
    %s40 = scalar_select %p37, %s38, %s39
    %p43 = pneg %p37
    %p44 = scmp.eq.s32.totalorder %s16, 7
    %p45 = por %p43, %p44
    %p46 = scmp.ne.s32.totalorder %s38, %s41
    %p47 = scmp.eq.s32.totalorder %s16, 0
    %p48 = por %p46, %p47
    %p49 = scmp.ne.s32.totalorder %s38, %s41
    %p50 = scmp.eq.s32.totalorder %s21, 7
    %p51 = por %p49, %p50
    %p52 = scmp.ne.s32.totalorder %s41, %s42
    %p53 = scmp.eq.s32.totalorder %s21, 0
    %p54 = por %p52, %p53
    %p55 = scmp.ne.s32.totalorder %s41, %s42
    %p56 = scmp.eq.s32.totalorder %s22, 7
    %p57 = por %p55, %p56
    %p59 = scmp.ne.s32.totalorder %s42, %s58
    %p60 = scmp.eq.s32.totalorder %s22, 0
    %p61 = por %p59, %p60
    %s62 = ssub.s32 %s23, %s35
    %p63 = scmp.eq.s32.totalorder %s62, 0
    %s65 = sadd.s32 %s64, 1
    %s66 = scalar_select %p63, %s64, %s65
    %p69 = pneg %p63
    %p70 = scmp.eq.s32.totalorder %s16, 7
    %p71 = por %p69, %p70
    %p72 = scmp.ne.s32.totalorder %s64, %s67
    %p73 = scmp.eq.s32.totalorder %s16, 0
    %p74 = por %p72, %p73
    %p75 = scmp.ne.s32.totalorder %s64, %s67
    %p76 = scmp.eq.s32.totalorder %s21, 7
    %p77 = por %p75, %p76
    %p78 = scmp.ne.s32.totalorder %s67, %s68
    %p79 = scmp.eq.s32.totalorder %s21, 0
    %p80 = por %p78, %p79
    %p81 = scmp.ne.s32.totalorder %s67, %s68
    %p82 = scmp.eq.s32.totalorder %s22, 7
    %p83 = por %p81, %p82
    %p85 = scmp.ne.s32.totalorder %s68, %s84
    %p86 = scmp.eq.s32.totalorder %s22, 0
    %p87 = por %p85, %p86
    %s88 = ssub.s32 %s23, %s35
    %p89 = scmp.eq.s32.totalorder %s88, 0
    %s91 = sadd.s32 %s90, 1
    %s92 = scalar_select %p89, %s90, %s91
    %p95 = pneg %p89
    %p96 = scmp.eq.s32.totalorder %s16, 7
    %p97 = por %p95, %p96
    %p98 = scmp.ne.s32.totalorder %s90, %s93
    %p99 = scmp.eq.s32.totalorder %s16, 0
    %p100 = por %p98, %p99
    %p101 = scmp.ne.s32.totalorder %s90, %s93
    %p102 = scmp.eq.s32.totalorder %s21, 7
    %p103 = por %p101, %p102
    %p104 = scmp.ne.s32.totalorder %s93, %s94
    %p105 = scmp.eq.s32.totalorder %s21, 0
    %p106 = por %p104, %p105
    %p107 = scmp.ne.s32.totalorder %s93, %s94
    %p108 = scmp.eq.s32.totalorder %s22, 7
    %p109 = por %p107, %p108
    %p111 = scmp.ne.s32.totalorder %s94, %s110
    %p112 = scmp.eq.s32.totalorder %s22, 0
    %p113 = por %p111, %p112
    %s114 = ssub.s32 %s23, %s35
    %p115 = scmp.eq.s32.totalorder %s114, 0
    %s117 = sadd.s32 %s116, 1
    %s118 = scalar_select %p115, %s116, %s117
    %p121 = pneg %p115
    %p122 = scmp.eq.s32.totalorder %s16, 7
    %p123 = por %p121, %p122
    %p124 = scmp.ne.s32.totalorder %s116, %s119
    %p125 = scmp.eq.s32.totalorder %s16, 0
    %p126 = por %p124, %p125
    %p127 = scmp.ne.s32.totalorder %s116, %s119
    %p128 = scmp.eq.s32.totalorder %s21, 7
    %p129 = por %p127, %p128
    %p130 = scmp.ne.s32.totalorder %s119, %s120
    %p131 = scmp.eq.s32.totalorder %s21, 0
    %p132 = por %p130, %p131
    %p133 = scmp.ne.s32.totalorder %s119, %s120
    %p134 = scmp.eq.s32.totalorder %s22, 7
    %p135 = por %p133, %p134
    %p137 = scmp.ne.s32.totalorder %s120, %s136
    %p138 = scmp.eq.s32.totalorder %s22, 0
    %p139 = por %p137, %p138
    %s140 = ssub.s32 %s23, %s35
    %p141 = scmp.eq.s32.totalorder %s140, 0
    %s143 = sadd.s32 %s142, 1
    %s144 = scalar_select %p141, %s142, %s143
    %p147 = pneg %p141
    %p148 = scmp.eq.s32.totalorder %s16, 7
    %p149 = por %p147, %p148
    %p150 = scmp.ne.s32.totalorder %s142, %s145
    %p151 = scmp.eq.s32.totalorder %s16, 0
    %p152 = por %p150, %p151
    %p153 = scmp.ne.s32.totalorder %s142, %s145
    %p154 = scmp.eq.s32.totalorder %s21, 7
    %p155 = por %p153, %p154
    %p156 = scmp.ne.s32.totalorder %s145, %s146
    %p157 = scmp.eq.s32.totalorder %s21, 0
    %p158 = por %p156, %p157
    %p159 = scmp.ne.s32.totalorder %s145, %s146
    %p160 = scmp.eq.s32.totalorder %s22, 7
    %p161 = por %p159, %p160
    %p163 = scmp.ne.s32.totalorder %s146, %s162
    %p164 = scmp.eq.s32.totalorder %s22, 0
    %p165 = por %p163, %p164
    %s166 = ssub.s32 %s23, %s35
    %p167 = scmp.eq.s32.totalorder %s166, 0
    %s169 = sadd.s32 %s168, 1
    %s170 = scalar_select %p167, %s168, %s169
    %p173 = pneg %p167
    %p174 = scmp.eq.s32.totalorder %s16, 7
    %p175 = por %p173, %p174
    %p176 = scmp.ne.s32.totalorder %s168, %s171
    %p177 = scmp.eq.s32.totalorder %s16, 0
    %p178 = por %p176, %p177
    %p179 = scmp.ne.s32.totalorder %s168, %s171
    %p180 = scmp.eq.s32.totalorder %s21, 7
    %p181 = por %p179, %p180
    %p182 = scmp.ne.s32.totalorder %s171, %s172
    %p183 = scmp.eq.s32.totalorder %s21, 0
    %p184 = por %p182, %p183
    %p185 = scmp.ne.s32.totalorder %s171, %s172
    %p186 = scmp.eq.s32.totalorder %s22, 7
    %p187 = por %p185, %p186
    %p189 = scmp.ne.s32.totalorder %s172, %s188
    %p190 = scmp.eq.s32.totalorder %s22, 0
    %p191 = por %p189, %p190
    %s192 = ssub.s32 %s23, %s35
    %p193 = scmp.eq.s32.totalorder %s192, 0
    %s195 = sadd.s32 %s194, 1
    %s196 = scalar_select %p193, %s194, %s195
    %p199 = pneg %p193
    %p200 = scmp.eq.s32.totalorder %s16, 7
    %p201 = por %p199, %p200
    %p202 = scmp.ne.s32.totalorder %s194, %s197
    %p203 = scmp.eq.s32.totalorder %s16, 0
    %p204 = por %p202, %p203
    %p205 = scmp.ne.s32.totalorder %s194, %s197
    %p206 = scmp.eq.s32.totalorder %s21, 7
    %p207 = por %p205, %p206
    %p208 = scmp.ne.s32.totalorder %s197, %s198
    %p209 = scmp.eq.s32.totalorder %s21, 0
    %p210 = por %p208, %p209
    %p211 = scmp.ne.s32.totalorder %s197, %s198
    %p212 = scmp.eq.s32.totalorder %s22, 7
    %p213 = por %p211, %p212
    %p215 = scmp.ne.s32.totalorder %s198, %s214
    %p216 = scmp.eq.s32.totalorder %s22, 0
    %p217 = por %p215, %p216
    %s218 = ssub.s32 %s23, %s35
    %s219 = ssub.s32 %s24, %s31
    %s220 = sor.u32 %s218, %s219
    %p221 = scmp.eq.s32.totalorder %s220, 0
    %s223 = sadd.s32 %s222, 1
    %s224 = scalar_select %p221, %s222, %s223
    %p227 = pneg %p221
    %p228 = scmp.eq.s32.totalorder %s16, 7
    %p229 = por %p227, %p228
    %p230 = scmp.ne.s32.totalorder %s222, %s225
    %p231 = scmp.eq.s32.totalorder %s16, 0
    %p232 = por %p230, %p231
    %p233 = scmp.ne.s32.totalorder %s222, %s225
    %p234 = scmp.eq.s32.totalorder %s21, 7
    %p235 = por %p233, %p234
    %p236 = scmp.ne.s32.totalorder %s225, %s226
    %p237 = scmp.eq.s32.totalorder %s21, 0
    %p238 = por %p236, %p237
    %p239 = scmp.ne.s32.totalorder %s225, %s226
    %p240 = scmp.eq.s32.totalorder %s22, 7
    %p241 = por %p239, %p240
    %p243 = scmp.ne.s32.totalorder %s226, %s242
    %p244 = scmp.eq.s32.totalorder %s22, 0
    %p245 = por %p243, %p244
    %s246 = ssub.s32 %s23, %s35
    %s247 = ssub.s32 %s24, %s31
    %s248 = sor.u32 %s246, %s247
    %p249 = scmp.eq.s32.totalorder %s248, 0
    %s251 = sadd.s32 %s250, 1
    %s252 = scalar_select %p249, %s250, %s251
    %p255 = pneg %p249
    %p256 = scmp.eq.s32.totalorder %s16, 7
    %p257 = por %p255, %p256
    %p258 = scmp.ne.s32.totalorder %s250, %s253
    %p259 = scmp.eq.s32.totalorder %s16, 0
    %p260 = por %p258, %p259
    %p261 = scmp.ne.s32.totalorder %s250, %s253
    %p262 = scmp.eq.s32.totalorder %s21, 7
    %p263 = por %p261, %p262
    %p264 = scmp.ne.s32.totalorder %s253, %s254
    %p265 = scmp.eq.s32.totalorder %s21, 0
    %p266 = por %p264, %p265
    %p267 = scmp.ne.s32.totalorder %s253, %s254
    %p268 = scmp.eq.s32.totalorder %s22, 7
    %p269 = por %p267, %p268
    %p271 = scmp.ne.s32.totalorder %s254, %s270
    %p272 = scmp.eq.s32.totalorder %s22, 0
    %p273 = por %p271, %p272
    %s274 = ssub.s32 %s23, %s35
    %s275 = ssub.s32 %s24, %s31
    %s276 = sor.u32 %s274, %s275
    %p277 = scmp.eq.s32.totalorder %s276, 0
    %s279 = sadd.s32 %s278, 1
    %s280 = scalar_select %p277, %s278, %s279
    %p283 = pneg %p277
    %p284 = scmp.eq.s32.totalorder %s16, 7
    %p285 = por %p283, %p284
    %p286 = scmp.ne.s32.totalorder %s278, %s281
    %p287 = scmp.eq.s32.totalorder %s16, 0
    %p288 = por %p286, %p287
    %p289 = scmp.ne.s32.totalorder %s278, %s281
    %p290 = scmp.eq.s32.totalorder %s21, 7
    %p291 = por %p289, %p290
    %p292 = scmp.ne.s32.totalorder %s281, %s282
    %p293 = scmp.eq.s32.totalorder %s21, 0
    %p294 = por %p292, %p293
    %p295 = scmp.ne.s32.totalorder %s281, %s282
    %p296 = scmp.eq.s32.totalorder %s22, 7
    %p297 = por %p295, %p296
    %p299 = scmp.ne.s32.totalorder %s282, %s298
    %p300 = scmp.eq.s32.totalorder %s22, 0
    %p301 = por %p299, %p300
    %p302 = scmp.le.s32.totalorder 1, %s16
    %p303 = scmp.lt.s32.totalorder %s16, 9
    %p304 = pnand %p302, %p303
    %p305 = pneg %p304
    // Predicated region
    $region9: #{egtf_forward.7} parent=5 // pred_check
      _
    $region10: #{egtf_forward.7} parent=5 // pred_check_branch
      %307 = sbr.rel (%p304) target = $region12
    $region11: #{egtf_forward.7} parent=5 // pred_region
      %s308 = ssub.s32 %s16, 1
    $region12: #{egtf_forward.7} parent=5 // pred_fallthru
      _
    %p309 = scmp.lt.s32.totalorder %s16, 8
    // Predicated region
    $region13: #{egtf_forward.7} parent=5 // pred_check
      %p310 = pneg %p309
    $region14: #{egtf_forward.7} parent=5 // pred_check_branch
      %312 = sbr.rel (%p310) target = $region16
    $region15: #{egtf_forward.7} parent=5 // pred_region
      // Predicated region
      $region17: #{egtf_forward.7} parent=15 // pred_check
        %p313 = pneg %p48
      $region18: #{egtf_forward.7} parent=15 // pred_check_branch
        %315 = sbr.rel (%p313) target = $region20
      $region19: #{egtf_forward.7} parent=15 // pred_region
        %p316 = scmp.lt.s32.totalorder %s24, 1
        %s317 = scalar_select %p316, %s24, 1
        %s318 = smul.addr %s317, 8
        %s319 = scalar_lea.vmem %s0, %s318
      $region20: #{egtf_forward.7} parent=15 // pred_fallthru
        _
      // Predicated region
      $region21: #{egtf_forward.7} parent=15 // pred_check
        %p320 = pneg %p74
      $region22: #{egtf_forward.7} parent=15 // pred_check_branch
        %322 = sbr.rel (%p320) target = $region24
      $region23: #{egtf_forward.7} parent=15 // pred_region
        %p323 = scmp.lt.s32.totalorder %s23, 3
        %s324 = scalar_select %p323, %s23, 3
        %s325 = smul.addr %s324, 4
        %s326 = smul.addr %s325, 8
        %s327 = scalar_lea.vmem %s1, %s326
      $region24: #{egtf_forward.7} parent=15 // pred_fallthru
        _
      // Predicated region
      $region25: #{egtf_forward.7} parent=15 // pred_check
        %p328 = pneg %p100
      $region26: #{egtf_forward.7} parent=15 // pred_check_branch
        %330 = sbr.rel (%p328) target = $region28
      $region27: #{egtf_forward.7} parent=15 // pred_region
        %p331 = scmp.lt.s32.totalorder %s23, 3
        %s332 = scalar_select %p331, %s23, 3
        %s333 = smul.addr %s332, 4
        %s334 = smul.addr %s333, 8
        %s335 = scalar_lea.vmem %s2, %s334
      $region28: #{egtf_forward.7} parent=15 // pred_fallthru
        _
      // Predicated region
      $region29: #{egtf_forward.7} parent=15 // pred_check
        %p336 = pneg %p126
      $region30: #{egtf_forward.7} parent=15 // pred_check_branch
        %338 = sbr.rel (%p336) target = $region32
      $region31: #{egtf_forward.7} parent=15 // pred_region
        %p339 = scmp.lt.s32.totalorder %s23, 3
        %s340 = scalar_select %p339, %s23, 3
        %s341 = smul.addr %s340, 4
        %s342 = smul.addr %s341, 8
        %s343 = scalar_lea.vmem %s3, %s342
      $region32: #{egtf_forward.7} parent=15 // pred_fallthru
        _
      // Predicated region
      $region33: #{egtf_forward.7} parent=15 // pred_check
        %p344 = pneg %p152
      $region34: #{egtf_forward.7} parent=15 // pred_check_branch
        %346 = sbr.rel (%p344) target = $region36
      $region35: #{egtf_forward.7} parent=15 // pred_region
        %p347 = scmp.lt.s32.totalorder %s23, 3
        %s348 = scalar_select %p347, %s23, 3
        %s349 = scalar_lea.vmem %s4, %s348
      $region36: #{egtf_forward.7} parent=15 // pred_fallthru
        _
      // Predicated region
      $region37: #{egtf_forward.7} parent=15 // pred_check
        %p350 = pneg %p178
      $region38: #{egtf_forward.7} parent=15 // pred_check_branch
        %352 = sbr.rel (%p350) target = $region40
      $region39: #{egtf_forward.7} parent=15 // pred_region
        %p353 = scmp.lt.s32.totalorder %s23, 3
        %s354 = scalar_select %p353, %s23, 3
        %s355 = scalar_lea.vmem %s5, %s354
      $region40: #{egtf_forward.7} parent=15 // pred_fallthru
        _
      // Predicated region
      $region41: #{egtf_forward.7} parent=15 // pred_check
        %p356 = pneg %p204
      $region42: #{egtf_forward.7} parent=15 // pred_check_branch
        %358 = sbr.rel (%p356) target = $region44
      $region43: #{egtf_forward.7} parent=15 // pred_region
        %p359 = scmp.lt.s32.totalorder %s23, 3
        %s360 = scalar_select %p359, %s23, 3
        %s361 = scalar_lea.vmem %s6, %s360
      $region44: #{egtf_forward.7} parent=15 // pred_fallthru
        _
    $region16: #{egtf_forward.7} parent=5 // pred_fallthru
      _
    %p362 = scmp.le.s32.totalorder 1, %s16
    %p363 = scmp.lt.s32.totalorder %s16, 9
    %p364 = pnand %p362, %p363
    %p365 = pneg %p364
    // Predicated region
    $region45: #{egtf_forward.7} parent=5 // pred_check
      _
    $region46: #{egtf_forward.7} parent=5 // pred_check_branch
      %367 = sbr.rel (%p364) target = $region48
    $region47: #{egtf_forward.7} parent=5 // pred_region
      %s368 = ssub.s32 %s16, 1
      %p369 = scmp.lt.s32.totalorder %s26, 1
      %s370 = scalar_select %p369, %s26, 1
      %s371 = smul.addr %s370, 8
      %s372 = scalar_lea.vmem %s0, %s371
      %p373 = pneg %p54
      %p374 = pneg %p51
      %p375 = scmp.lt.s32.totalorder %s25, 3
      %s376 = scalar_select %p375, %s25, 3
      %s377 = smul.addr %s376, 4
      %s378 = smul.addr %s377, 8
      %s379 = scalar_lea.vmem %s1, %s378
      %p380 = pneg %p80
      %p381 = pneg %p77
      %p382 = scmp.lt.s32.totalorder %s25, 3
      %s383 = scalar_select %p382, %s25, 3
      %s384 = smul.addr %s383, 4
      %s385 = smul.addr %s384, 8
      %s386 = scalar_lea.vmem %s2, %s385
      %p387 = pneg %p106
      %p388 = pneg %p103
      %p389 = scmp.lt.s32.totalorder %s25, 3
      %s390 = scalar_select %p389, %s25, 3
      %s391 = smul.addr %s390, 4
      %s392 = smul.addr %s391, 8
      %s393 = scalar_lea.vmem %s3, %s392
      %p394 = pneg %p132
      %p395 = pneg %p129
      %p396 = scmp.lt.s32.totalorder %s25, 3
      %s397 = scalar_select %p396, %s25, 3
      %s398 = scalar_lea.vmem %s4, %s397
      %p399 = pneg %p158
      %p400 = pneg %p155
      %p401 = scmp.lt.s32.totalorder %s25, 3
      %s402 = scalar_select %p401, %s25, 3
      %s403 = scalar_lea.vmem %s5, %s402
      %p404 = pneg %p184
      %p405 = pneg %p181
      %p406 = scmp.lt.s32.totalorder %s25, 3
      %s407 = scalar_select %p406, %s25, 3
      %s408 = scalar_lea.vmem %s6, %s407
      %p409 = pneg %p210
      %p410 = pneg %p207
      %p411 = pneg %p238
      %p412 = pneg %p235
      %p413 = scmp.lt.s32.totalorder %s25, 3
      %s414 = scalar_select %p413, %s25, 3
      %p415 = scmp.lt.s32.totalorder %s26, 1
      %s416 = scalar_select %p415, %s26, 1
      %s417 = smul.addr %s414, 2
      %s418 = sadd.s32 %s416, %s417
      %s419 = smul.addr %s418, 8
      %s420 = scalar_lea.vmem %s7, %s419
      %p421 = pneg %p266
      %p422 = pneg %p263
      %p423 = scmp.lt.s32.totalorder %s25, 3
      %s424 = scalar_select %p423, %s25, 3
      %p425 = scmp.lt.s32.totalorder %s26, 1
      %s426 = scalar_select %p425, %s26, 1
      %s427 = smul.addr %s424, 2
      %s428 = sadd.s32 %s426, %s427
      %s429 = smul.addr %s428, 8
      %s430 = scalar_lea.vmem %s8, %s429
      %p431 = pneg %p294
      %p432 = pneg %p291
      %p433 = scmp.lt.s32.totalorder %s25, 3
      %s434 = scalar_select %p433, %s25, 3
      %p435 = scmp.lt.s32.totalorder %s26, 1
      %s436 = scalar_select %p435, %s26, 1
      %s437 = smul.addr %s434, 2
      %s438 = sadd.s32 %s436, %s437
      %s439 = smul.addr %s438, 8
      %s440 = scalar_lea.vmem %s9, %s439
      %p441 = scmp.lt.s32.totalorder %s26, 1
      %s442 = scalar_select %p441, %s26, 1
      %s443 = smul.addr %s442, 8
      %s444 = scalar_lea.vmem %s0, %s443
      %p445 = scmp.lt.s32.totalorder %s25, 3
      %s446 = scalar_select %p445, %s25, 3
      %s447 = smul.addr %s446, 4
      %s448 = smul.addr %s447, 8
      %s449 = scalar_lea.vmem %s1, %s448
      %p450 = scmp.lt.s32.totalorder %s25, 3
      %s451 = scalar_select %p450, %s25, 3
      %s452 = smul.addr %s451, 4
      %s453 = smul.addr %s452, 8
      %s454 = scalar_lea.vmem %s2, %s453
      %p455 = scmp.lt.s32.totalorder %s25, 3
      %s456 = scalar_select %p455, %s25, 3
      %s457 = smul.addr %s456, 4
      %s458 = smul.addr %s457, 8
      %s459 = scalar_lea.vmem %s3, %s458
      %p460 = scmp.lt.s32.totalorder %s25, 3
      %s461 = scalar_select %p460, %s25, 3
      %s462 = scalar_lea.vmem %s4, %s461
      %p463 = scmp.lt.s32.totalorder %s25, 3
      %s464 = scalar_select %p463, %s25, 3
      %s465 = scalar_lea.vmem %s5, %s464
      %p466 = scmp.lt.s32.totalorder %s25, 3
      %s467 = scalar_select %p466, %s25, 3
      %s468 = scalar_lea.vmem %s6, %s467
      %p469 = scmp.lt.s32.totalorder %s25, 3
      %s470 = scalar_select %p469, %s25, 3
      %p471 = scmp.lt.s32.totalorder %s26, 1
      %s472 = scalar_select %p471, %s26, 1
      %s473 = smul.addr %s470, 2
      %s474 = sadd.s32 %s472, %s473
      %s475 = smul.addr %s474, 8
      %s476 = scalar_lea.vmem %s7, %s475
      %p477 = scmp.lt.s32.totalorder %s25, 3
      %s478 = scalar_select %p477, %s25, 3
      %p479 = scmp.lt.s32.totalorder %s26, 1
      %s480 = scalar_select %p479, %s26, 1
      %s481 = smul.addr %s478, 2
      %s482 = sadd.s32 %s480, %s481
      %s483 = smul.addr %s482, 8
      %s484 = scalar_lea.vmem %s8, %s483
      %p485 = scmp.lt.s32.totalorder %s25, 3
      %s486 = scalar_select %p485, %s25, 3
      %p487 = scmp.lt.s32.totalorder %s26, 1
      %s488 = scalar_select %p487, %s26, 1
      %s489 = smul.addr %s486, 2
      %s490 = sadd.s32 %s488, %s489
      %s491 = smul.addr %s490, 8
      %s492 = scalar_lea.vmem %s9, %s491
      %v494 = vld [vmem:[%s444] sm:$0xff]
      %v495 = vld [vmem:[%s449] sm:$0xff]
      %v496 = vld [vmem:[%s449 + $0x8] sm:$0xff]
      %v497 = vld [vmem:[%s449 + $0x10] sm:$0xff]
      %v498 = vld [vmem:[%s449 + $0x18] sm:$0xff]
      %v499 = vpack.c.bf16 %v494, %v494
      %v500 = vpack.c.bf16 %v496, %v495
      %v501 = vpack.c.bf16 %v498, %v497
      %v502 = vld [vmem:[%s462] sm:$0x1]
      %v504 = vlaneseq
      %v505 = vshrl.u32 %v504, 7
      %v506 = vsub.s32 0, %v505
      %v507 = vrot.slane %v502, %v506
      %vm509 = vcmask 261120
      %v511 = vsel %vm509, %v499, 0
      %513 = vmatprep.subr.bf16.mxu0 0
      %514 = vmatpush1.bf16.msra.mxu0 %v500
      %515 = vmatprep.subr.bf16.mxu0 0
      %516 = vmatpush1.bf16.msra.mxu0 %v501
      %517 = vmatprep.subr.bf16.mxu0 0
      %518 = vmatpush1.bf16.msra.mxu0 0
      %519 = vmatprep.subr.bf16.mxu0 0
      %520 = vmatpush1.bf16.msra.mxu0 0
      %521 = vmatprep.subr.bf16.mxu0 0
      %522 = vmatpush1.bf16.msra.mxu0 0
      %523 = vmatprep.subr.bf16.mxu0 0
      %524 = vmatpush1.bf16.msra.mxu0 0
      %525 = vmatprep.subr.bf16.mxu0 0
      %526 = vmatpush1.bf16.msra.mxu0 0
      %527 = vmatprep.subr.bf16.mxu0 0
      %528 = vmatpush1.bf16.msra.mxu0 0
      %529 = vmatprep.subr.bf16.mxu0 0
      %530 = vmatpush1.bf16.msra.mxu0 0
      %531 = vmatprep.subr.bf16.mxu0 0
      %532 = vmatpush1.bf16.msra.mxu0 0
      %533 = vmatprep.subr.bf16.mxu0 0
      %534 = vmatpush1.bf16.msra.mxu0 0
      %535 = vmatprep.subr.bf16.mxu0 0
      %536 = vmatpush1.bf16.msra.mxu0 0
      %537 = vmatprep.subr.bf16.mxu0 0
      %538 = vmatpush1.bf16.msra.mxu0 0
      %539 = vmatprep.subr.bf16.mxu0 0
      %540 = vmatpush1.bf16.msra.mxu0 0
      %541 = vmatprep.subr.bf16.mxu0 0
      %542 = vmatpush1.bf16.msra.mxu0 0
      %543 = vmatprep.subr.bf16.mxu0 0
      %544 = vmatpush1.bf16.msra.mxu0 0
      %545 = vmatprep.mubr.bf16.mxu0 0
      %546 = vmatmul.mubr.bf16.gmra.mrb[0].mxu0 %v511
      %v547 = vpop.f32.mrb[0].mxu0
      %v548 = vadd.f32 %v507, %v547
      %v549 = vpop.f32.mrb[0].mxu0
      %v550 = vpop.f32.mrb[0].mxu0
      %v551 = vpop.f32.mrb[0].mxu0
      %552 = vdwg.mxu0
      %vm553 = vcmask 64512
      %554 = vst.msk [vmem:[%s476] sm:$0xff] %vm553, %v548
      %v555 = vld [vmem:[%s454] sm:$0xff]
      %v556 = vld [vmem:[%s454 + $0x8] sm:$0xff]
      %v557 = vld [vmem:[%s454 + $0x10] sm:$0xff]
      %v558 = vld [vmem:[%s454 + $0x18] sm:$0xff]
      %v559 = vpack.c.bf16 %v556, %v555
      %v560 = vpack.c.bf16 %v558, %v557
      %v561 = vld [vmem:[%s465] sm:$0x1]
      %v563 = vlaneseq
      %v564 = vshrl.u32 %v563, 7
      %v565 = vsub.s32 0, %v564
      %v566 = vrot.slane %v561, %v565
      %568 = vmatprep.subr.bf16.mxu0 0
      %569 = vmatpush1.bf16.msra.mxu0 %v559
      %570 = vmatprep.subr.bf16.mxu0 0
      %571 = vmatpush1.bf16.msra.mxu0 %v560
      %572 = vmatprep.subr.bf16.mxu0 0
      %573 = vmatpush1.bf16.msra.mxu0 0
      %574 = vmatprep.subr.bf16.mxu0 0
      %575 = vmatpush1.bf16.msra.mxu0 0
      %576 = vmatprep.subr.bf16.mxu0 0
      %577 = vmatpush1.bf16.msra.mxu0 0
      %578 = vmatprep.subr.bf16.mxu0 0
      %579 = vmatpush1.bf16.msra.mxu0 0
      %580 = vmatprep.subr.bf16.mxu0 0
      %581 = vmatpush1.bf16.msra.mxu0 0
      %582 = vmatprep.subr.bf16.mxu0 0
      %583 = vmatpush1.bf16.msra.mxu0 0
      %584 = vmatprep.subr.bf16.mxu0 0
      %585 = vmatpush1.bf16.msra.mxu0 0
      %586 = vmatprep.subr.bf16.mxu0 0
      %587 = vmatpush1.bf16.msra.mxu0 0
      %588 = vmatprep.subr.bf16.mxu0 0
      %589 = vmatpush1.bf16.msra.mxu0 0
      %590 = vmatprep.subr.bf16.mxu0 0
      %591 = vmatpush1.bf16.msra.mxu0 0
      %592 = vmatprep.subr.bf16.mxu0 0
      %593 = vmatpush1.bf16.msra.mxu0 0
      %594 = vmatprep.subr.bf16.mxu0 0
      %595 = vmatpush1.bf16.msra.mxu0 0
      %596 = vmatprep.subr.bf16.mxu0 0
      %597 = vmatpush1.bf16.msra.mxu0 0
      %598 = vmatprep.subr.bf16.mxu0 0
      %599 = vmatpush1.bf16.msra.mxu0 0
      %600 = vmatprep.mubr.bf16.mxu0 0
      %601 = vmatmul.mubr.bf16.gmra.mrb[0].mxu0 %v511
      %v602 = vpop.f32.mrb[0].mxu0
      %v603 = vadd.f32 %v566, %v602
      %v604 = vpop.f32.mrb[0].mxu0
      %v605 = vpop.f32.mrb[0].mxu0
      %v606 = vpop.f32.mrb[0].mxu0
      %607 = vdwg.mxu0
      %608 = vst.msk [vmem:[%s484] sm:$0xff] %vm553, %v603
      %v609 = vld [vmem:[%s459] sm:$0xff]
      %v610 = vld [vmem:[%s459 + $0x8] sm:$0xff]
      %v611 = vld [vmem:[%s459 + $0x10] sm:$0xff]
      %v612 = vld [vmem:[%s459 + $0x18] sm:$0xff]
      %v613 = vpack.c.bf16 %v610, %v609
      %v614 = vpack.c.bf16 %v612, %v611
      %v615 = vld [vmem:[%s468] sm:$0x1]
      %v617 = vlaneseq
      %v618 = vshrl.u32 %v617, 7
      %v619 = vsub.s32 0, %v618
      %v620 = vrot.slane %v615, %v619
      %622 = vmatprep.subr.bf16.mxu0 0
      %623 = vmatpush1.bf16.msra.mxu0 %v613
      %624 = vmatprep.subr.bf16.mxu0 0
      %625 = vmatpush1.bf16.msra.mxu0 %v614
      %626 = vmatprep.subr.bf16.mxu0 0
      %627 = vmatpush1.bf16.msra.mxu0 0
      %628 = vmatprep.subr.bf16.mxu0 0
      %629 = vmatpush1.bf16.msra.mxu0 0
      %630 = vmatprep.subr.bf16.mxu0 0
      %631 = vmatpush1.bf16.msra.mxu0 0
      %632 = vmatprep.subr.bf16.mxu0 0
      %633 = vmatpush1.bf16.msra.mxu0 0
      %634 = vmatprep.subr.bf16.mxu0 0
      %635 = vmatpush1.bf16.msra.mxu0 0
      %636 = vmatprep.subr.bf16.mxu0 0
      %637 = vmatpush1.bf16.msra.mxu0 0
      %638 = vmatprep.subr.bf16.mxu0 0
      %639 = vmatpush1.bf16.msra.mxu0 0
      %640 = vmatprep.subr.bf16.mxu0 0
      %641 = vmatpush1.bf16.msra.mxu0 0
      %642 = vmatprep.subr.bf16.mxu0 0
      %643 = vmatpush1.bf16.msra.mxu0 0
      %644 = vmatprep.subr.bf16.mxu0 0
      %645 = vmatpush1.bf16.msra.mxu0 0
      %646 = vmatprep.subr.bf16.mxu0 0
      %647 = vmatpush1.bf16.msra.mxu0 0
      %648 = vmatprep.subr.bf16.mxu0 0
      %649 = vmatpush1.bf16.msra.mxu0 0
      %650 = vmatprep.subr.bf16.mxu0 0
      %651 = vmatpush1.bf16.msra.mxu0 0
      %652 = vmatprep.subr.bf16.mxu0 0
      %653 = vmatpush1.bf16.msra.mxu0 0
      %654 = vmatprep.mubr.bf16.mxu0 0
      %655 = vmatmul.mubr.bf16.gmra.mrb[0].mxu0 %v511
      %v656 = vpop.f32.mrb[0].mxu0
      %v657 = vadd.f32 %v620, %v656
      %v658 = vpop.f32.mrb[0].mxu0
      %v659 = vpop.f32.mrb[0].mxu0
      %v660 = vpop.f32.mrb[0].mxu0
      %661 = vdwg.mxu0
      %662 = vst.msk [vmem:[%s492] sm:$0xff] %vm553, %v657
      %p663 = scmp.lt.s32.totalorder %s25, 3
      %s664 = scalar_select %p663, %s25, 3
      %p665 = scmp.lt.s32.totalorder %s26, 1
      %s666 = scalar_select %p665, %s26, 1
      %s667 = smul.addr %s664, 2
      %s668 = sadd.s32 %s666, %s667
      %s669 = smul.addr %s668, 8
      %s670 = scalar_lea.vmem %s7, %s669
      %p671 = scmp.lt.s32.totalorder %s25, 3
      %s672 = scalar_select %p671, %s25, 3
      %p673 = scmp.lt.s32.totalorder %s26, 1
      %s674 = scalar_select %p673, %s26, 1
      %s675 = smul.addr %s672, 2
      %s676 = sadd.s32 %s674, %s675
      %s677 = smul.addr %s676, 8
      %s678 = scalar_lea.vmem %s8, %s677
      %p679 = scmp.lt.s32.totalorder %s25, 3
      %s680 = scalar_select %p679, %s25, 3
      %p681 = scmp.lt.s32.totalorder %s26, 1
      %s682 = scalar_select %p681, %s26, 1
      %s683 = smul.addr %s680, 2
      %s684 = sadd.s32 %s682, %s683
      %s685 = smul.addr %s684, 8
      %s686 = scalar_lea.vmem %s9, %s685
      // Predicated region
      $region49: #{egtf_forward.7} parent=47 // pred_check
        %p687 = pneg %p235
      $region50: #{egtf_forward.7} parent=47 // pred_check_branch
        %689 = sbr.rel (%p687) target = $region52
      $region51: #{egtf_forward.7} parent=47 // pred_region
        _
      $region52: #{egtf_forward.7} parent=47 // pred_fallthru
        _
      // Predicated region
      $region53: #{egtf_forward.7} parent=47 // pred_check
        %p690 = pneg %p263
      $region54: #{egtf_forward.7} parent=47 // pred_check_branch
        %692 = sbr.rel (%p690) target = $region56
      $region55: #{egtf_forward.7} parent=47 // pred_region
        _
      $region56: #{egtf_forward.7} parent=47 // pred_fallthru
        _
      // Predicated region
      $region57: #{egtf_forward.7} parent=47 // pred_check
        %p693 = pneg %p291
      $region58: #{egtf_forward.7} parent=47 // pred_check_branch
        %695 = sbr.rel (%p693) target = $region60
      $region59: #{egtf_forward.7} parent=47 // pred_region
        _
      $region60: #{egtf_forward.7} parent=47 // pred_fallthru
        _
    $region48: #{egtf_forward.7} parent=5 // pred_fallthru
      _
    %p696 = scmp.le.s32.totalorder 2, %s16
    // Predicated region
    $region61: #{egtf_forward.7} parent=5 // pred_check
      %p697 = pneg %p696
    $region62: #{egtf_forward.7} parent=5 // pred_check_branch
      %699 = sbr.rel (%p697) target = $region64
    $region63: #{egtf_forward.7} parent=5 // pred_region
      %s700 = ssub.s32 %s16, 2
      // Predicated region
      $region65: #{egtf_forward.7} parent=63 // pred_check
        %p701 = pneg %p241
      $region66: #{egtf_forward.7} parent=63 // pred_check_branch
        %703 = sbr.rel (%p701) target = $region68
      $region67: #{egtf_forward.7} parent=63 // pred_region
        %p704 = scmp.lt.s32.totalorder %s27, 3
        %s705 = scalar_select %p704, %s27, 3
        %p706 = scmp.lt.s32.totalorder %s28, 1
        %s707 = scalar_select %p706, %s28, 1
        %s708 = smul.addr %s705, 2
        %s709 = sadd.s32 %s707, %s708
        %s710 = smul.addr %s709, 8
        %s711 = scalar_lea.vmem %s7, %s710
      $region68: #{egtf_forward.7} parent=63 // pred_fallthru
        _
      // Predicated region
      $region69: #{egtf_forward.7} parent=63 // pred_check
        %p712 = pneg %p269
      $region70: #{egtf_forward.7} parent=63 // pred_check_branch
        %714 = sbr.rel (%p712) target = $region72
      $region71: #{egtf_forward.7} parent=63 // pred_region
        %p715 = scmp.lt.s32.totalorder %s27, 3
        %s716 = scalar_select %p715, %s27, 3
        %p717 = scmp.lt.s32.totalorder %s28, 1
        %s718 = scalar_select %p717, %s28, 1
        %s719 = smul.addr %s716, 2
        %s720 = sadd.s32 %s718, %s719
        %s721 = smul.addr %s720, 8
        %s722 = scalar_lea.vmem %s8, %s721
      $region72: #{egtf_forward.7} parent=63 // pred_fallthru
        _
      // Predicated region
      $region73: #{egtf_forward.7} parent=63 // pred_check
        %p723 = pneg %p297
      $region74: #{egtf_forward.7} parent=63 // pred_check_branch
        %725 = sbr.rel (%p723) target = $region76
      $region75: #{egtf_forward.7} parent=63 // pred_region
        %p726 = scmp.lt.s32.totalorder %s27, 3
        %s727 = scalar_select %p726, %s27, 3
        %p728 = scmp.lt.s32.totalorder %s28, 1
        %s729 = scalar_select %p728, %s28, 1
        %s730 = smul.addr %s727, 2
        %s731 = sadd.s32 %s729, %s730
        %s732 = smul.addr %s731, 8
        %s733 = scalar_lea.vmem %s9, %s732
      $region76: #{egtf_forward.7} parent=63 // pred_fallthru
        _
    $region64: #{egtf_forward.7} parent=5 // pred_fallthru
      _
  $region6: #{egtf_forward.7} parent=0 // loop_footer
    %s20 = sadd.s32 1, %s16
  $region7: #{egtf_forward.7} parent=0 // loop_footer_branch
    %15 = sbr.rel target = $region3
  $region8: #{egtf_forward.7} parent=0 // loop_exit
    _

// kernel: egtf_forward.8
$region0: #{egtf_forward.8}
  #allocation0 [shape = 'u32[]', space=smem, size = 0x4, offset = 0x4, fixed_abs, tag = 'smem constant byte address 0x4 - core index']
  #allocation1 [shape = 'u32[144,128]{1,0:T(1,128)}', space=vmem, size = 0x12000, scoped, tag = 'internal scratch']
  #allocation2 [shape = 'f32[4,8,1]{2,1,0:T(8,128)}', space=vmem, size = 0x4000, scoped, tag = 'scratch operand']
  #allocation3 [shape = 'f32[4,8,1]{2,1,0:T(8,128)}', space=vmem, size = 0x4000, scoped, tag = 'scratch operand']
  #allocation4 [shape = 'f32[4,8,8]{2,1,0:T(8,128)}', space=vmem, size = 0x4000, scoped, tag = 'scratch operand']
  %s0 = inlined_call_operand.vmem [shape: f32[4,16,8], index: 0, kind: input, shape index: {}]
  %s1 = inlined_call_operand.vmem [shape: f32[4,16,8], index: 1, kind: input, shape index: {}]
  %s2 = inlined_call_operand.vmem [shape: f32[4,16,8], index: 2, kind: input, shape index: {}]
  %s3 = inlined_call_operand.vmem [shape: f32[4,16,8], index: 3, kind: output, shape index: {}]
  %s4 = sld [smem:[#allocation0]]
  $region201: #{egtf_forward.8} parent=0
    _
  %s6 = ssub.s32 1, %s4
  %s7 = scalar_select 0, %s6, %s4
  $region1: #{egtf_forward.8} parent=0
    #allocation5 [shape = 'u8[32768]{0}', space=vmem, size = 0x8000, scoped, tag = 'input window, operand 0']
    #allocation6 [shape = 'u8[32768]{0}', space=vmem, size = 0x8000, scoped, tag = 'input window, operand 1']
    #allocation7 [shape = 'u8[32768]{0}', space=vmem, size = 0x8000, scoped, tag = 'input window, operand 2']
    #allocation8 [shape = 'u8[32768]{0}', space=vmem, size = 0x8000, scoped, tag = 'output window, operand 0']
    loop: start=0, step=1, limit=6
    $region2: #{egtf_forward.8} parent=1 // loop_pre_header
      _
    $region3: #{egtf_forward.8} parent=1 // loop_header
      %s9 = sphi 0, %s13
      %p10 = scmp.ge.s32.totalorder %s9, 6
      %s16 = sphi 0, %s28
      %s17 = sphi 0, %s24
      %s18 = sphi 0, %s16
      %s19 = sphi 0, %s17
      %s20 = sphi 0, %s18
      %s21 = sphi 0, %s19
      %s31 = sphi 0, %s33
      %s34 = sphi 0, %s31
      %s35 = sphi 0, %s34
      %s51 = sphi 0, %s35
      %s57 = sphi 0, %s59
      %s60 = sphi 0, %s57
      %s61 = sphi 0, %s60
      %s77 = sphi 0, %s61
      %s83 = sphi 0, %s85
      %s86 = sphi 0, %s83
      %s87 = sphi 0, %s86
      %s103 = sphi 0, %s87
      %s109 = sphi 0, %s111
      %s112 = sphi 0, %s109
      %s113 = sphi 0, %s112
      %s129 = sphi 0, %s113
    $region4: #{egtf_forward.8} parent=1 // loop_header_branch
      %12 = sbr.rel (%p10) target = $region8
    $region5: #{egtf_forward.8} parent=1 // loop_body
      %s14 = ssub.s32 %s9, 1
      %s15 = ssub.s32 %s9, 2
      %s22 = sadd.s32 1, %s17
      %p23 = scmp.ge.s32.totalorder %s22, 2
      %s24 = scalar_select %p23, 0, %s22
      %s25 = sadd.s32 1, %s16
      %s26 = scalar_select %p23, %s25, %s16
      %p27 = scmp.ge.s32.totalorder %s26, 2
      %s28 = scalar_select %p27, 0, %s26
      %s29 = ssub.s32 %s16, %s28
      %p30 = scmp.eq.s32.totalorder %s29, 0
      %s32 = sadd.s32 %s31, 1
      %s33 = scalar_select %p30, %s31, %s32
      %p36 = pneg %p30
      %p37 = scmp.eq.s32.totalorder %s9, 3
      %p38 = por %p36, %p37
      %p39 = scmp.ne.s32.totalorder %s31, %s34
      %p40 = scmp.eq.s32.totalorder %s9, 0
      %p41 = por %p39, %p40
      %p42 = scmp.ne.s32.totalorder %s31, %s34
      %p43 = scmp.eq.s32.totalorder %s14, 3
      %p44 = por %p42, %p43
      %p45 = scmp.ne.s32.totalorder %s34, %s35
      %p46 = scmp.eq.s32.totalorder %s14, 0
      %p47 = por %p45, %p46
      %p48 = scmp.ne.s32.totalorder %s34, %s35
      %p49 = scmp.eq.s32.totalorder %s15, 3
      %p50 = por %p48, %p49
      %p52 = scmp.ne.s32.totalorder %s35, %s51
      %p53 = scmp.eq.s32.totalorder %s15, 0
      %p54 = por %p52, %p53
      %s55 = ssub.s32 %s17, %s24
      %p56 = scmp.eq.s32.totalorder %s55, 0
      %s58 = sadd.s32 %s57, 1
      %s59 = scalar_select %p56, %s57, %s58
      %p62 = pneg %p56
      %p63 = scmp.eq.s32.totalorder %s9, 3
      %p64 = por %p62, %p63
      %p65 = scmp.ne.s32.totalorder %s57, %s60
      %p66 = scmp.eq.s32.totalorder %s9, 0
      %p67 = por %p65, %p66
      %p68 = scmp.ne.s32.totalorder %s57, %s60
      %p69 = scmp.eq.s32.totalorder %s14, 3
      %p70 = por %p68, %p69
      %p71 = scmp.ne.s32.totalorder %s60, %s61
      %p72 = scmp.eq.s32.totalorder %s14, 0
      %p73 = por %p71, %p72
      %p74 = scmp.ne.s32.totalorder %s60, %s61
      %p75 = scmp.eq.s32.totalorder %s15, 3
      %p76 = por %p74, %p75
      %p78 = scmp.ne.s32.totalorder %s61, %s77
      %p79 = scmp.eq.s32.totalorder %s15, 0
      %p80 = por %p78, %p79
      %s81 = ssub.s32 %s17, %s24
      %p82 = scmp.eq.s32.totalorder %s81, 0
      %s84 = sadd.s32 %s83, 1
      %s85 = scalar_select %p82, %s83, %s84
      %p88 = pneg %p82
      %p89 = scmp.eq.s32.totalorder %s9, 3
      %p90 = por %p88, %p89
      %p91 = scmp.ne.s32.totalorder %s83, %s86
      %p92 = scmp.eq.s32.totalorder %s9, 0
      %p93 = por %p91, %p92
      %p94 = scmp.ne.s32.totalorder %s83, %s86
      %p95 = scmp.eq.s32.totalorder %s14, 3
      %p96 = por %p94, %p95
      %p97 = scmp.ne.s32.totalorder %s86, %s87
      %p98 = scmp.eq.s32.totalorder %s14, 0
      %p99 = por %p97, %p98
      %p100 = scmp.ne.s32.totalorder %s86, %s87
      %p101 = scmp.eq.s32.totalorder %s15, 3
      %p102 = por %p100, %p101
      %p104 = scmp.ne.s32.totalorder %s87, %s103
      %p105 = scmp.eq.s32.totalorder %s15, 0
      %p106 = por %p104, %p105
      %s107 = ssub.s32 %s16, %s28
      %p108 = scmp.eq.s32.totalorder %s107, 0
      %s110 = sadd.s32 %s109, 1
      %s111 = scalar_select %p108, %s109, %s110
      %p114 = pneg %p108
      %p115 = scmp.eq.s32.totalorder %s9, 3
      %p116 = por %p114, %p115
      %p117 = scmp.ne.s32.totalorder %s109, %s112
      %p118 = scmp.eq.s32.totalorder %s9, 0
      %p119 = por %p117, %p118
      %p120 = scmp.ne.s32.totalorder %s109, %s112
      %p121 = scmp.eq.s32.totalorder %s14, 3
      %p122 = por %p120, %p121
      %p123 = scmp.ne.s32.totalorder %s112, %s113
      %p124 = scmp.eq.s32.totalorder %s14, 0
      %p125 = por %p123, %p124
      %p126 = scmp.ne.s32.totalorder %s112, %s113
      %p127 = scmp.eq.s32.totalorder %s15, 3
      %p128 = por %p126, %p127
      %p130 = scmp.ne.s32.totalorder %s113, %s129
      %p131 = scmp.eq.s32.totalorder %s15, 0
      %p132 = por %p130, %p131
      %p133 = scmp.le.s32.totalorder 1, %s9
      %p134 = scmp.lt.s32.totalorder %s9, 5
      %p135 = pnand %p133, %p134
      %p136 = pneg %p135
      // Predicated region
      $region9: #{egtf_forward.8} parent=5 // pred_check
        _
      $region10: #{egtf_forward.8} parent=5 // pred_check_branch
        %138 = sbr.rel (%p135) target = $region12
      $region11: #{egtf_forward.8} parent=5 // pred_region
        %s139 = ssub.s32 %s9, 1
      $region12: #{egtf_forward.8} parent=5 // pred_fallthru
        _
      %p140 = scmp.lt.s32.totalorder %s9, 4
      // Predicated region
      $region13: #{egtf_forward.8} parent=5 // pred_check
        %p141 = pneg %p140
      $region14: #{egtf_forward.8} parent=5 // pred_check_branch
        %143 = sbr.rel (%p141) target = $region16
      $region15: #{egtf_forward.8} parent=5 // pred_region
        // Predicated region
        $region17: #{egtf_forward.8} parent=15 // pred_check
          %p144 = pneg %p41
        $region18: #{egtf_forward.8} parent=15 // pred_check_branch
          %146 = sbr.rel (%p144) target = $region20
        $region19: #{egtf_forward.8} parent=15 // pred_region
          %s147 = sand.u32 %s31, 1
          %s148 = sand.u32 %s31, 1
          %s149 = smul.addr %s148, 32
          %s150 = scalar_lea.vmem [#allocation5], %s149
          %s151 = smul.addr %s16, 8
          %s152 = scalar_lea.vmem %s0, %s151
          // Predicated region
          $region21: #{egtf_forward.8} parent=19 // pred_check
            _
          $region22: #{egtf_forward.8} parent=19 // pred_check_branch
            %154 = sbr.rel (0) target = $region24
          $region23: #{egtf_forward.8} parent=19 // pred_region
            // Predicated region
            $region25: #{egtf_forward.8} parent=23 // pred_check
              _
            $region26: #{egtf_forward.8} parent=23 // pred_check_branch
              %156 = sbr.rel (0) target = $region28
            $region27: #{egtf_forward.8} parent=23 // pred_region
              // Predicated region
              $region40: #{egtf_forward.8} parent=27 // pred_check
                _
              $region41: #{egtf_forward.8} parent=27 // pred_check_branch
                %177 = sbr.rel (0) target = $region43
              $region42: #{egtf_forward.8} parent=27 // pred_region
                loop: start=0, step=1, limit=1
                $region44: #{egtf_forward.8} parent=42 // loop_pre_header
                  _
                $region45: #{egtf_forward.8} parent=42 // loop_header
                  %s179 = sphi 0, %s183
                  %p180 = scmp.ge.s32.totalorder %s179, 1
                  %s184 = sphi %s152, %s152
                  %s185 = sphi %s150, %s150
                $region46: #{egtf_forward.8} parent=42 // loop_header_branch
                  %182 = sbr.rel (%p180) target = $region50
                $region47: #{egtf_forward.8} parent=42 // loop_body
                  %v186 = vld [vmem:[%s184] sm:$0xff]
                  %187 = vst [vmem:[%s185] sm:$0xff] %v186
                  %v188 = vld [vmem:[%s184 + $0x10] sm:$0xff]
                  %189 = vst [vmem:[%s185 + $0x8] sm:$0xff] %v188
                  %v190 = vld [vmem:[%s184 + $0x20] sm:$0xff]
                  %191 = vst [vmem:[%s185 + $0x10] sm:$0xff] %v190
                  %v192 = vld [vmem:[%s184 + $0x30] sm:$0xff]
                  %193 = vst [vmem:[%s185 + $0x18] sm:$0xff] %v192
                $region48: #{egtf_forward.8} parent=42 // loop_footer
                  %s183 = sadd.s32 1, %s179
                $region49: #{egtf_forward.8} parent=42 // loop_footer_branch
                  %178 = sbr.rel target = $region45
                $region50: #{egtf_forward.8} parent=42 // loop_exit
                  _
              $region43: #{egtf_forward.8} parent=27 // pred_fallthru
                _
              // Predicated region
              $region51: #{egtf_forward.8} parent=27 // pred_check
                _
              $region52: #{egtf_forward.8} parent=27 // pred_check_branch
                %195 = sbr.rel target = $region54
              $region53: #{egtf_forward.8} parent=27 // pred_region
                _
              $region54: #{egtf_forward.8} parent=27 // pred_fallthru
                _
            $region28: #{egtf_forward.8} parent=23 // pred_fallthru
              _
            // Predicated region
            $region29: #{egtf_forward.8} parent=23 // pred_check
              _
            $region30: #{egtf_forward.8} parent=23 // pred_check_branch
              %158 = sbr.rel target = $region32
            $region31: #{egtf_forward.8} parent=23 // pred_region
              loop: start=0, step=1, limit=1
              $region33: #{egtf_forward.8} parent=31 // loop_pre_header
                _
              $region34: #{egtf_forward.8} parent=31 // loop_header
                %s161 = sphi 0, %s165
                %p162 = scmp.ge.s32.totalorder %s161, 1
                %s166 = sphi %s152, %s152
                %s167 = sphi %s150, %s150
              $region35: #{egtf_forward.8} parent=31 // loop_header_branch
                %164 = sbr.rel (%p162) target = $region39
              $region36: #{egtf_forward.8} parent=31 // loop_body
                %v168 = vld [vmem:[%s166] sm:$0xff]
                %169 = vst [vmem:[%s167] sm:$0xff] %v168
                %v170 = vld [vmem:[%s166 + $0x10] sm:$0xff]
                %171 = vst [vmem:[%s167 + $0x8] sm:$0xff] %v170
                %v172 = vld [vmem:[%s166 + $0x20] sm:$0xff]
                %173 = vst [vmem:[%s167 + $0x10] sm:$0xff] %v172
                %v174 = vld [vmem:[%s166 + $0x30] sm:$0xff]
                %175 = vst [vmem:[%s167 + $0x18] sm:$0xff] %v174
              $region37: #{egtf_forward.8} parent=31 // loop_footer
                %s165 = sadd.s32 1, %s161
              $region38: #{egtf_forward.8} parent=31 // loop_footer_branch
                %160 = sbr.rel target = $region34
              $region39: #{egtf_forward.8} parent=31 // loop_exit
                _
            $region32: #{egtf_forward.8} parent=23 // pred_fallthru
              _
          $region24: #{egtf_forward.8} parent=19 // pred_fallthru
            _
          %196 = vnop
        $region20: #{egtf_forward.8} parent=15 // pred_fallthru
          _
        // Predicated region
        $region55: #{egtf_forward.8} parent=15 // pred_check
          %p197 = pneg %p67
        $region56: #{egtf_forward.8} parent=15 // pred_check_branch
          %199 = sbr.rel (%p197) target = $region58
        $region57: #{egtf_forward.8} parent=15 // pred_region
          %s200 = sand.u32 %s57, 1
          %s201 = sand.u32 %s57, 1
          %s202 = smul.addr %s201, 32
          %s203 = scalar_lea.vmem [#allocation6], %s202
          %s204 = smul.addr %s17, 8
          %s205 = scalar_lea.vmem %s1, %s204
          // Predicated region
          $region59: #{egtf_forward.8} parent=57 // pred_check
            _
          $region60: #{egtf_forward.8} parent=57 // pred_check_branch
            %207 = sbr.rel (0) target = $region62
          $region61: #{egtf_forward.8} parent=57 // pred_region
            // Predicated region
            $region63: #{egtf_forward.8} parent=61 // pred_check
              _
            $region64: #{egtf_forward.8} parent=61 // pred_check_branch
              %209 = sbr.rel (0) target = $region66
            $region65: #{egtf_forward.8} parent=61 // pred_region
              // Predicated region
              $region78: #{egtf_forward.8} parent=65 // pred_check
                _
              $region79: #{egtf_forward.8} parent=65 // pred_check_branch
                %230 = sbr.rel (0) target = $region81
              $region80: #{egtf_forward.8} parent=65 // pred_region
                loop: start=0, step=1, limit=1
                $region82: #{egtf_forward.8} parent=80 // loop_pre_header
                  _
                $region83: #{egtf_forward.8} parent=80 // loop_header
                  %s232 = sphi 0, %s236
                  %p233 = scmp.ge.s32.totalorder %s232, 1
                  %s237 = sphi %s205, %s205
                  %s238 = sphi %s203, %s203
                $region84: #{egtf_forward.8} parent=80 // loop_header_branch
                  %235 = sbr.rel (%p233) target = $region88
                $region85: #{egtf_forward.8} parent=80 // loop_body
                  %v239 = vld [vmem:[%s237] sm:$0xff]
                  %240 = vst [vmem:[%s238] sm:$0xff] %v239
                  %v241 = vld [vmem:[%s237 + $0x10] sm:$0xff]
                  %242 = vst [vmem:[%s238 + $0x8] sm:$0xff] %v241
                  %v243 = vld [vmem:[%s237 + $0x20] sm:$0xff]
                  %244 = vst [vmem:[%s238 + $0x10] sm:$0xff] %v243
                  %v245 = vld [vmem:[%s237 + $0x30] sm:$0xff]
                  %246 = vst [vmem:[%s238 + $0x18] sm:$0xff] %v245
                $region86: #{egtf_forward.8} parent=80 // loop_footer
                  %s236 = sadd.s32 1, %s232
                $region87: #{egtf_forward.8} parent=80 // loop_footer_branch
                  %231 = sbr.rel target = $region83
                $region88: #{egtf_forward.8} parent=80 // loop_exit
                  _
              $region81: #{egtf_forward.8} parent=65 // pred_fallthru
                _
              // Predicated region
              $region89: #{egtf_forward.8} parent=65 // pred_check
                _
              $region90: #{egtf_forward.8} parent=65 // pred_check_branch
                %248 = sbr.rel target = $region92
              $region91: #{egtf_forward.8} parent=65 // pred_region
                _
              $region92: #{egtf_forward.8} parent=65 // pred_fallthru
                _
            $region66: #{egtf_forward.8} parent=61 // pred_fallthru
              _
            // Predicated region
            $region67: #{egtf_forward.8} parent=61 // pred_check
              _
            $region68: #{egtf_forward.8} parent=61 // pred_check_branch
              %211 = sbr.rel target = $region70
            $region69: #{egtf_forward.8} parent=61 // pred_region
              loop: start=0, step=1, limit=1
              $region71: #{egtf_forward.8} parent=69 // loop_pre_header
                _
              $region72: #{egtf_forward.8} parent=69 // loop_header
                %s214 = sphi 0, %s218
                %p215 = scmp.ge.s32.totalorder %s214, 1
                %s219 = sphi %s205, %s205
                %s220 = sphi %s203, %s203
              $region73: #{egtf_forward.8} parent=69 // loop_header_branch
                %217 = sbr.rel (%p215) target = $region77
              $region74: #{egtf_forward.8} parent=69 // loop_body
                %v221 = vld [vmem:[%s219] sm:$0xff]
                %222 = vst [vmem:[%s220] sm:$0xff] %v221
                %v223 = vld [vmem:[%s219 + $0x10] sm:$0xff]
                %224 = vst [vmem:[%s220 + $0x8] sm:$0xff] %v223
                %v225 = vld [vmem:[%s219 + $0x20] sm:$0xff]
                %226 = vst [vmem:[%s220 + $0x10] sm:$0xff] %v225
                %v227 = vld [vmem:[%s219 + $0x30] sm:$0xff]
                %228 = vst [vmem:[%s220 + $0x18] sm:$0xff] %v227
              $region75: #{egtf_forward.8} parent=69 // loop_footer
                %s218 = sadd.s32 1, %s214
              $region76: #{egtf_forward.8} parent=69 // loop_footer_branch
                %213 = sbr.rel target = $region72
              $region77: #{egtf_forward.8} parent=69 // loop_exit
                _
            $region70: #{egtf_forward.8} parent=61 // pred_fallthru
              _
          $region62: #{egtf_forward.8} parent=57 // pred_fallthru
            _
          %249 = vnop
        $region58: #{egtf_forward.8} parent=15 // pred_fallthru
          _
        // Predicated region
        $region93: #{egtf_forward.8} parent=15 // pred_check
          %p250 = pneg %p93
        $region94: #{egtf_forward.8} parent=15 // pred_check_branch
          %252 = sbr.rel (%p250) target = $region96
        $region95: #{egtf_forward.8} parent=15 // pred_region
          %s253 = sand.u32 %s83, 1
          %s254 = sand.u32 %s83, 1
          %s255 = smul.addr %s254, 32
          %s256 = scalar_lea.vmem [#allocation7], %s255
          %s257 = smul.addr %s17, 8
          %s258 = scalar_lea.vmem %s2, %s257
          // Predicated region
          $region97: #{egtf_forward.8} parent=95 // pred_check
            _
          $region98: #{egtf_forward.8} parent=95 // pred_check_branch
            %260 = sbr.rel (0) target = $region100
          $region99: #{egtf_forward.8} parent=95 // pred_region
            // Predicated region
            $region101: #{egtf_forward.8} parent=99 // pred_check
              _
            $region102: #{egtf_forward.8} parent=99 // pred_check_branch
              %262 = sbr.rel (0) target = $region104
            $region103: #{egtf_forward.8} parent=99 // pred_region
              // Predicated region
              $region116: #{egtf_forward.8} parent=103 // pred_check
                _
              $region117: #{egtf_forward.8} parent=103 // pred_check_branch
                %283 = sbr.rel (0) target = $region119
              $region118: #{egtf_forward.8} parent=103 // pred_region
                loop: start=0, step=1, limit=1
                $region120: #{egtf_forward.8} parent=118 // loop_pre_header
                  _
                $region121: #{egtf_forward.8} parent=118 // loop_header
                  %s285 = sphi 0, %s289
                  %p286 = scmp.ge.s32.totalorder %s285, 1
                  %s290 = sphi %s258, %s258
                  %s291 = sphi %s256, %s256
                $region122: #{egtf_forward.8} parent=118 // loop_header_branch
                  %288 = sbr.rel (%p286) target = $region126
                $region123: #{egtf_forward.8} parent=118 // loop_body
                  %v292 = vld [vmem:[%s290] sm:$0xff]
                  %293 = vst [vmem:[%s291] sm:$0xff] %v292
                  %v294 = vld [vmem:[%s290 + $0x10] sm:$0xff]
                  %295 = vst [vmem:[%s291 + $0x8] sm:$0xff] %v294
                  %v296 = vld [vmem:[%s290 + $0x20] sm:$0xff]
                  %297 = vst [vmem:[%s291 + $0x10] sm:$0xff] %v296
                  %v298 = vld [vmem:[%s290 + $0x30] sm:$0xff]
                  %299 = vst [vmem:[%s291 + $0x18] sm:$0xff] %v298
                $region124: #{egtf_forward.8} parent=118 // loop_footer
                  %s289 = sadd.s32 1, %s285
                $region125: #{egtf_forward.8} parent=118 // loop_footer_branch
                  %284 = sbr.rel target = $region121
                $region126: #{egtf_forward.8} parent=118 // loop_exit
                  _
              $region119: #{egtf_forward.8} parent=103 // pred_fallthru
                _
              // Predicated region
              $region127: #{egtf_forward.8} parent=103 // pred_check
                _
              $region128: #{egtf_forward.8} parent=103 // pred_check_branch
                %301 = sbr.rel target = $region130
              $region129: #{egtf_forward.8} parent=103 // pred_region
                _
              $region130: #{egtf_forward.8} parent=103 // pred_fallthru
                _
            $region104: #{egtf_forward.8} parent=99 // pred_fallthru
              _
            // Predicated region
            $region105: #{egtf_forward.8} parent=99 // pred_check
              _
            $region106: #{egtf_forward.8} parent=99 // pred_check_branch
              %264 = sbr.rel target = $region108
            $region107: #{egtf_forward.8} parent=99 // pred_region
              loop: start=0, step=1, limit=1
              $region109: #{egtf_forward.8} parent=107 // loop_pre_header
                _
              $region110: #{egtf_forward.8} parent=107 // loop_header
                %s267 = sphi 0, %s271
                %p268 = scmp.ge.s32.totalorder %s267, 1
                %s272 = sphi %s258, %s258
                %s273 = sphi %s256, %s256
              $region111: #{egtf_forward.8} parent=107 // loop_header_branch
                %270 = sbr.rel (%p268) target = $region115
              $region112: #{egtf_forward.8} parent=107 // loop_body
                %v274 = vld [vmem:[%s272] sm:$0xff]
                %275 = vst [vmem:[%s273] sm:$0xff] %v274
                %v276 = vld [vmem:[%s272 + $0x10] sm:$0xff]
                %277 = vst [vmem:[%s273 + $0x8] sm:$0xff] %v276
                %v278 = vld [vmem:[%s272 + $0x20] sm:$0xff]
                %279 = vst [vmem:[%s273 + $0x10] sm:$0xff] %v278
                %v280 = vld [vmem:[%s272 + $0x30] sm:$0xff]
                %281 = vst [vmem:[%s273 + $0x18] sm:$0xff] %v280
              $region113: #{egtf_forward.8} parent=107 // loop_footer
                %s271 = sadd.s32 1, %s267
              $region114: #{egtf_forward.8} parent=107 // loop_footer_branch
                %266 = sbr.rel target = $region110
              $region115: #{egtf_forward.8} parent=107 // loop_exit
                _
            $region108: #{egtf_forward.8} parent=99 // pred_fallthru
              _
          $region100: #{egtf_forward.8} parent=95 // pred_fallthru
            _
          %302 = vnop
        $region96: #{egtf_forward.8} parent=15 // pred_fallthru
          _
      $region16: #{egtf_forward.8} parent=5 // pred_fallthru
        _
      %p303 = scmp.le.s32.totalorder 1, %s9
      %p304 = scmp.lt.s32.totalorder %s9, 5
      %p305 = pnand %p303, %p304
      %p306 = pneg %p305
      // Predicated region
      $region131: #{egtf_forward.8} parent=5 // pred_check
        _
      $region132: #{egtf_forward.8} parent=5 // pred_check_branch
        %308 = sbr.rel (%p305) target = $region134
      $region133: #{egtf_forward.8} parent=5 // pred_region
        %s309 = ssub.s32 %s9, 1
        %s310 = sand.u32 %s34, 1
        %s311 = sand.u32 %s34, 1
        %s312 = smul.addr %s311, 32
        %s313 = scalar_lea.vmem [#allocation5], %s312
        // Predicated region
        $region135: #{egtf_forward.8} parent=133 // pred_check
          %p314 = pneg %p47
        $region136: #{egtf_forward.8} parent=133 // pred_check_branch
          %316 = sbr.rel (%p314) target = $region138
        $region137: #{egtf_forward.8} parent=133 // pred_region
          _
        $region138: #{egtf_forward.8} parent=133 // pred_fallthru
          _
        %s317 = sand.u32 %s60, 1
        %s318 = sand.u32 %s60, 1
        %s319 = smul.addr %s318, 32
        %s320 = scalar_lea.vmem [#allocation6], %s319
        // Predicated region
        $region139: #{egtf_forward.8} parent=133 // pred_check
          %p321 = pneg %p73
        $region140: #{egtf_forward.8} parent=133 // pred_check_branch
          %323 = sbr.rel (%p321) target = $region142
        $region141: #{egtf_forward.8} parent=133 // pred_region
          _
        $region142: #{egtf_forward.8} parent=133 // pred_fallthru
          _
        %s324 = sand.u32 %s86, 1
        %s325 = sand.u32 %s86, 1
        %s326 = smul.addr %s325, 32
        %s327 = scalar_lea.vmem [#allocation7], %s326
        // Predicated region
        $region143: #{egtf_forward.8} parent=133 // pred_check
          %p328 = pneg %p99
        $region144: #{egtf_forward.8} parent=133 // pred_check_branch
          %330 = sbr.rel (%p328) target = $region146
        $region145: #{egtf_forward.8} parent=133 // pred_region
          _
        $region146: #{egtf_forward.8} parent=133 // pred_fallthru
          _
        %s331 = sand.u32 %s34, 1
        %s332 = sand.u32 %s34, 1
        %s333 = smul.addr %s332, 32
        %s334 = scalar_lea.vmem [#allocation5], %s333
        %p335 = pneg %p47
        %p336 = pneg %p44
        %s337 = sand.u32 %s60, 1
        %s338 = sand.u32 %s60, 1
        %s339 = smul.addr %s338, 32
        %s340 = scalar_lea.vmem [#allocation6], %s339
        %p341 = pneg %p73
        %p342 = pneg %p70
        %s343 = sand.u32 %s86, 1
        %s344 = sand.u32 %s86, 1
        %s345 = smul.addr %s344, 32
        %s346 = scalar_lea.vmem [#allocation7], %s345
        %p347 = pneg %p99
        %p348 = pneg %p96
        %p349 = pneg %p125
        %p350 = pneg %p122
        %s351 = sand.u32 %s112, 1
        %s352 = sand.u32 %s112, 1
        %s353 = smul.addr %s352, 32
        %s354 = scalar_lea.vmem [#allocation8], %s353
        %p356 = scmp.eq.s32.totalorder %s19, 0
        // Predicated region
        $region147: #{egtf_forward.8} parent=133 // pred_check
          %p357 = pneg %p356
        $region148: #{egtf_forward.8} parent=133 // pred_check_branch
          %359 = sbr.rel (%p357) target = $region150
        $region149: #{egtf_forward.8} parent=133 // pred_region
          %vm360 = vcmask 7168
          %361 = vst.msk [vmem:[#allocation2] sm:$0xff] %vm360, -inf
          %362 = vst.msk [vmem:[#allocation2 + $0x8] sm:$0xff] %vm360, -inf
          %363 = vst.msk [vmem:[#allocation2 + $0x10] sm:$0xff] %vm360, -inf
          %364 = vst.msk [vmem:[#allocation2 + $0x18] sm:$0xff] %vm360, -inf
          %365 = vst.msk [vmem:[#allocation3] sm:$0xff] %vm360, 0.0
          %366 = vst.msk [vmem:[#allocation3 + $0x8] sm:$0xff] %vm360, 0.0
          %367 = vst.msk [vmem:[#allocation3 + $0x10] sm:$0xff] %vm360, 0.0
          %368 = vst.msk [vmem:[#allocation3 + $0x18] sm:$0xff] %vm360, 0.0
          %vm369 = vcmask 64512
          %370 = vst.msk [vmem:[#allocation4] sm:$0xff] %vm369, 0.0
          %371 = vst.msk [vmem:[#allocation4 + $0x8] sm:$0xff] %vm369, 0.0
          %372 = vst.msk [vmem:[#allocation4 + $0x10] sm:$0xff] %vm369, 0.0
          %373 = vst.msk [vmem:[#allocation4 + $0x18] sm:$0xff] %vm369, 0.0
        $region150: #{egtf_forward.8} parent=133 // pred_fallthru
          _
        %v374 = vld [vmem:[%s313] sm:$0xff]
        %v375 = vld [vmem:[%s313 + $0x8] sm:$0xff]
        %v376 = vld [vmem:[%s313 + $0x10] sm:$0xff]
        %v377 = vld [vmem:[%s313 + $0x18] sm:$0xff]
        %v378 = vpack.c.bf16 %v374, %v374
        %v379 = vpack.c.bf16 %v375, %v375
        %v380 = vpack.c.bf16 %v376, %v376
        %v381 = vpack.c.bf16 %v377, %v377
        %v382 = vld [vmem:[%s320] sm:$0xff]
        %v383 = vld [vmem:[%s320 + $0x8] sm:$0xff]
        %v384 = vld [vmem:[%s320 + $0x10] sm:$0xff]
        %v385 = vld [vmem:[%s320 + $0x18] sm:$0xff]
        %v386 = vpack.c.bf16 %v382, %v382
        %v387 = vpack.c.bf16 %v383, %v383
        %v388 = vpack.c.bf16 %v384, %v384
        %v389 = vpack.c.bf16 %v385, %v385
        %v390 = vld [vmem:[%s327] sm:$0xff]
        %v391 = vld [vmem:[%s327 + $0x8] sm:$0xff]
        %v392 = vld [vmem:[%s327 + $0x10] sm:$0xff]
        %v393 = vld [vmem:[%s327 + $0x18] sm:$0xff]
        %v394 = vpack.c.bf16 %v390, %v390
        %v395 = vpack.c.bf16 %v391, %v391
        %v396 = vpack.c.bf16 %v392, %v392
        %v397 = vpack.c.bf16 %v393, %v393
        %vm398 = vcmask 64512
        %v400 = vsel %vm398, %v378, 0
        %v403 = vsel %vm398, %v386, 0
        %405 = vmatprep.subr.bf16.mxu0 0
        %406 = vmatpush1.bf16.xpose.msra.mxu0 %v403
        %407 = vmatprep.subr.bf16.mxu0 0
        %408 = vmatpush1.bf16.xpose.msra.mxu0 0
        %409 = vmatprep.subr.bf16.mxu0 0
        %410 = vmatpush1.bf16.xpose.msra.mxu0 0
        %411 = vmatprep.subr.bf16.mxu0 0
        %412 = vmatpush1.bf16.xpose.msra.mxu0 0
        %413 = vmatprep.subr.bf16.mxu0 0
        %414 = vmatpush1.bf16.xpose.msra.mxu0 0
        %415 = vmatprep.subr.bf16.mxu0 0
        %416 = vmatpush1.bf16.xpose.msra.mxu0 0
        %417 = vmatprep.subr.bf16.mxu0 0
        %418 = vmatpush1.bf16.xpose.msra.mxu0 0
        %419 = vmatprep.subr.bf16.mxu0 0
        %420 = vmatpush1.bf16.xpose.msra.mxu0 0
        %421 = vmatprep.subr.bf16.mxu0 0
        %422 = vmatpush1.bf16.xpose.msra.mxu0 0
        %423 = vmatprep.subr.bf16.mxu0 0
        %424 = vmatpush1.bf16.xpose.msra.mxu0 0
        %425 = vmatprep.subr.bf16.mxu0 0
        %426 = vmatpush1.bf16.xpose.msra.mxu0 0
        %427 = vmatprep.subr.bf16.mxu0 0
        %428 = vmatpush1.bf16.xpose.msra.mxu0 0
        %429 = vmatprep.subr.bf16.mxu0 0
        %430 = vmatpush1.bf16.xpose.msra.mxu0 0
        %431 = vmatprep.subr.bf16.mxu0 0
        %432 = vmatpush1.bf16.xpose.msra.mxu0 0
        %433 = vmatprep.subr.bf16.mxu0 0
        %434 = vmatpush1.bf16.xpose.msra.mxu0 0
        %435 = vmatprep.subr.bf16.mxu0 0
        %436 = vmatpush1.bf16.xpose.msra.mxu0 0
        %437 = vmatprep.mubr.bf16.mxu0 0
        %438 = vmatmul.mubr.bf16.gmra.mrb[0].mxu0 %v400
        %v439 = vpop.f32.mrb[0].mxu0
        %v440 = vadd.f32 0.0, %v439
        %v441 = vpop.f32.mrb[0].mxu0
        %v442 = vpop.f32.mrb[0].mxu0
        %v443 = vpop.f32.mrb[0].mxu0
        %444 = vdwg.mxu0
        %v446 = vsel %vm398, %v379, 0
        %v449 = vsel %vm398, %v387, 0
        %451 = vmatprep.subr.bf16.mxu0 0
        %452 = vmatpush1.bf16.xpose.msra.mxu0 %v449
        %453 = vmatprep.subr.bf16.mxu0 0
        %454 = vmatpush1.bf16.xpose.msra.mxu0 0
        %455 = vmatprep.subr.bf16.mxu0 0
        %456 = vmatpush1.bf16.xpose.msra.mxu0 0
        %457 = vmatprep.subr.bf16.mxu0 0
        %458 = vmatpush1.bf16.xpose.msra.mxu0 0
        %459 = vmatprep.subr.bf16.mxu0 0
        %460 = vmatpush1.bf16.xpose.msra.mxu0 0
        %461 = vmatprep.subr.bf16.mxu0 0
        %462 = vmatpush1.bf16.xpose.msra.mxu0 0
        %463 = vmatprep.subr.bf16.mxu0 0
        %464 = vmatpush1.bf16.xpose.msra.mxu0 0
        %465 = vmatprep.subr.bf16.mxu0 0
        %466 = vmatpush1.bf16.xpose.msra.mxu0 0
        %467 = vmatprep.subr.bf16.mxu0 0
        %468 = vmatpush1.bf16.xpose.msra.mxu0 0
        %469 = vmatprep.subr.bf16.mxu0 0
        %470 = vmatpush1.bf16.xpose.msra.mxu0 0
        %471 = vmatprep.subr.bf16.mxu0 0
        %472 = vmatpush1.bf16.xpose.msra.mxu0 0
        %473 = vmatprep.subr.bf16.mxu0 0
        %474 = vmatpush1.bf16.xpose.msra.mxu0 0
        %475 = vmatprep.subr.bf16.mxu0 0
        %476 = vmatpush1.bf16.xpose.msra.mxu0 0
        %477 = vmatprep.subr.bf16.mxu0 0
        %478 = vmatpush1.bf16.xpose.msra.mxu0 0
        %479 = vmatprep.subr.bf16.mxu0 0
        %480 = vmatpush1.bf16.xpose.msra.mxu0 0
        %481 = vmatprep.subr.bf16.mxu0 0
        %482 = vmatpush1.bf16.xpose.msra.mxu0 0
        %483 = vmatprep.mubr.bf16.mxu0 0
        %484 = vmatmul.mubr.bf16.gmra.mrb[0].mxu0 %v446
        %v485 = vpop.f32.mrb[0].mxu0
        %v486 = vadd.f32 0.0, %v485
        %v487 = vpop.f32.mrb[0].mxu0
        %v488 = vpop.f32.mrb[0].mxu0
        %v489 = vpop.f32.mrb[0].mxu0
        %490 = vdwg.mxu0
        %v492 = vsel %vm398, %v380, 0
        %v495 = vsel %vm398, %v388, 0
        %497 = vmatprep.subr.bf16.mxu0 0
        %498 = vmatpush1.bf16.xpose.msra.mxu0 %v495
        %499 = vmatprep.subr.bf16.mxu0 0
        %500 = vmatpush1.bf16.xpose.msra.mxu0 0
        %501 = vmatprep.subr.bf16.mxu0 0
        %502 = vmatpush1.bf16.xpose.msra.mxu0 0
        %503 = vmatprep.subr.bf16.mxu0 0
        %504 = vmatpush1.bf16.xpose.msra.mxu0 0
        %505 = vmatprep.subr.bf16.mxu0 0
        %506 = vmatpush1.bf16.xpose.msra.mxu0 0
        %507 = vmatprep.subr.bf16.mxu0 0
        %508 = vmatpush1.bf16.xpose.msra.mxu0 0
        %509 = vmatprep.subr.bf16.mxu0 0
        %510 = vmatpush1.bf16.xpose.msra.mxu0 0
        %511 = vmatprep.subr.bf16.mxu0 0
        %512 = vmatpush1.bf16.xpose.msra.mxu0 0
        %513 = vmatprep.subr.bf16.mxu0 0
        %514 = vmatpush1.bf16.xpose.msra.mxu0 0
        %515 = vmatprep.subr.bf16.mxu0 0
        %516 = vmatpush1.bf16.xpose.msra.mxu0 0
        %517 = vmatprep.subr.bf16.mxu0 0
        %518 = vmatpush1.bf16.xpose.msra.mxu0 0
        %519 = vmatprep.subr.bf16.mxu0 0
        %520 = vmatpush1.bf16.xpose.msra.mxu0 0
        %521 = vmatprep.subr.bf16.mxu0 0
        %522 = vmatpush1.bf16.xpose.msra.mxu0 0
        %523 = vmatprep.subr.bf16.mxu0 0
        %524 = vmatpush1.bf16.xpose.msra.mxu0 0
        %525 = vmatprep.subr.bf16.mxu0 0
        %526 = vmatpush1.bf16.xpose.msra.mxu0 0
        %527 = vmatprep.subr.bf16.mxu0 0
        %528 = vmatpush1.bf16.xpose.msra.mxu0 0
        %529 = vmatprep.mubr.bf16.mxu0 0
        %530 = vmatmul.mubr.bf16.gmra.mrb[0].mxu0 %v492
        %v531 = vpop.f32.mrb[0].mxu0
        %v532 = vadd.f32 0.0, %v531
        %v533 = vpop.f32.mrb[0].mxu0
        %v534 = vpop.f32.mrb[0].mxu0
        %v535 = vpop.f32.mrb[0].mxu0
        %536 = vdwg.mxu0
        %v538 = vsel %vm398, %v381, 0
        %v541 = vsel %vm398, %v389, 0
        %543 = vmatprep.subr.bf16.mxu0 0
        %544 = vmatpush1.bf16.xpose.msra.mxu0 %v541
        %545 = vmatprep.subr.bf16.mxu0 0
        %546 = vmatpush1.bf16.xpose.msra.mxu0 0
        %547 = vmatprep.subr.bf16.mxu0 0
        %548 = vmatpush1.bf16.xpose.msra.mxu0 0
        %549 = vmatprep.subr.bf16.mxu0 0
        %550 = vmatpush1.bf16.xpose.msra.mxu0 0
        %551 = vmatprep.subr.bf16.mxu0 0
        %552 = vmatpush1.bf16.xpose.msra.mxu0 0
        %553 = vmatprep.subr.bf16.mxu0 0
        %554 = vmatpush1.bf16.xpose.msra.mxu0 0
        %555 = vmatprep.subr.bf16.mxu0 0
        %556 = vmatpush1.bf16.xpose.msra.mxu0 0
        %557 = vmatprep.subr.bf16.mxu0 0
        %558 = vmatpush1.bf16.xpose.msra.mxu0 0
        %559 = vmatprep.subr.bf16.mxu0 0
        %560 = vmatpush1.bf16.xpose.msra.mxu0 0
        %561 = vmatprep.subr.bf16.mxu0 0
        %562 = vmatpush1.bf16.xpose.msra.mxu0 0
        %563 = vmatprep.subr.bf16.mxu0 0
        %564 = vmatpush1.bf16.xpose.msra.mxu0 0
        %565 = vmatprep.subr.bf16.mxu0 0
        %566 = vmatpush1.bf16.xpose.msra.mxu0 0
        %567 = vmatprep.subr.bf16.mxu0 0
        %568 = vmatpush1.bf16.xpose.msra.mxu0 0
        %569 = vmatprep.subr.bf16.mxu0 0
        %570 = vmatpush1.bf16.xpose.msra.mxu0 0
        %571 = vmatprep.subr.bf16.mxu0 0
        %572 = vmatpush1.bf16.xpose.msra.mxu0 0
        %573 = vmatprep.subr.bf16.mxu0 0
        %574 = vmatpush1.bf16.xpose.msra.mxu0 0
        %575 = vmatprep.mubr.bf16.mxu0 0
        %576 = vmatmul.mubr.bf16.gmra.mrb[0].mxu0 %v538
        %v577 = vpop.f32.mrb[0].mxu0
        %v578 = vadd.f32 0.0, %v577
        %v579 = vpop.f32.mrb[0].mxu0
        %v580 = vpop.f32.mrb[0].mxu0
        %v581 = vpop.f32.mrb[0].mxu0
        %582 = vdwg.mxu0
        %v583 = vmul.f32 %v440, 0.35355338
        %v584 = vmul.f32 %v486, 0.35355338
        %v585 = vmul.f32 %v532, 0.35355338
        %v586 = vmul.f32 %v578, 0.35355338
        %v587 = vld [vmem:[#allocation2] sm:$0xff]
        %v588 = vld [vmem:[#allocation2 + $0x8] sm:$0xff]
        %v589 = vld [vmem:[#allocation2 + $0x10] sm:$0xff]
        %v590 = vld [vmem:[#allocation2 + $0x18] sm:$0xff]
        %v591 = vsel %vm398, %v583, -inf
        %592 = vmax.xlane.f32.xlu0 %v591
        %v593 = vpop.xlane.xlu0 %592
        %v594 = vsel %vm398, %v584, -inf
        %595 = vmax.xlane.f32.xlu0 %v594
        %v596 = vpop.xlane.xlu0 %595
        %v597 = vsel %vm398, %v585, -inf
        %598 = vmax.xlane.f32.xlu0 %v597
        %v599 = vpop.xlane.xlu0 %598
        %v600 = vsel %vm398, %v586, -inf
        %601 = vmax.xlane.f32.xlu0 %v600
        %v602 = vpop.xlane.xlu0 %601
        %v603 = vmax.f32 %v587, %v593
        %v604 = vmax.f32 %v588, %v596
        %v605 = vmax.f32 %v589, %v599
        %v606 = vmax.f32 %v590, %v602
        %v607 = vsub.f32 %v587, %v603
        %v608 = vsub.f32 %v588, %v604
        %v609 = vsub.f32 %v589, %v605
        %v610 = vsub.f32 %v590, %v606
        %v611 = vmul.f32 %v607, 1.442695
        %v612 = vpow.pop %v611
        %v613 = vmul.f32 %v608, 1.442695
        %v614 = vpow.pop %v613
        %v615 = vmul.f32 %v609, 1.442695
        %v616 = vpow.pop %v615
        %v617 = vmul.f32 %v610, 1.442695
        %v618 = vpow.pop %v617
        %620 = vset.pattern.permute.xlu0 0
        %621 = vperm.xlu0 %620, %v603
        %v622 = vpop.permute.xlu0 %621
        %625 = vset.pattern.permute.xlu0 0
        %626 = vperm.xlu0 %625, %v604
        %v627 = vpop.permute.xlu0 %626
        %630 = vset.pattern.permute.xlu0 0
        %631 = vperm.xlu0 %630, %v605
        %v632 = vpop.permute.xlu0 %631
        %635 = vset.pattern.permute.xlu0 0
        %636 = vperm.xlu0 %635, %v606
        %v637 = vpop.permute.xlu0 %636
        %v639 = vsub.f32 %v583, %v622
        %v640 = vsub.f32 %v584, %v627
        %v641 = vsub.f32 %v585, %v632
        %v642 = vsub.f32 %v586, %v637
        %v643 = vmul.f32 %v639, 1.442695
        %v644 = vpow.pop %v643
        %v645 = vmul.f32 %v640, 1.442695
        %v646 = vpow.pop %v645
        %v647 = vmul.f32 %v641, 1.442695
        %v648 = vpow.pop %v647
        %v649 = vmul.f32 %v642, 1.442695
        %v650 = vpow.pop %v649
        %v651 = vld [vmem:[#allocation3] sm:$0xff]
        %v652 = vld [vmem:[#allocation3 + $0x8] sm:$0xff]
        %v653 = vld [vmem:[#allocation3 + $0x10] sm:$0xff]
        %v654 = vld [vmem:[#allocation3 + $0x18] sm:$0xff]
        %v655 = vmul.f32 %v612, %v651
        %v656 = vmul.f32 %v614, %v652
        %v657 = vmul.f32 %v616, %v653
        %v658 = vmul.f32 %v618, %v654
        %v659 = vsel %vm398, %v644, 0.0
        %660 = vadd.xlane.f32.xlu0 %v659
        %v661 = vpop.xlane.xlu0 %660
        %v662 = vsel %vm398, %v646, 0.0
        %663 = vadd.xlane.f32.xlu0 %v662
        %v664 = vpop.xlane.xlu0 %663
        %v665 = vsel %vm398, %v648, 0.0
        %666 = vadd.xlane.f32.xlu0 %v665
        %v667 = vpop.xlane.xlu0 %666
        %v668 = vsel %vm398, %v650, 0.0
        %669 = vadd.xlane.f32.xlu0 %v668
        %v670 = vpop.xlane.xlu0 %669
        %v671 = vadd.f32 %v655, %v661
        %v672 = vadd.f32 %v656, %v664
        %v673 = vadd.f32 %v657, %v667
        %v674 = vadd.f32 %v658, %v670
        %vm675 = vcmask 7168
        %676 = vst.msk [vmem:[#allocation3] sm:$0xff] %vm675, %v671
        %677 = vst.msk [vmem:[#allocation3 + $0x8] sm:$0xff] %vm675, %v672
        %678 = vst.msk [vmem:[#allocation3 + $0x10] sm:$0xff] %vm675, %v673
        %679 = vst.msk [vmem:[#allocation3 + $0x18] sm:$0xff] %vm675, %v674
        %v680 = vld [vmem:[#allocation4] sm:$0xff]
        %v681 = vld [vmem:[#allocation4 + $0x8] sm:$0xff]
        %v682 = vld [vmem:[#allocation4 + $0x10] sm:$0xff]
        %v683 = vld [vmem:[#allocation4 + $0x18] sm:$0xff]
        %685 = vset.pattern.permute.xlu0 0
        %686 = vperm.xlu0 %685, %v612
        %v687 = vpop.permute.xlu0 %686
        %690 = vset.pattern.permute.xlu0 0
        %691 = vperm.xlu0 %690, %v614
        %v692 = vpop.permute.xlu0 %691
        %695 = vset.pattern.permute.xlu0 0
        %696 = vperm.xlu0 %695, %v616
        %v697 = vpop.permute.xlu0 %696
        %700 = vset.pattern.permute.xlu0 0
        %701 = vperm.xlu0 %700, %v618
        %v702 = vpop.permute.xlu0 %701
        %v704 = vmul.f32 %v687, %v680
        %v705 = vmul.f32 %v692, %v681
        %v706 = vmul.f32 %v697, %v682
        %v707 = vmul.f32 %v702, %v683
        %v708 = vpack.c.bf16 %v644, %v644
        %v709 = vpack.c.bf16 %v646, %v646
        %v710 = vpack.c.bf16 %v648, %v648
        %v711 = vpack.c.bf16 %v650, %v650
        %v713 = vsel %vm398, %v708, 0
        %vm715 = vcmask 1043456
        %v717 = vsel %vm715, %v394, 0
        %719 = vmatprep.subr.bf16.mxu0 0
        %720 = vmatpush1.bf16.msra.mxu0 %v717
        %721 = vmatprep.subr.bf16.mxu0 0
        %722 = vmatpush1.bf16.msra.mxu0 0
        %723 = vmatprep.subr.bf16.mxu0 0
        %724 = vmatpush1.bf16.msra.mxu0 0
        %725 = vmatprep.subr.bf16.mxu0 0
        %726 = vmatpush1.bf16.msra.mxu0 0
        %727 = vmatprep.subr.bf16.mxu0 0
        %728 = vmatpush1.bf16.msra.mxu0 0
        %729 = vmatprep.subr.bf16.mxu0 0
        %730 = vmatpush1.bf16.msra.mxu0 0
        %731 = vmatprep.subr.bf16.mxu0 0
        %732 = vmatpush1.bf16.msra.mxu0 0
        %733 = vmatprep.subr.bf16.mxu0 0
        %734 = vmatpush1.bf16.msra.mxu0 0
        %735 = vmatprep.subr.bf16.mxu0 0
        %736 = vmatpush1.bf16.msra.mxu0 0
        %737 = vmatprep.subr.bf16.mxu0 0
        %738 = vmatpush1.bf16.msra.mxu0 0
        %739 = vmatprep.subr.bf16.mxu0 0
        %740 = vmatpush1.bf16.msra.mxu0 0
        %741 = vmatprep.subr.bf16.mxu0 0
        %742 = vmatpush1.bf16.msra.mxu0 0
        %743 = vmatprep.subr.bf16.mxu0 0
        %744 = vmatpush1.bf16.msra.mxu0 0
        %745 = vmatprep.subr.bf16.mxu0 0
        %746 = vmatpush1.bf16.msra.mxu0 0
        %747 = vmatprep.subr.bf16.mxu0 0
        %748 = vmatpush1.bf16.msra.mxu0 0
        %749 = vmatprep.subr.bf16.mxu0 0
        %750 = vmatpush1.bf16.msra.mxu0 0
        %751 = vmatprep.mubr.bf16.mxu0 0
        %752 = vmatmul.mubr.bf16.gmra.mrb[0].mxu0 %v713
        %v753 = vpop.f32.mrb[0].mxu0
        %v754 = vadd.f32 0.0, %v753
        %v755 = vpop.f32.mrb[0].mxu0
        %v756 = vpop.f32.mrb[0].mxu0
        %v757 = vpop.f32.mrb[0].mxu0
        %758 = vdwg.mxu0
        %v760 = vsel %vm398, %v709, 0
        %v763 = vsel %vm715, %v395, 0
        %765 = vmatprep.subr.bf16.mxu0 0
        %766 = vmatpush1.bf16.msra.mxu0 %v763
        %767 = vmatprep.subr.bf16.mxu0 0
        %768 = vmatpush1.bf16.msra.mxu0 0
        %769 = vmatprep.subr.bf16.mxu0 0
        %770 = vmatpush1.bf16.msra.mxu0 0
        %771 = vmatprep.subr.bf16.mxu0 0
        %772 = vmatpush1.bf16.msra.mxu0 0
        %773 = vmatprep.subr.bf16.mxu0 0
        %774 = vmatpush1.bf16.msra.mxu0 0
        %775 = vmatprep.subr.bf16.mxu0 0
        %776 = vmatpush1.bf16.msra.mxu0 0
        %777 = vmatprep.subr.bf16.mxu0 0
        %778 = vmatpush1.bf16.msra.mxu0 0
        %779 = vmatprep.subr.bf16.mxu0 0
        %780 = vmatpush1.bf16.msra.mxu0 0
        %781 = vmatprep.subr.bf16.mxu0 0
        %782 = vmatpush1.bf16.msra.mxu0 0
        %783 = vmatprep.subr.bf16.mxu0 0
        %784 = vmatpush1.bf16.msra.mxu0 0
        %785 = vmatprep.subr.bf16.mxu0 0
        %786 = vmatpush1.bf16.msra.mxu0 0
        %787 = vmatprep.subr.bf16.mxu0 0
        %788 = vmatpush1.bf16.msra.mxu0 0
        %789 = vmatprep.subr.bf16.mxu0 0
        %790 = vmatpush1.bf16.msra.mxu0 0
        %791 = vmatprep.subr.bf16.mxu0 0
        %792 = vmatpush1.bf16.msra.mxu0 0
        %793 = vmatprep.subr.bf16.mxu0 0
        %794 = vmatpush1.bf16.msra.mxu0 0
        %795 = vmatprep.subr.bf16.mxu0 0
        %796 = vmatpush1.bf16.msra.mxu0 0
        %797 = vmatprep.mubr.bf16.mxu0 0
        %798 = vmatmul.mubr.bf16.gmra.mrb[0].mxu0 %v760
        %v799 = vpop.f32.mrb[0].mxu0
        %v800 = vadd.f32 0.0, %v799
        %v801 = vpop.f32.mrb[0].mxu0
        %v802 = vpop.f32.mrb[0].mxu0
        %v803 = vpop.f32.mrb[0].mxu0
        %804 = vdwg.mxu0
        %v806 = vsel %vm398, %v710, 0
        %v809 = vsel %vm715, %v396, 0
        %811 = vmatprep.subr.bf16.mxu0 0
        %812 = vmatpush1.bf16.msra.mxu0 %v809
        %813 = vmatprep.subr.bf16.mxu0 0
        %814 = vmatpush1.bf16.msra.mxu0 0
        %815 = vmatprep.subr.bf16.mxu0 0
        %816 = vmatpush1.bf16.msra.mxu0 0
        %817 = vmatprep.subr.bf16.mxu0 0
        %818 = vmatpush1.bf16.msra.mxu0 0
        %819 = vmatprep.subr.bf16.mxu0 0
        %820 = vmatpush1.bf16.msra.mxu0 0
        %821 = vmatprep.subr.bf16.mxu0 0
        %822 = vmatpush1.bf16.msra.mxu0 0
        %823 = vmatprep.subr.bf16.mxu0 0
        %824 = vmatpush1.bf16.msra.mxu0 0
        %825 = vmatprep.subr.bf16.mxu0 0
        %826 = vmatpush1.bf16.msra.mxu0 0
        %827 = vmatprep.subr.bf16.mxu0 0
        %828 = vmatpush1.bf16.msra.mxu0 0
        %829 = vmatprep.subr.bf16.mxu0 0
        %830 = vmatpush1.bf16.msra.mxu0 0
        %831 = vmatprep.subr.bf16.mxu0 0
        %832 = vmatpush1.bf16.msra.mxu0 0
        %833 = vmatprep.subr.bf16.mxu0 0
        %834 = vmatpush1.bf16.msra.mxu0 0
        %835 = vmatprep.subr.bf16.mxu0 0
        %836 = vmatpush1.bf16.msra.mxu0 0
        %837 = vmatprep.subr.bf16.mxu0 0
        %838 = vmatpush1.bf16.msra.mxu0 0
        %839 = vmatprep.subr.bf16.mxu0 0
        %840 = vmatpush1.bf16.msra.mxu0 0
        %841 = vmatprep.subr.bf16.mxu0 0
        %842 = vmatpush1.bf16.msra.mxu0 0
        %843 = vmatprep.mubr.bf16.mxu0 0
        %844 = vmatmul.mubr.bf16.gmra.mrb[0].mxu0 %v806
        %v845 = vpop.f32.mrb[0].mxu0
        %v846 = vadd.f32 0.0, %v845
        %v847 = vpop.f32.mrb[0].mxu0
        %v848 = vpop.f32.mrb[0].mxu0
        %v849 = vpop.f32.mrb[0].mxu0
        %850 = vdwg.mxu0
        %v852 = vsel %vm398, %v711, 0
        %v855 = vsel %vm715, %v397, 0
        %857 = vmatprep.subr.bf16.mxu0 0
        %858 = vmatpush1.bf16.msra.mxu0 %v855
        %859 = vmatprep.subr.bf16.mxu0 0
        %860 = vmatpush1.bf16.msra.mxu0 0
        %861 = vmatprep.subr.bf16.mxu0 0
        %862 = vmatpush1.bf16.msra.mxu0 0
        %863 = vmatprep.subr.bf16.mxu0 0
        %864 = vmatpush1.bf16.msra.mxu0 0
        %865 = vmatprep.subr.bf16.mxu0 0
        %866 = vmatpush1.bf16.msra.mxu0 0
        %867 = vmatprep.subr.bf16.mxu0 0
        %868 = vmatpush1.bf16.msra.mxu0 0
        %869 = vmatprep.subr.bf16.mxu0 0
        %870 = vmatpush1.bf16.msra.mxu0 0
        %871 = vmatprep.subr.bf16.mxu0 0
        %872 = vmatpush1.bf16.msra.mxu0 0
        %873 = vmatprep.subr.bf16.mxu0 0
        %874 = vmatpush1.bf16.msra.mxu0 0
        %875 = vmatprep.subr.bf16.mxu0 0
        %876 = vmatpush1.bf16.msra.mxu0 0
        %877 = vmatprep.subr.bf16.mxu0 0
        %878 = vmatpush1.bf16.msra.mxu0 0
        %879 = vmatprep.subr.bf16.mxu0 0
        %880 = vmatpush1.bf16.msra.mxu0 0
        %881 = vmatprep.subr.bf16.mxu0 0
        %882 = vmatpush1.bf16.msra.mxu0 0
        %883 = vmatprep.subr.bf16.mxu0 0
        %884 = vmatpush1.bf16.msra.mxu0 0
        %885 = vmatprep.subr.bf16.mxu0 0
        %886 = vmatpush1.bf16.msra.mxu0 0
        %887 = vmatprep.subr.bf16.mxu0 0
        %888 = vmatpush1.bf16.msra.mxu0 0
        %889 = vmatprep.mubr.bf16.mxu0 0
        %890 = vmatmul.mubr.bf16.gmra.mrb[0].mxu0 %v852
        %v891 = vpop.f32.mrb[0].mxu0
        %v892 = vadd.f32 0.0, %v891
        %v893 = vpop.f32.mrb[0].mxu0
        %v894 = vpop.f32.mrb[0].mxu0
        %v895 = vpop.f32.mrb[0].mxu0
        %896 = vdwg.mxu0
        %v897 = vadd.f32 %v704, %v754
        %v898 = vadd.f32 %v705, %v800
        %v899 = vadd.f32 %v706, %v846
        %v900 = vadd.f32 %v707, %v892
        %901 = vst.msk [vmem:[#allocation4] sm:$0xff] %vm398, %v897
        %902 = vst.msk [vmem:[#allocation4 + $0x8] sm:$0xff] %vm398, %v898
        %903 = vst.msk [vmem:[#allocation4 + $0x10] sm:$0xff] %vm398, %v899
        %904 = vst.msk [vmem:[#allocation4 + $0x18] sm:$0xff] %vm398, %v900
        %905 = vst.msk [vmem:[#allocation2] sm:$0xff] %vm675, %v603
        %906 = vst.msk [vmem:[#allocation2 + $0x8] sm:$0xff] %vm675, %v604
        %907 = vst.msk [vmem:[#allocation2 + $0x10] sm:$0xff] %vm675, %v605
        %908 = vst.msk [vmem:[#allocation2 + $0x18] sm:$0xff] %vm675, %v606
        %p909 = scmp.eq.s32.totalorder %s19, 1
        // Predicated region
        $region151: #{egtf_forward.8} parent=133 // pred_check
          %p910 = pneg %p909
        $region152: #{egtf_forward.8} parent=133 // pred_check_branch
          %912 = sbr.rel (%p910) target = $region154
        $region153: #{egtf_forward.8} parent=133 // pred_region
          %v913 = vld [vmem:[#allocation4] sm:$0xff]
          %v914 = vld [vmem:[#allocation4 + $0x8] sm:$0xff]
          %v915 = vld [vmem:[#allocation4 + $0x10] sm:$0xff]
          %v916 = vld [vmem:[#allocation4 + $0x18] sm:$0xff]
          %v917 = vld [vmem:[#allocation3] sm:$0xff]
          %v918 = vld [vmem:[#allocation3 + $0x8] sm:$0xff]
          %v919 = vld [vmem:[#allocation3 + $0x10] sm:$0xff]
          %v920 = vld [vmem:[#allocation3 + $0x18] sm:$0xff]
          %922 = vset.pattern.permute.xlu0 0
          %923 = vperm.xlu0 %922, %v917
          %v924 = vpop.permute.xlu0 %923
          %927 = vset.pattern.permute.xlu0 0
          %928 = vperm.xlu0 %927, %v918
          %v929 = vpop.permute.xlu0 %928
          %932 = vset.pattern.permute.xlu0 0
          %933 = vperm.xlu0 %932, %v919
          %v934 = vpop.permute.xlu0 %933
          %937 = vset.pattern.permute.xlu0 0
          %938 = vperm.xlu0 %937, %v920
          %v939 = vpop.permute.xlu0 %938
          %v941 = vrcp.pop %v924
          %v942 = vmul.f32 %v913, %v941
          %v943 = vrcp.pop %v929
          %v944 = vmul.f32 %v914, %v943
          %v945 = vrcp.pop %v934
          %v946 = vmul.f32 %v915, %v945
          %v947 = vrcp.pop %v939
          %v948 = vmul.f32 %v916, %v947
          %949 = vst.msk [vmem:[%s354] sm:$0xff] %vm398, %v942
          %950 = vst.msk [vmem:[%s354 + $0x8] sm:$0xff] %vm398, %v944
          %951 = vst.msk [vmem:[%s354 + $0x10] sm:$0xff] %vm398, %v946
          %952 = vst.msk [vmem:[%s354 + $0x18] sm:$0xff] %vm398, %v948
        $region154: #{egtf_forward.8} parent=133 // pred_fallthru
          _
        %s953 = sand.u32 %s112, 1
        %s954 = sand.u32 %s112, 1
        %s955 = smul.addr %s954, 32
        %s956 = scalar_lea.vmem [#allocation8], %s955
        // Predicated region
        $region155: #{egtf_forward.8} parent=133 // pred_check
          %p957 = pneg %p122
        $region156: #{egtf_forward.8} parent=133 // pred_check_branch
          %959 = sbr.rel (%p957) target = $region158
        $region157: #{egtf_forward.8} parent=133 // pred_region
          %s960 = smul.addr %s18, 8
          %s961 = scalar_lea.vmem %s3, %s960
          // Predicated region
          $region159: #{egtf_forward.8} parent=157 // pred_check
            _
          $region160: #{egtf_forward.8} parent=157 // pred_check_branch
            %963 = sbr.rel (0) target = $region162
          $region161: #{egtf_forward.8} parent=157 // pred_region
            // Predicated region
            $region163: #{egtf_forward.8} parent=161 // pred_check
              _
            $region164: #{egtf_forward.8} parent=161 // pred_check_branch
              %965 = sbr.rel (0) target = $region166
            $region165: #{egtf_forward.8} parent=161 // pred_region
              // Predicated region
              $region178: #{egtf_forward.8} parent=165 // pred_check
                _
              $region179: #{egtf_forward.8} parent=165 // pred_check_branch
                %986 = sbr.rel (0) target = $region181
              $region180: #{egtf_forward.8} parent=165 // pred_region
                loop: start=0, step=1, limit=1
                $region182: #{egtf_forward.8} parent=180 // loop_pre_header
                  _
                $region183: #{egtf_forward.8} parent=180 // loop_header
                  %s988 = sphi 0, %s992
                  %p989 = scmp.ge.s32.totalorder %s988, 1
                  %s993 = sphi %s956, %s956
                  %s994 = sphi %s961, %s961
                $region184: #{egtf_forward.8} parent=180 // loop_header_branch
                  %991 = sbr.rel (%p989) target = $region188
                $region185: #{egtf_forward.8} parent=180 // loop_body
                  %v995 = vld [vmem:[%s993] sm:$0xff]
                  %996 = vst [vmem:[%s994] sm:$0xff] %v995
                  %v997 = vld [vmem:[%s993 + $0x8] sm:$0xff]
                  %998 = vst [vmem:[%s994 + $0x10] sm:$0xff] %v997
                  %v999 = vld [vmem:[%s993 + $0x10] sm:$0xff]
                  %1000 = vst [vmem:[%s994 + $0x20] sm:$0xff] %v999
                  %v1001 = vld [vmem:[%s993 + $0x18] sm:$0xff]
                  %1002 = vst [vmem:[%s994 + $0x30] sm:$0xff] %v1001
                $region186: #{egtf_forward.8} parent=180 // loop_footer
                  %s992 = sadd.s32 1, %s988
                $region187: #{egtf_forward.8} parent=180 // loop_footer_branch
                  %987 = sbr.rel target = $region183
                $region188: #{egtf_forward.8} parent=180 // loop_exit
                  _
              $region181: #{egtf_forward.8} parent=165 // pred_fallthru
                _
              // Predicated region
              $region189: #{egtf_forward.8} parent=165 // pred_check
                _
              $region190: #{egtf_forward.8} parent=165 // pred_check_branch
                %1004 = sbr.rel target = $region192
              $region191: #{egtf_forward.8} parent=165 // pred_region
                _
              $region192: #{egtf_forward.8} parent=165 // pred_fallthru
                _
            $region166: #{egtf_forward.8} parent=161 // pred_fallthru
              _
            // Predicated region
            $region167: #{egtf_forward.8} parent=161 // pred_check
              _
            $region168: #{egtf_forward.8} parent=161 // pred_check_branch
              %967 = sbr.rel target = $region170
            $region169: #{egtf_forward.8} parent=161 // pred_region
              loop: start=0, step=1, limit=1
              $region171: #{egtf_forward.8} parent=169 // loop_pre_header
                _
              $region172: #{egtf_forward.8} parent=169 // loop_header
                %s970 = sphi 0, %s974
                %p971 = scmp.ge.s32.totalorder %s970, 1
                %s975 = sphi %s956, %s956
                %s976 = sphi %s961, %s961
              $region173: #{egtf_forward.8} parent=169 // loop_header_branch
                %973 = sbr.rel (%p971) target = $region177
              $region174: #{egtf_forward.8} parent=169 // loop_body
                %v977 = vld [vmem:[%s975] sm:$0xff]
                %978 = vst [vmem:[%s976] sm:$0xff] %v977
                %v979 = vld [vmem:[%s975 + $0x8] sm:$0xff]
                %980 = vst [vmem:[%s976 + $0x10] sm:$0xff] %v979
                %v981 = vld [vmem:[%s975 + $0x10] sm:$0xff]
                %982 = vst [vmem:[%s976 + $0x20] sm:$0xff] %v981
                %v983 = vld [vmem:[%s975 + $0x18] sm:$0xff]
                %984 = vst [vmem:[%s976 + $0x30] sm:$0xff] %v983
              $region175: #{egtf_forward.8} parent=169 // loop_footer
                %s974 = sadd.s32 1, %s970
              $region176: #{egtf_forward.8} parent=169 // loop_footer_branch
                %969 = sbr.rel target = $region172
              $region177: #{egtf_forward.8} parent=169 // loop_exit
                _
            $region170: #{egtf_forward.8} parent=161 // pred_fallthru
              _
          $region162: #{egtf_forward.8} parent=157 // pred_fallthru
            _
          %1005 = vnop
        $region158: #{egtf_forward.8} parent=133 // pred_fallthru
          _
      $region134: #{egtf_forward.8} parent=5 // pred_fallthru
        _
      %p1006 = scmp.le.s32.totalorder 2, %s9
      // Predicated region
      $region193: #{egtf_forward.8} parent=5 // pred_check
        %p1007 = pneg %p1006
      $region194: #{egtf_forward.8} parent=5 // pred_check_branch
        %1009 = sbr.rel (%p1007) target = $region196
      $region195: #{egtf_forward.8} parent=5 // pred_region
        %s1010 = ssub.s32 %s9, 2
        // Predicated region
        $region197: #{egtf_forward.8} parent=195 // pred_check
          %p1011 = pneg %p128
        $region198: #{egtf_forward.8} parent=195 // pred_check_branch
          %1013 = sbr.rel (%p1011) target = $region200
        $region199: #{egtf_forward.8} parent=195 // pred_region
          %s1014 = sand.u32 %s113, 1
          %s1015 = sand.u32 %s113, 1
          %s1016 = smul.addr %s1015, 32
          %s1017 = scalar_lea.vmem [#allocation8], %s1016
        $region200: #{egtf_forward.8} parent=195 // pred_fallthru
          _
      $region196: #{egtf_forward.8} parent=5 // pred_fallthru
        _
    $region6: #{egtf_forward.8} parent=1 // loop_footer
      %s13 = sadd.s32 1, %s9
    $region7: #{egtf_forward.8} parent=1 // loop_footer_branch
      %8 = sbr.rel target = $region3
    $region8: #{egtf_forward.8} parent=1 // loop_exit
      _

// kernel: egtf_forward.9
$region0: #{egtf_forward.9}
  #allocation0 [shape = 'u32[]', space=smem, size = 0x4, offset = 0x4, fixed_abs, tag = 'smem constant byte address 0x4 - core index']
  #allocation1 [shape = 'u32[144,128]{1,0:T(1,128)}', space=vmem, size = 0x12000, scoped, tag = 'internal scratch']
  %s0 = inlined_call_operand.vmem [shape: f32[16,32], index: 0, kind: input, shape index: {}]
  %s1 = inlined_call_operand.vmem [shape: f32[16,32], index: 1, kind: input, shape index: {}]
  %s2 = inlined_call_operand.vmem [shape: f32[32,32], index: 2, kind: input, shape index: {}]
  %s3 = inlined_call_operand.vmem [shape: f32[1,32], index: 3, kind: input, shape index: {}]
  %s4 = inlined_call_operand.vmem [shape: f32[1,32], index: 4, kind: input, shape index: {}]
  %s5 = inlined_call_operand.vmem [shape: f32[1,32], index: 5, kind: input, shape index: {}]
  %s6 = inlined_call_operand.vmem [shape: f32[32,64], index: 6, kind: input, shape index: {}]
  %s7 = inlined_call_operand.vmem [shape: f32[1,64], index: 7, kind: input, shape index: {}]
  %s8 = inlined_call_operand.vmem [shape: f32[64,32], index: 8, kind: input, shape index: {}]
  %s9 = inlined_call_operand.vmem [shape: f32[1,32], index: 9, kind: input, shape index: {}]
  %s10 = inlined_call_operand.vmem [shape: f32[1,32], index: 10, kind: input, shape index: {}]
  %s11 = inlined_call_operand.vmem [shape: f32[1,32], index: 11, kind: input, shape index: {}]
  %s12 = inlined_call_operand.hbm [shape: f32[16,32], index: 12, kind: output, shape index: {}]
  %s13 = sld [smem:[#allocation0]]
  $region81: #{egtf_forward.9} parent=0
    _
  %s15 = ssub.s32 1, %s13
  %s16 = scalar_select 0, %s15, %s13
  $region1: #{egtf_forward.9} parent=0
    #allocation2 [shape = 'u8[8192]{0}', space=vmem, size = 0x2000, scoped, tag = 'output window, operand 0']
    #allocation3 [shape = 's32[2]{0}', space=sflag, size = 0x8, scoped, tag = 'scoped memory for egtf_forward.9']
    %17 = vsyncpa [#allocation3], 0
    %s18 = scalar_lea.sflag [#allocation3], 1
    %19 = vsyncpa %s18, 0
    loop: start=0, step=1, limit=4
    $region2: #{egtf_forward.9} parent=1 // loop_pre_header
      _
    $region3: #{egtf_forward.9} parent=1 // loop_header
      %s21 = sphi 0, %s25
      %p22 = scmp.ge.s32.totalorder %s21, 4
      %s31 = sphi 0, %s33
      %s34 = sphi 0, %s31
      %s35 = sphi 0, %s34
      %s51 = sphi 0, %s35
      %s57 = sphi 0, %s59
      %s60 = sphi 0, %s57
      %s61 = sphi 0, %s60
      %s77 = sphi 0, %s61
      %s81 = sphi 0, %s81
      %s83 = sphi 0, %s81
      %s84 = sphi 0, %s83
      %s98 = sphi 0, %s84
      %s102 = sphi 0, %s102
      %s104 = sphi 0, %s102
      %s105 = sphi 0, %s104
      %s119 = sphi 0, %s105
      %s123 = sphi 0, %s123
      %s125 = sphi 0, %s123
      %s126 = sphi 0, %s125
      %s140 = sphi 0, %s126
      %s144 = sphi 0, %s144
      %s146 = sphi 0, %s144
      %s147 = sphi 0, %s146
      %s161 = sphi 0, %s147
      %s165 = sphi 0, %s165
      %s167 = sphi 0, %s165
      %s168 = sphi 0, %s167
      %s182 = sphi 0, %s168
      %s186 = sphi 0, %s186
      %s188 = sphi 0, %s186
      %s189 = sphi 0, %s188
      %s203 = sphi 0, %s189
      %s207 = sphi 0, %s207
      %s209 = sphi 0, %s207
      %s210 = sphi 0, %s209
      %s224 = sphi 0, %s210
      %s228 = sphi 0, %s228
      %s230 = sphi 0, %s228
      %s231 = sphi 0, %s230
      %s245 = sphi 0, %s231
      %s249 = sphi 0, %s249
      %s251 = sphi 0, %s249
      %s252 = sphi 0, %s251
      %s266 = sphi 0, %s252
      %s270 = sphi 0, %s270
      %s272 = sphi 0, %s270
      %s273 = sphi 0, %s272
      %s287 = sphi 0, %s273
      %s293 = sphi 0, %s295
      %s296 = sphi 0, %s293
      %s297 = sphi 0, %s296
      %s313 = sphi 0, %s297
    $region4: #{egtf_forward.9} parent=1 // loop_header_branch
      %24 = sbr.rel (%p22) target = $region8
    $region5: #{egtf_forward.9} parent=1 // loop_body
      %s26 = ssub.s32 %s21, 1
      %s27 = ssub.s32 %s21, 2
      %s28 = sadd.s32 %s21, 1
      %s29 = ssub.s32 %s21, %s28
      %p30 = scmp.eq.s32.totalorder %s29, 0
      %s32 = sadd.s32 %s31, 1
      %s33 = scalar_select %p30, %s31, %s32
      %p36 = pneg %p30
      %p37 = scmp.eq.s32.totalorder %s21, 1
      %p38 = por %p36, %p37
      %p39 = scmp.ne.s32.totalorder %s31, %s34
      %p40 = scmp.eq.s32.totalorder %s21, 0
      %p41 = por %p39, %p40
      %p42 = scmp.ne.s32.totalorder %s31, %s34
      %p43 = scmp.eq.s32.totalorder %s26, 1
      %p44 = por %p42, %p43
      %p45 = scmp.ne.s32.totalorder %s34, %s35
      %p46 = scmp.eq.s32.totalorder %s26, 0
      %p47 = por %p45, %p46
      %p48 = scmp.ne.s32.totalorder %s34, %s35
      %p49 = scmp.eq.s32.totalorder %s27, 1
      %p50 = por %p48, %p49
      %p52 = scmp.ne.s32.totalorder %s35, %s51
      %p53 = scmp.eq.s32.totalorder %s27, 0
      %p54 = por %p52, %p53
      %s55 = ssub.s32 %s21, %s28
      %p56 = scmp.eq.s32.totalorder %s55, 0
      %s58 = sadd.s32 %s57, 1
      %s59 = scalar_select %p56, %s57, %s58
      %p62 = pneg %p56
      %p63 = scmp.eq.s32.totalorder %s21, 1
      %p64 = por %p62, %p63
      %p65 = scmp.ne.s32.totalorder %s57, %s60
      %p66 = scmp.eq.s32.totalorder %s21, 0
      %p67 = por %p65, %p66
      %p68 = scmp.ne.s32.totalorder %s57, %s60
      %p69 = scmp.eq.s32.totalorder %s26, 1
      %p70 = por %p68, %p69
      %p71 = scmp.ne.s32.totalorder %s60, %s61
      %p72 = scmp.eq.s32.totalorder %s26, 0
      %p73 = por %p71, %p72
      %p74 = scmp.ne.s32.totalorder %s60, %s61
      %p75 = scmp.eq.s32.totalorder %s27, 1
      %p76 = por %p74, %p75
      %p78 = scmp.ne.s32.totalorder %s61, %s77
      %p79 = scmp.eq.s32.totalorder %s27, 0
      %p80 = por %p78, %p79
      %s82 = sadd.s32 %s81, 1
      %p85 = scmp.eq.s32.totalorder %s21, 1
      %p86 = scmp.ne.s32.totalorder %s81, %s83
      %p87 = scmp.eq.s32.totalorder %s21, 0
      %p88 = por %p86, %p87
      %p89 = scmp.ne.s32.totalorder %s81, %s83
      %p90 = scmp.eq.s32.totalorder %s26, 1
      %p91 = por %p89, %p90
      %p92 = scmp.ne.s32.totalorder %s83, %s84
      %p93 = scmp.eq.s32.totalorder %s26, 0
      %p94 = por %p92, %p93
      %p95 = scmp.ne.s32.totalorder %s83, %s84
      %p96 = scmp.eq.s32.totalorder %s27, 1
      %p97 = por %p95, %p96
      %p99 = scmp.ne.s32.totalorder %s84, %s98
      %p100 = scmp.eq.s32.totalorder %s27, 0
      %p101 = por %p99, %p100
      %s103 = sadd.s32 %s102, 1
      %p106 = scmp.eq.s32.totalorder %s21, 1
      %p107 = scmp.ne.s32.totalorder %s102, %s104
      %p108 = scmp.eq.s32.totalorder %s21, 0
      %p109 = por %p107, %p108
      %p110 = scmp.ne.s32.totalorder %s102, %s104
      %p111 = scmp.eq.s32.totalorder %s26, 1
      %p112 = por %p110, %p111
      %p113 = scmp.ne.s32.totalorder %s104, %s105
      %p114 = scmp.eq.s32.totalorder %s26, 0
      %p115 = por %p113, %p114
      %p116 = scmp.ne.s32.totalorder %s104, %s105
      %p117 = scmp.eq.s32.totalorder %s27, 1
      %p118 = por %p116, %p117
      %p120 = scmp.ne.s32.totalorder %s105, %s119
      %p121 = scmp.eq.s32.totalorder %s27, 0
      %p122 = por %p120, %p121
      %s124 = sadd.s32 %s123, 1
      %p127 = scmp.eq.s32.totalorder %s21, 1
      %p128 = scmp.ne.s32.totalorder %s123, %s125
      %p129 = scmp.eq.s32.totalorder %s21, 0
      %p130 = por %p128, %p129
      %p131 = scmp.ne.s32.totalorder %s123, %s125
      %p132 = scmp.eq.s32.totalorder %s26, 1
      %p133 = por %p131, %p132
      %p134 = scmp.ne.s32.totalorder %s125, %s126
      %p135 = scmp.eq.s32.totalorder %s26, 0
      %p136 = por %p134, %p135
      %p137 = scmp.ne.s32.totalorder %s125, %s126
      %p138 = scmp.eq.s32.totalorder %s27, 1
      %p139 = por %p137, %p138
      %p141 = scmp.ne.s32.totalorder %s126, %s140
      %p142 = scmp.eq.s32.totalorder %s27, 0
      %p143 = por %p141, %p142
      %s145 = sadd.s32 %s144, 1
      %p148 = scmp.eq.s32.totalorder %s21, 1
      %p149 = scmp.ne.s32.totalorder %s144, %s146
      %p150 = scmp.eq.s32.totalorder %s21, 0
      %p151 = por %p149, %p150
      %p152 = scmp.ne.s32.totalorder %s144, %s146
      %p153 = scmp.eq.s32.totalorder %s26, 1
      %p154 = por %p152, %p153
      %p155 = scmp.ne.s32.totalorder %s146, %s147
      %p156 = scmp.eq.s32.totalorder %s26, 0
      %p157 = por %p155, %p156
      %p158 = scmp.ne.s32.totalorder %s146, %s147
      %p159 = scmp.eq.s32.totalorder %s27, 1
      %p160 = por %p158, %p159
      %p162 = scmp.ne.s32.totalorder %s147, %s161
      %p163 = scmp.eq.s32.totalorder %s27, 0
      %p164 = por %p162, %p163
      %s166 = sadd.s32 %s165, 1
      %p169 = scmp.eq.s32.totalorder %s21, 1
      %p170 = scmp.ne.s32.totalorder %s165, %s167
      %p171 = scmp.eq.s32.totalorder %s21, 0
      %p172 = por %p170, %p171
      %p173 = scmp.ne.s32.totalorder %s165, %s167
      %p174 = scmp.eq.s32.totalorder %s26, 1
      %p175 = por %p173, %p174
      %p176 = scmp.ne.s32.totalorder %s167, %s168
      %p177 = scmp.eq.s32.totalorder %s26, 0
      %p178 = por %p176, %p177
      %p179 = scmp.ne.s32.totalorder %s167, %s168
      %p180 = scmp.eq.s32.totalorder %s27, 1
      %p181 = por %p179, %p180
      %p183 = scmp.ne.s32.totalorder %s168, %s182
      %p184 = scmp.eq.s32.totalorder %s27, 0
      %p185 = por %p183, %p184
      %s187 = sadd.s32 %s186, 1
      %p190 = scmp.eq.s32.totalorder %s21, 1
      %p191 = scmp.ne.s32.totalorder %s186, %s188
      %p192 = scmp.eq.s32.totalorder %s21, 0
      %p193 = por %p191, %p192
      %p194 = scmp.ne.s32.totalorder %s186, %s188
      %p195 = scmp.eq.s32.totalorder %s26, 1
      %p196 = por %p194, %p195
      %p197 = scmp.ne.s32.totalorder %s188, %s189
      %p198 = scmp.eq.s32.totalorder %s26, 0
      %p199 = por %p197, %p198
      %p200 = scmp.ne.s32.totalorder %s188, %s189
      %p201 = scmp.eq.s32.totalorder %s27, 1
      %p202 = por %p200, %p201
      %p204 = scmp.ne.s32.totalorder %s189, %s203
      %p205 = scmp.eq.s32.totalorder %s27, 0
      %p206 = por %p204, %p205
      %s208 = sadd.s32 %s207, 1
      %p211 = scmp.eq.s32.totalorder %s21, 1
      %p212 = scmp.ne.s32.totalorder %s207, %s209
      %p213 = scmp.eq.s32.totalorder %s21, 0
      %p214 = por %p212, %p213
      %p215 = scmp.ne.s32.totalorder %s207, %s209
      %p216 = scmp.eq.s32.totalorder %s26, 1
      %p217 = por %p215, %p216
      %p218 = scmp.ne.s32.totalorder %s209, %s210
      %p219 = scmp.eq.s32.totalorder %s26, 0
      %p220 = por %p218, %p219
      %p221 = scmp.ne.s32.totalorder %s209, %s210
      %p222 = scmp.eq.s32.totalorder %s27, 1
      %p223 = por %p221, %p222
      %p225 = scmp.ne.s32.totalorder %s210, %s224
      %p226 = scmp.eq.s32.totalorder %s27, 0
      %p227 = por %p225, %p226
      %s229 = sadd.s32 %s228, 1
      %p232 = scmp.eq.s32.totalorder %s21, 1
      %p233 = scmp.ne.s32.totalorder %s228, %s230
      %p234 = scmp.eq.s32.totalorder %s21, 0
      %p235 = por %p233, %p234
      %p236 = scmp.ne.s32.totalorder %s228, %s230
      %p237 = scmp.eq.s32.totalorder %s26, 1
      %p238 = por %p236, %p237
      %p239 = scmp.ne.s32.totalorder %s230, %s231
      %p240 = scmp.eq.s32.totalorder %s26, 0
      %p241 = por %p239, %p240
      %p242 = scmp.ne.s32.totalorder %s230, %s231
      %p243 = scmp.eq.s32.totalorder %s27, 1
      %p244 = por %p242, %p243
      %p246 = scmp.ne.s32.totalorder %s231, %s245
      %p247 = scmp.eq.s32.totalorder %s27, 0
      %p248 = por %p246, %p247
      %s250 = sadd.s32 %s249, 1
      %p253 = scmp.eq.s32.totalorder %s21, 1
      %p254 = scmp.ne.s32.totalorder %s249, %s251
      %p255 = scmp.eq.s32.totalorder %s21, 0
      %p256 = por %p254, %p255
      %p257 = scmp.ne.s32.totalorder %s249, %s251
      %p258 = scmp.eq.s32.totalorder %s26, 1
      %p259 = por %p257, %p258
      %p260 = scmp.ne.s32.totalorder %s251, %s252
      %p261 = scmp.eq.s32.totalorder %s26, 0
      %p262 = por %p260, %p261
      %p263 = scmp.ne.s32.totalorder %s251, %s252
      %p264 = scmp.eq.s32.totalorder %s27, 1
      %p265 = por %p263, %p264
      %p267 = scmp.ne.s32.totalorder %s252, %s266
      %p268 = scmp.eq.s32.totalorder %s27, 0
      %p269 = por %p267, %p268
      %s271 = sadd.s32 %s270, 1
      %p274 = scmp.eq.s32.totalorder %s21, 1
      %p275 = scmp.ne.s32.totalorder %s270, %s272
      %p276 = scmp.eq.s32.totalorder %s21, 0
      %p277 = por %p275, %p276
      %p278 = scmp.ne.s32.totalorder %s270, %s272
      %p279 = scmp.eq.s32.totalorder %s26, 1
      %p280 = por %p278, %p279
      %p281 = scmp.ne.s32.totalorder %s272, %s273
      %p282 = scmp.eq.s32.totalorder %s26, 0
      %p283 = por %p281, %p282
      %p284 = scmp.ne.s32.totalorder %s272, %s273
      %p285 = scmp.eq.s32.totalorder %s27, 1
      %p286 = por %p284, %p285
      %p288 = scmp.ne.s32.totalorder %s273, %s287
      %p289 = scmp.eq.s32.totalorder %s27, 0
      %p290 = por %p288, %p289
      %s291 = ssub.s32 %s21, %s28
      %p292 = scmp.eq.s32.totalorder %s291, 0
      %s294 = sadd.s32 %s293, 1
      %s295 = scalar_select %p292, %s293, %s294
      %p298 = pneg %p292
      %p299 = scmp.eq.s32.totalorder %s21, 1
      %p300 = por %p298, %p299
      %p301 = scmp.ne.s32.totalorder %s293, %s296
      %p302 = scmp.eq.s32.totalorder %s21, 0
      %p303 = por %p301, %p302
      %p304 = scmp.ne.s32.totalorder %s293, %s296
      %p305 = scmp.eq.s32.totalorder %s26, 1
      %p306 = por %p304, %p305
      %p307 = scmp.ne.s32.totalorder %s296, %s297
      %p308 = scmp.eq.s32.totalorder %s26, 0
      %p309 = por %p307, %p308
      %p310 = scmp.ne.s32.totalorder %s296, %s297
      %p311 = scmp.eq.s32.totalorder %s27, 1
      %p312 = por %p310, %p311
      %p314 = scmp.ne.s32.totalorder %s297, %s313
      %p315 = scmp.eq.s32.totalorder %s27, 0
      %p316 = por %p314, %p315
      %p317 = scmp.le.s32.totalorder 1, %s21
      %p318 = scmp.lt.s32.totalorder %s21, 3
      %p319 = pnand %p317, %p318
      %p320 = pneg %p319
      // Predicated region
      $region9: #{egtf_forward.9} parent=5 // pred_check
        _
      $region10: #{egtf_forward.9} parent=5 // pred_check_branch
        %322 = sbr.rel (%p319) target = $region12
      $region11: #{egtf_forward.9} parent=5 // pred_region
        %s323 = ssub.s32 %s21, 1
        // Predicated region
        $region13: #{egtf_forward.9} parent=11 // pred_check
          %p324 = pneg %p94
        $region14: #{egtf_forward.9} parent=11 // pred_check_branch
          %326 = sbr.rel (%p324) target = $region16
        $region15: #{egtf_forward.9} parent=11 // pred_region
          _
        $region16: #{egtf_forward.9} parent=11 // pred_fallthru
          _
        // Predicated region
        $region17: #{egtf_forward.9} parent=11 // pred_check
          %p327 = pneg %p115
        $region18: #{egtf_forward.9} parent=11 // pred_check_branch
          %329 = sbr.rel (%p327) target = $region20
        $region19: #{egtf_forward.9} parent=11 // pred_region
          _
        $region20: #{egtf_forward.9} parent=11 // pred_fallthru
          _
        // Predicated region
        $region21: #{egtf_forward.9} parent=11 // pred_check
          %p330 = pneg %p136
        $region22: #{egtf_forward.9} parent=11 // pred_check_branch
          %332 = sbr.rel (%p330) target = $region24
        $region23: #{egtf_forward.9} parent=11 // pred_region
          _
        $region24: #{egtf_forward.9} parent=11 // pred_fallthru
          _
        // Predicated region
        $region25: #{egtf_forward.9} parent=11 // pred_check
          %p333 = pneg %p157
        $region26: #{egtf_forward.9} parent=11 // pred_check_branch
          %335 = sbr.rel (%p333) target = $region28
        $region27: #{egtf_forward.9} parent=11 // pred_region
          _
        $region28: #{egtf_forward.9} parent=11 // pred_fallthru
          _
        // Predicated region
        $region29: #{egtf_forward.9} parent=11 // pred_check
          %p336 = pneg %p178
        $region30: #{egtf_forward.9} parent=11 // pred_check_branch
          %338 = sbr.rel (%p336) target = $region32
        $region31: #{egtf_forward.9} parent=11 // pred_region
          _
        $region32: #{egtf_forward.9} parent=11 // pred_fallthru
          _
        // Predicated region
        $region33: #{egtf_forward.9} parent=11 // pred_check
          %p339 = pneg %p199
        $region34: #{egtf_forward.9} parent=11 // pred_check_branch
          %341 = sbr.rel (%p339) target = $region36
        $region35: #{egtf_forward.9} parent=11 // pred_region
          _
        $region36: #{egtf_forward.9} parent=11 // pred_fallthru
          _
        // Predicated region
        $region37: #{egtf_forward.9} parent=11 // pred_check
          %p342 = pneg %p220
        $region38: #{egtf_forward.9} parent=11 // pred_check_branch
          %344 = sbr.rel (%p342) target = $region40
        $region39: #{egtf_forward.9} parent=11 // pred_region
          _
        $region40: #{egtf_forward.9} parent=11 // pred_fallthru
          _
        // Predicated region
        $region41: #{egtf_forward.9} parent=11 // pred_check
          %p345 = pneg %p241
        $region42: #{egtf_forward.9} parent=11 // pred_check_branch
          %347 = sbr.rel (%p345) target = $region44
        $region43: #{egtf_forward.9} parent=11 // pred_region
          _
        $region44: #{egtf_forward.9} parent=11 // pred_fallthru
          _
        // Predicated region
        $region45: #{egtf_forward.9} parent=11 // pred_check
          %p348 = pneg %p262
        $region46: #{egtf_forward.9} parent=11 // pred_check_branch
          %350 = sbr.rel (%p348) target = $region48
        $region47: #{egtf_forward.9} parent=11 // pred_region
          _
        $region48: #{egtf_forward.9} parent=11 // pred_fallthru
          _
        // Predicated region
        $region49: #{egtf_forward.9} parent=11 // pred_check
          %p351 = pneg %p283
        $region50: #{egtf_forward.9} parent=11 // pred_check_branch
          %353 = sbr.rel (%p351) target = $region52
        $region51: #{egtf_forward.9} parent=11 // pred_region
          _
        $region52: #{egtf_forward.9} parent=11 // pred_fallthru
          _
      $region12: #{egtf_forward.9} parent=5 // pred_fallthru
        _
      %p354 = scmp.lt.s32.totalorder %s21, 2
      // Predicated region
      $region53: #{egtf_forward.9} parent=5 // pred_check
        %p355 = pneg %p354
      $region54: #{egtf_forward.9} parent=5 // pred_check_branch
        %357 = sbr.rel (%p355) target = $region56
      $region55: #{egtf_forward.9} parent=5 // pred_region
        // Predicated region
        $region57: #{egtf_forward.9} parent=55 // pred_check
          %p358 = pneg %p41
        $region58: #{egtf_forward.9} parent=55 // pred_check_branch
          %360 = sbr.rel (%p358) target = $region60
        $region59: #{egtf_forward.9} parent=55 // pred_region
          %p361 = scmp.lt.s32.totalorder %s21, 1
          %s362 = scalar_select %p361, %s21, 1
          %s363 = smul.addr %s362, 8
          %s364 = scalar_lea.vmem %s0, %s363
        $region60: #{egtf_forward.9} parent=55 // pred_fallthru
          _
        // Predicated region
        $region61: #{egtf_forward.9} parent=55 // pred_check
          %p365 = pneg %p67
        $region62: #{egtf_forward.9} parent=55 // pred_check_branch
          %367 = sbr.rel (%p365) target = $region64
        $region63: #{egtf_forward.9} parent=55 // pred_region
          %p368 = scmp.lt.s32.totalorder %s21, 1
          %s369 = scalar_select %p368, %s21, 1
          %s370 = smul.addr %s369, 8
          %s371 = scalar_lea.vmem %s1, %s370
        $region64: #{egtf_forward.9} parent=55 // pred_fallthru
          _
      $region56: #{egtf_forward.9} parent=5 // pred_fallthru
        _
      %p372 = scmp.le.s32.totalorder 1, %s21
      %p373 = scmp.lt.s32.totalorder %s21, 3
      %p374 = pnand %p372, %p373
      %p375 = pneg %p374
      // Predicated region
      $region65: #{egtf_forward.9} parent=5 // pred_check
        _
      $region66: #{egtf_forward.9} parent=5 // pred_check_branch
        %377 = sbr.rel (%p374) target = $region68
      $region67: #{egtf_forward.9} parent=5 // pred_region
        %s378 = ssub.s32 %s21, 1
        %p379 = scmp.lt.s32.totalorder %s26, 1
        %s380 = scalar_select %p379, %s26, 1
        %s381 = smul.addr %s380, 8
        %s382 = scalar_lea.vmem %s0, %s381
        %p383 = pneg %p47
        %p384 = pneg %p44
        %p385 = scmp.lt.s32.totalorder %s26, 1
        %s386 = scalar_select %p385, %s26, 1
        %s387 = smul.addr %s386, 8
        %s388 = scalar_lea.vmem %s1, %s387
        %p389 = pneg %p73
        %p390 = pneg %p70
        %p391 = pneg %p94
        %p392 = pneg %p91
        %p393 = pneg %p115
        %p394 = pneg %p112
        %p395 = pneg %p136
        %p396 = pneg %p133
        %p397 = pneg %p157
        %p398 = pneg %p154
        %p399 = pneg %p178
        %p400 = pneg %p175
        %p401 = pneg %p199
        %p402 = pneg %p196
        %p403 = pneg %p220
        %p404 = pneg %p217
        %p405 = pneg %p241
        %p406 = pneg %p238
        %p407 = pneg %p262
        %p408 = pneg %p259
        %p409 = pneg %p283
        %p410 = pneg %p280
        %p411 = pneg %p309
        %p412 = pneg %p306
        %s413 = sand.u32 %s296, 1
        %s414 = scalar_lea.sflag [#allocation3], %s413
        %s415 = sand.u32 %s296, 1
        %s416 = smul.addr %s415, 8
        %s417 = scalar_lea.vmem [#allocation2], %s416
        %p418 = scmp.lt.s32.totalorder %s26, 1
        %s419 = scalar_select %p418, %s26, 1
        %s420 = smul.addr %s419, 8
        %s421 = scalar_lea.vmem %s0, %s420
        %p422 = scmp.lt.s32.totalorder %s26, 1
        %s423 = scalar_select %p422, %s26, 1
        %s424 = smul.addr %s423, 8
        %s425 = scalar_lea.vmem %s1, %s424
        %v427 = vld [vmem:[%s421] sm:$0xff]
        %v428 = vld [vmem:[%s2] sm:$0xff]
        %v429 = vld [vmem:[%s2 + $0x8] sm:$0xff]
        %v430 = vld [vmem:[%s2 + $0x10] sm:$0xff]
        %v431 = vld [vmem:[%s2 + $0x18] sm:$0xff]
        %v432 = vpack.c.bf16 %v427, %v427
        %v433 = vpack.c.bf16 %v429, %v428
        %v434 = vpack.c.bf16 %v431, %v430
        %v435 = vld [vmem:[%s3] sm:$0x1]
        %v437 = vlaneseq
        %v438 = vshrl.u32 %v437, 7
        %v439 = vsub.s32 0, %v438
        %v440 = vrot.slane %v435, %v439
        %vm442 = vcmask 261120
        %v444 = vsel %vm442, %v432, 0
        %446 = vmatprep.subr.bf16.mxu0 0
        %447 = vmatpush1.bf16.msra.mxu0 %v433
        %448 = vmatprep.subr.bf16.mxu0 0
        %449 = vmatpush1.bf16.msra.mxu0 %v434
        %450 = vmatprep.subr.bf16.mxu0 0
        %451 = vmatpush1.bf16.msra.mxu0 0
        %452 = vmatprep.subr.bf16.mxu0 0
        %453 = vmatpush1.bf16.msra.mxu0 0
        %454 = vmatprep.subr.bf16.mxu0 0
        %455 = vmatpush1.bf16.msra.mxu0 0
        %456 = vmatprep.subr.bf16.mxu0 0
        %457 = vmatpush1.bf16.msra.mxu0 0
        %458 = vmatprep.subr.bf16.mxu0 0
        %459 = vmatpush1.bf16.msra.mxu0 0
        %460 = vmatprep.subr.bf16.mxu0 0
        %461 = vmatpush1.bf16.msra.mxu0 0
        %462 = vmatprep.subr.bf16.mxu0 0
        %463 = vmatpush1.bf16.msra.mxu0 0
        %464 = vmatprep.subr.bf16.mxu0 0
        %465 = vmatpush1.bf16.msra.mxu0 0
        %466 = vmatprep.subr.bf16.mxu0 0
        %467 = vmatpush1.bf16.msra.mxu0 0
        %468 = vmatprep.subr.bf16.mxu0 0
        %469 = vmatpush1.bf16.msra.mxu0 0
        %470 = vmatprep.subr.bf16.mxu0 0
        %471 = vmatpush1.bf16.msra.mxu0 0
        %472 = vmatprep.subr.bf16.mxu0 0
        %473 = vmatpush1.bf16.msra.mxu0 0
        %474 = vmatprep.subr.bf16.mxu0 0
        %475 = vmatpush1.bf16.msra.mxu0 0
        %476 = vmatprep.subr.bf16.mxu0 0
        %477 = vmatpush1.bf16.msra.mxu0 0
        %478 = vmatprep.mubr.bf16.mxu0 0
        %479 = vmatmul.mubr.bf16.gmra.mrb[0].mxu0 %v444
        %v480 = vpop.f32.mrb[0].mxu0
        %v481 = vadd.f32 %v440, %v480
        %v482 = vpop.f32.mrb[0].mxu0
        %v483 = vpop.f32.mrb[0].mxu0
        %v484 = vpop.f32.mrb[0].mxu0
        %485 = vdwg.mxu0
        %v486 = vld [vmem:[%s425] sm:$0xff]
        %v487 = vadd.f32 %v481, %v486
        %v488 = vsel %vm442, %v487, 0.0
        %489 = vadd.xlane.f32.xlu0 %v488
        %v490 = vpop.xlane.xlu0 %489
        %v491 = vrcp.pop 32.0
        %v492 = vmul.f32 %v490, %v491
        %v493 = vsub.f32 %v487, %v492
        %v494 = vmul.f32 %v493, %v493
        %v495 = vsel %vm442, %v494, 0.0
        %496 = vadd.xlane.f32.xlu0 %v495
        %v497 = vpop.xlane.xlu0 %496
        %v498 = vmul.f32 %v497, %v491
        %v499 = vld [vmem:[%s4] sm:$0x1]
        %v500 = vadd.f32 %v498, 1e-08
        %v501 = vrsqrt.pop %v500
        %v502 = vmul.f32 %v493, %v501
        %v504 = vlaneseq
        %v505 = vshrl.u32 %v504, 7
        %v506 = vsub.s32 0, %v505
        %v507 = vrot.slane %v499, %v506
        %v509 = vmul.f32 %v507, %v502
        %v510 = vld [vmem:[%s5] sm:$0x1]
        %v512 = vlaneseq
        %v513 = vshrl.u32 %v512, 7
        %v514 = vsub.s32 0, %v513
        %v515 = vrot.slane %v510, %v514
        %v517 = vadd.f32 %v509, %v515
        %v518 = vld [vmem:[%s6] sm:$0xff]
        %v519 = vld [vmem:[%s6 + $0x8] sm:$0xff]
        %v520 = vld [vmem:[%s6 + $0x10] sm:$0xff]
        %v521 = vld [vmem:[%s6 + $0x18] sm:$0xff]
        %v522 = vpack.c.bf16 %v517, %v517
        %v523 = vpack.c.bf16 %v519, %v518
        %v524 = vpack.c.bf16 %v521, %v520
        %v525 = vld [vmem:[%s7] sm:$0x1]
        %v527 = vlaneseq
        %v528 = vshrl.u32 %v527, 7
        %v529 = vsub.s32 0, %v528
        %v530 = vrot.slane %v525, %v529
        %v533 = vsel %vm442, %v522, 0
        %535 = vmatprep.subr.bf16.mxu0 0
        %536 = vmatpush1.bf16.msra.mxu0 %v523
        %537 = vmatprep.subr.bf16.mxu0 0
        %538 = vmatpush1.bf16.msra.mxu0 %v524
        %539 = vmatprep.subr.bf16.mxu0 0
        %540 = vmatpush1.bf16.msra.mxu0 0
        %541 = vmatprep.subr.bf16.mxu0 0
        %542 = vmatpush1.bf16.msra.mxu0 0
        %543 = vmatprep.subr.bf16.mxu0 0
        %544 = vmatpush1.bf16.msra.mxu0 0
        %545 = vmatprep.subr.bf16.mxu0 0
        %546 = vmatpush1.bf16.msra.mxu0 0
        %547 = vmatprep.subr.bf16.mxu0 0
        %548 = vmatpush1.bf16.msra.mxu0 0
        %549 = vmatprep.subr.bf16.mxu0 0
        %550 = vmatpush1.bf16.msra.mxu0 0
        %551 = vmatprep.subr.bf16.mxu0 0
        %552 = vmatpush1.bf16.msra.mxu0 0
        %553 = vmatprep.subr.bf16.mxu0 0
        %554 = vmatpush1.bf16.msra.mxu0 0
        %555 = vmatprep.subr.bf16.mxu0 0
        %556 = vmatpush1.bf16.msra.mxu0 0
        %557 = vmatprep.subr.bf16.mxu0 0
        %558 = vmatpush1.bf16.msra.mxu0 0
        %559 = vmatprep.subr.bf16.mxu0 0
        %560 = vmatpush1.bf16.msra.mxu0 0
        %561 = vmatprep.subr.bf16.mxu0 0
        %562 = vmatpush1.bf16.msra.mxu0 0
        %563 = vmatprep.subr.bf16.mxu0 0
        %564 = vmatpush1.bf16.msra.mxu0 0
        %565 = vmatprep.subr.bf16.mxu0 0
        %566 = vmatpush1.bf16.msra.mxu0 0
        %567 = vmatprep.mubr.bf16.mxu0 0
        %568 = vmatmul.mubr.bf16.gmra.mrb[0].mxu0 %v533
        %v569 = vpop.f32.mrb[0].mxu0
        %v570 = vadd.f32 %v530, %v569
        %v571 = vpop.f32.mrb[0].mxu0
        %v572 = vpop.f32.mrb[0].mxu0
        %v573 = vpop.f32.mrb[0].mxu0
        %574 = vdwg.mxu0
        %v575 = vmax.f32 %v570, 0.0
        %v576 = vld [vmem:[%s8] sm:$0xff]
        %v577 = vld [vmem:[%s8 + $0x8] sm:$0xff]
        %v578 = vld [vmem:[%s8 + $0x10] sm:$0xff]
        %v579 = vld [vmem:[%s8 + $0x18] sm:$0xff]
        %v580 = vld [vmem:[%s8 + $0x20] sm:$0xff]
        %v581 = vld [vmem:[%s8 + $0x28] sm:$0xff]
        %v582 = vld [vmem:[%s8 + $0x30] sm:$0xff]
        %v583 = vld [vmem:[%s8 + $0x38] sm:$0xff]
        %v584 = vpack.c.bf16 %v575, %v575
        %v585 = vpack.c.bf16 %v577, %v576
        %v586 = vpack.c.bf16 %v579, %v578
        %v587 = vpack.c.bf16 %v581, %v580
        %v588 = vpack.c.bf16 %v583, %v582
        %v589 = vld [vmem:[%s9] sm:$0x1]
        %v591 = vlaneseq
        %v592 = vshrl.u32 %v591, 7
        %v593 = vsub.s32 0, %v592
        %v594 = vrot.slane %v589, %v593
        %vm596 = vcmask 523264
        %v598 = vsel %vm596, %v584, 0
        %600 = vmatprep.subr.bf16.mxu0 0
        %601 = vmatpush1.bf16.msra.mxu0 %v585
        %602 = vmatprep.subr.bf16.mxu0 0
        %603 = vmatpush1.bf16.msra.mxu0 %v586
        %604 = vmatprep.subr.bf16.mxu0 0
        %605 = vmatpush1.bf16.msra.mxu0 %v587
        %606 = vmatprep.subr.bf16.mxu0 0
        %607 = vmatpush1.bf16.msra.mxu0 %v588
        %608 = vmatprep.subr.bf16.mxu0 0
        %609 = vmatpush1.bf16.msra.mxu0 0
        %610 = vmatprep.subr.bf16.mxu0 0
        %611 = vmatpush1.bf16.msra.mxu0 0
        %612 = vmatprep.subr.bf16.mxu0 0
        %613 = vmatpush1.bf16.msra.mxu0 0
        %614 = vmatprep.subr.bf16.mxu0 0
        %615 = vmatpush1.bf16.msra.mxu0 0
        %616 = vmatprep.subr.bf16.mxu0 0
        %617 = vmatpush1.bf16.msra.mxu0 0
        %618 = vmatprep.subr.bf16.mxu0 0
        %619 = vmatpush1.bf16.msra.mxu0 0
        %620 = vmatprep.subr.bf16.mxu0 0
        %621 = vmatpush1.bf16.msra.mxu0 0
        %622 = vmatprep.subr.bf16.mxu0 0
        %623 = vmatpush1.bf16.msra.mxu0 0
        %624 = vmatprep.subr.bf16.mxu0 0
        %625 = vmatpush1.bf16.msra.mxu0 0
        %626 = vmatprep.subr.bf16.mxu0 0
        %627 = vmatpush1.bf16.msra.mxu0 0
        %628 = vmatprep.subr.bf16.mxu0 0
        %629 = vmatpush1.bf16.msra.mxu0 0
        %630 = vmatprep.subr.bf16.mxu0 0
        %631 = vmatpush1.bf16.msra.mxu0 0
        %632 = vmatprep.mubr.bf16.mxu0 0
        %633 = vmatmul.mubr.bf16.gmra.mrb[0].mxu0 %v598
        %v634 = vpop.f32.mrb[0].mxu0
        %v635 = vadd.f32 %v594, %v634
        %v636 = vpop.f32.mrb[0].mxu0
        %v637 = vpop.f32.mrb[0].mxu0
        %v638 = vpop.f32.mrb[0].mxu0
        %639 = vdwg.mxu0
        %v640 = vadd.f32 %v635, %v517
        %v641 = vsel %vm442, %v640, 0.0
        %642 = vadd.xlane.f32.xlu0 %v641
        %v643 = vpop.xlane.xlu0 %642
        %v644 = vmul.f32 %v643, %v491
        %v645 = vsub.f32 %v640, %v644
        %v646 = vmul.f32 %v645, %v645
        %v647 = vsel %vm442, %v646, 0.0
        %648 = vadd.xlane.f32.xlu0 %v647
        %v649 = vpop.xlane.xlu0 %648
        %v650 = vmul.f32 %v649, %v491
        %v651 = vld [vmem:[%s10] sm:$0x1]
        %v652 = vadd.f32 %v650, 1e-08
        %v653 = vrsqrt.pop %v652
        %v654 = vmul.f32 %v645, %v653
        %v656 = vlaneseq
        %v657 = vshrl.u32 %v656, 7
        %v658 = vsub.s32 0, %v657
        %v659 = vrot.slane %v651, %v658
        %v661 = vmul.f32 %v659, %v654
        %v662 = vld [vmem:[%s11] sm:$0x1]
        %v664 = vlaneseq
        %v665 = vshrl.u32 %v664, 7
        %v666 = vsub.s32 0, %v665
        %v667 = vrot.slane %v662, %v666
        %v669 = vadd.f32 %v661, %v667
        %670 = vst.msk [vmem:[%s417] sm:$0xff] %vm442, %v669
        %s671 = sand.u32 %s296, 1
        %s672 = scalar_lea.sflag [#allocation3], %s671
        %s673 = sand.u32 %s296, 1
        %s674 = smul.addr %s673, 8
        %s675 = scalar_lea.vmem [#allocation2], %s674
        // Predicated region
        $region69: #{egtf_forward.9} parent=67 // pred_check
          %p676 = pneg %p306
        $region70: #{egtf_forward.9} parent=67 // pred_check_branch
          %678 = sbr.rel (%p676) target = $region72
        $region71: #{egtf_forward.9} parent=67 // pred_region
          %s680 = ssub.s32 128, 128
          %681 = vsyncadd %s672, %s680
          %s682 = smul.addr %s26, 128
          %s683 = scalar_lea.hbm %s12, %s682
          %s685 = sshll.u32 %s675, 4
          %s686 = int_to_ptr.vmem [resolvable:$true] %s685
          %688 = dma.vmem_to_hbm [thread:$0]  %s686, 128, %s683, %s672
        $region72: #{egtf_forward.9} parent=67 // pred_fallthru
          _
      $region68: #{egtf_forward.9} parent=5 // pred_fallthru
        _
      %p689 = scmp.le.s32.totalorder 2, %s21
      // Predicated region
      $region73: #{egtf_forward.9} parent=5 // pred_check
        %p690 = pneg %p689
      $region74: #{egtf_forward.9} parent=5 // pred_check_branch
        %692 = sbr.rel (%p690) target = $region76
      $region75: #{egtf_forward.9} parent=5 // pred_region
        %s693 = ssub.s32 %s21, 2
        // Predicated region
        $region77: #{egtf_forward.9} parent=75 // pred_check
          %p694 = pneg %p312
        $region78: #{egtf_forward.9} parent=75 // pred_check_branch
          %696 = sbr.rel (%p694) target = $region80
        $region79: #{egtf_forward.9} parent=75 // pred_region
          %s697 = sand.u32 %s297, 1
          %s698 = scalar_lea.sflag [#allocation3], %s697
          %s699 = sand.u32 %s297, 1
          %s700 = smul.addr %s699, 8
          %s701 = scalar_lea.vmem [#allocation2], %s700
          %702 = dma.done %s698, 128
        $region80: #{egtf_forward.9} parent=75 // pred_fallthru
          _
      $region76: #{egtf_forward.9} parent=5 // pred_fallthru
        _
    $region6: #{egtf_forward.9} parent=1 // loop_footer
      %s25 = sadd.s32 1, %s21
    $region7: #{egtf_forward.9} parent=1 // loop_footer_branch
      %20 = sbr.rel target = $region3
    $region8: #{egtf_forward.9} parent=1 // loop_exit
      _
    %703 = vsyncpa [#allocation3], 1
    %s704 = scalar_lea.sflag [#allocation3], 1
    %705 = vsyncpa %s704, 1

// kernel: egtf_forward.5
$region0: #{egtf_forward.5}
  #allocation0 [shape = 'u32[]', space=smem, size = 0x4, offset = 0x4, fixed_abs, tag = 'smem constant byte address 0x4 - core index']
  #allocation1 [shape = 'u32[144,128]{1,0:T(1,128)}', space=vmem, size = 0x12000, scoped, tag = 'internal scratch']
  #allocation2 [shape = 'f32[8,32]{1,0:T(8,128)}', space=vmem, size = 0x1000, scoped, tag = 'scratch operand']
  #allocation3 [shape = 'f32[8,3]{1,0:T(8,128)}', space=vmem, size = 0x1000, scoped, tag = 'scratch operand']
  #allocation4 [shape = 'f32[1,1]{1,0:T(1,128)S(1)}', space=vmem, size = 0x200, scoped, tag = 'scoped memory for egtf_forward.5']
  %s0 = inlined_call_operand.vmem [shape: f32[64,32], index: 0, kind: input, shape index: {}]
  %s1 = inlined_call_operand.vmem [shape: f32[64,32], index: 1, kind: input, shape index: {}]
  %s2 = inlined_call_operand.vmem [shape: f32[64,8], index: 2, kind: input, shape index: {}]
  %s3 = inlined_call_operand.vmem [shape: s32[2,1,32], index: 3, kind: input, shape index: {}]
  %s4 = inlined_call_operand.vmem [shape: f32[16,32], index: 4, kind: input, shape index: {}]
  %s5 = inlined_call_operand.vmem [shape: f32[16,3], index: 5, kind: input, shape index: {}]
  %s6 = inlined_call_operand.vmem [shape: f32[16,1], index: 6, kind: input, shape index: {}]
  %s7 = inlined_call_operand.vmem [shape: f32[32,32], index: 7, kind: input, shape index: {}]
  %s8 = inlined_call_operand.vmem [shape: f32[32,32], index: 8, kind: input, shape index: {}]
  %s9 = inlined_call_operand.vmem [shape: f32[16,32], index: 9, kind: input, shape index: {}]
  %s10 = inlined_call_operand.vmem [shape: f32[4,32], index: 10, kind: input, shape index: {}]
  %s11 = inlined_call_operand.vmem [shape: f32[1,32], index: 11, kind: input, shape index: {}]
  %s12 = inlined_call_operand.vmem [shape: f32[32,32], index: 12, kind: input, shape index: {}]
  %s13 = inlined_call_operand.vmem [shape: f32[1,32], index: 13, kind: input, shape index: {}]
  %s14 = inlined_call_operand.vmem [shape: f32[32,1], index: 14, kind: input, shape index: {}]
  %s15 = inlined_call_operand.<no memory space> [shape: f32[1,1], index: 15, kind: input, shape index: {}]
  %s16 = inlined_call_operand.vmem [shape: f32[32,32], index: 16, kind: input, shape index: {}]
  %s17 = inlined_call_operand.vmem [shape: f32[1,32], index: 17, kind: input, shape index: {}]
  %s18 = inlined_call_operand.vmem [shape: f32[32,1], index: 18, kind: input, shape index: {}]
  %s19 = inlined_call_operand.vmem [shape: f32[32,32], index: 19, kind: input, shape index: {}]
  %s20 = inlined_call_operand.vmem [shape: f32[32,32], index: 20, kind: input, shape index: {}]
  %s21 = inlined_call_operand.vmem [shape: f32[1,32], index: 21, kind: input, shape index: {}]
  %s22 = inlined_call_operand.vmem [shape: f32[32,32], index: 22, kind: input, shape index: {}]
  %s23 = inlined_call_operand.vmem [shape: f32[1,32], index: 23, kind: input, shape index: {}]
  %s24 = inlined_call_operand.vmem [shape: f32[1,16], index: 24, kind: input, shape index: {}]
  %s25 = inlined_call_operand.vmem [shape: f32[16,32], index: 25, kind: output, shape index: {0}]
  %s26 = inlined_call_operand.vmem [shape: f32[16,3], index: 26, kind: output, shape index: {1}]
  %27 = xla_tuple %s25, %s26
  %s28 = sld [smem:[#allocation0]]
  $region149: #{egtf_forward.5} parent=0
    _
  %s30 = ssub.s32 1, %s28
  %s31 = scalar_select 0, %s30, %s28
  %v32 = vstv %s15
  %33 = vst [vmem:[#allocation4] sm:$0x1] %v32
  loop: start=0, step=1, limit=6
  $region2: #{egtf_forward.5} parent=0 // loop_pre_header
    _
  $region3: #{egtf_forward.5} parent=0 // loop_header
    %s35 = sphi 0, %s39
    %p36 = scmp.ge.s32.totalorder %s35, 6
    %s42 = sphi 0, %s54
    %s43 = sphi 0, %s50
    %s44 = sphi 0, %s42
    %s45 = sphi 0, %s43
    %s46 = sphi 0, %s44
    %s47 = sphi 0, %s45
    %s57 = sphi 0, %s59
    %s60 = sphi 0, %s57
    %s61 = sphi 0, %s60
    %s77 = sphi 0, %s61
    %s83 = sphi 0, %s85
    %s86 = sphi 0, %s83
    %s87 = sphi 0, %s86
    %s103 = sphi 0, %s87
    %s109 = sphi 0, %s111
    %s112 = sphi 0, %s109
    %s113 = sphi 0, %s112
    %s129 = sphi 0, %s113
    %s135 = sphi 0, %s137
    %s138 = sphi 0, %s135
    %s139 = sphi 0, %s138
    %s155 = sphi 0, %s139
    %s161 = sphi 0, %s163
    %s164 = sphi 0, %s161
    %s165 = sphi 0, %s164
    %s181 = sphi 0, %s165
    %s187 = sphi 0, %s189
    %s190 = sphi 0, %s187
    %s191 = sphi 0, %s190
    %s207 = sphi 0, %s191
    %s213 = sphi 0, %s215
    %s216 = sphi 0, %s213
    %s217 = sphi 0, %s216
    %s233 = sphi 0, %s217
    %s237 = sphi 0, %s237
    %s239 = sphi 0, %s237
    %s240 = sphi 0, %s239
    %s254 = sphi 0, %s240
    %s258 = sphi 0, %s258
    %s260 = sphi 0, %s258
    %s261 = sphi 0, %s260
    %s275 = sphi 0, %s261
    %s279 = sphi 0, %s279
    %s281 = sphi 0, %s279
    %s282 = sphi 0, %s281
    %s296 = sphi 0, %s282
    %s300 = sphi 0, %s300
    %s302 = sphi 0, %s300
    %s303 = sphi 0, %s302
    %s317 = sphi 0, %s303
    %s321 = sphi 0, %s321
    %s323 = sphi 0, %s321
    %s324 = sphi 0, %s323
    %s338 = sphi 0, %s324
    %s342 = sphi 0, %s342
    %s344 = sphi 0, %s342
    %s345 = sphi 0, %s344
    %s359 = sphi 0, %s345
    %s363 = sphi 0, %s363
    %s365 = sphi 0, %s363
    %s366 = sphi 0, %s365
    %s380 = sphi 0, %s366
    %s384 = sphi 0, %s384
    %s386 = sphi 0, %s384
    %s387 = sphi 0, %s386
    %s401 = sphi 0, %s387
    %s405 = sphi 0, %s405
    %s407 = sphi 0, %s405
    %s408 = sphi 0, %s407
    %s422 = sphi 0, %s408
    %s426 = sphi 0, %s426
    %s428 = sphi 0, %s426
    %s429 = sphi 0, %s428
    %s443 = sphi 0, %s429
    %s447 = sphi 0, %s447
    %s449 = sphi 0, %s447
    %s450 = sphi 0, %s449
    %s464 = sphi 0, %s450
    %s468 = sphi 0, %s468
    %s470 = sphi 0, %s468
    %s471 = sphi 0, %s470
    %s485 = sphi 0, %s471
    %s489 = sphi 0, %s489
    %s491 = sphi 0, %s489
    %s492 = sphi 0, %s491
    %s506 = sphi 0, %s492
    %s510 = sphi 0, %s510
    %s512 = sphi 0, %s510
    %s513 = sphi 0, %s512
    %s527 = sphi 0, %s513
    %s531 = sphi 0, %s531
    %s533 = sphi 0, %s531
    %s534 = sphi 0, %s533
    %s548 = sphi 0, %s534
    %s552 = sphi 0, %s552
    %s554 = sphi 0, %s552
    %s555 = sphi 0, %s554
    %s569 = sphi 0, %s555
    %s573 = sphi 0, %s573
    %s575 = sphi 0, %s573
    %s576 = sphi 0, %s575
    %s590 = sphi 0, %s576
    %s594 = sphi 0, %s594
    %s596 = sphi 0, %s594
    %s597 = sphi 0, %s596
    %s611 = sphi 0, %s597
    %s617 = sphi 0, %s619
    %s620 = sphi 0, %s617
    %s621 = sphi 0, %s620
    %s637 = sphi 0, %s621
    %s643 = sphi 0, %s645
    %s646 = sphi 0, %s643
    %s647 = sphi 0, %s646
    %s663 = sphi 0, %s647
  $region4: #{egtf_forward.5} parent=0 // loop_header_branch
    %38 = sbr.rel (%p36) target = $region8
  $region5: #{egtf_forward.5} parent=0 // loop_body
    %s40 = ssub.s32 %s35, 1
    %s41 = ssub.s32 %s35, 2
    %s48 = sadd.s32 1, %s43
    %p49 = scmp.ge.s32.totalorder %s48, 2
    %s50 = scalar_select %p49, 0, %s48
    %s51 = sadd.s32 1, %s42
    %s52 = scalar_select %p49, %s51, %s42
    %p53 = scmp.ge.s32.totalorder %s52, 2
    %s54 = scalar_select %p53, 0, %s52
    %s55 = ssub.s32 %s43, %s50
    %p56 = scmp.eq.s32.totalorder %s55, 0
    %s58 = sadd.s32 %s57, 1
    %s59 = scalar_select %p56, %s57, %s58
    %p62 = pneg %p56
    %p63 = scmp.eq.s32.totalorder %s35, 3
    %p64 = por %p62, %p63
    %p65 = scmp.ne.s32.totalorder %s57, %s60
    %p66 = scmp.eq.s32.totalorder %s35, 0
    %p67 = por %p65, %p66
    %p68 = scmp.ne.s32.totalorder %s57, %s60
    %p69 = scmp.eq.s32.totalorder %s40, 3
    %p70 = por %p68, %p69
    %p71 = scmp.ne.s32.totalorder %s60, %s61
    %p72 = scmp.eq.s32.totalorder %s40, 0
    %p73 = por %p71, %p72
    %p74 = scmp.ne.s32.totalorder %s60, %s61
    %p75 = scmp.eq.s32.totalorder %s41, 3
    %p76 = por %p74, %p75
    %p78 = scmp.ne.s32.totalorder %s61, %s77
    %p79 = scmp.eq.s32.totalorder %s41, 0
    %p80 = por %p78, %p79
    %s81 = ssub.s32 %s43, %s50
    %p82 = scmp.eq.s32.totalorder %s81, 0
    %s84 = sadd.s32 %s83, 1
    %s85 = scalar_select %p82, %s83, %s84
    %p88 = pneg %p82
    %p89 = scmp.eq.s32.totalorder %s35, 3
    %p90 = por %p88, %p89
    %p91 = scmp.ne.s32.totalorder %s83, %s86
    %p92 = scmp.eq.s32.totalorder %s35, 0
    %p93 = por %p91, %p92
    %p94 = scmp.ne.s32.totalorder %s83, %s86
    %p95 = scmp.eq.s32.totalorder %s40, 3
    %p96 = por %p94, %p95
    %p97 = scmp.ne.s32.totalorder %s86, %s87
    %p98 = scmp.eq.s32.totalorder %s40, 0
    %p99 = por %p97, %p98
    %p100 = scmp.ne.s32.totalorder %s86, %s87
    %p101 = scmp.eq.s32.totalorder %s41, 3
    %p102 = por %p100, %p101
    %p104 = scmp.ne.s32.totalorder %s87, %s103
    %p105 = scmp.eq.s32.totalorder %s41, 0
    %p106 = por %p104, %p105
    %s107 = ssub.s32 %s43, %s50
    %p108 = scmp.eq.s32.totalorder %s107, 0
    %s110 = sadd.s32 %s109, 1
    %s111 = scalar_select %p108, %s109, %s110
    %p114 = pneg %p108
    %p115 = scmp.eq.s32.totalorder %s35, 3
    %p116 = por %p114, %p115
    %p117 = scmp.ne.s32.totalorder %s109, %s112
    %p118 = scmp.eq.s32.totalorder %s35, 0
    %p119 = por %p117, %p118
    %p120 = scmp.ne.s32.totalorder %s109, %s112
    %p121 = scmp.eq.s32.totalorder %s40, 3
    %p122 = por %p120, %p121
    %p123 = scmp.ne.s32.totalorder %s112, %s113
    %p124 = scmp.eq.s32.totalorder %s40, 0
    %p125 = por %p123, %p124
    %p126 = scmp.ne.s32.totalorder %s112, %s113
    %p127 = scmp.eq.s32.totalorder %s41, 3
    %p128 = por %p126, %p127
    %p130 = scmp.ne.s32.totalorder %s113, %s129
    %p131 = scmp.eq.s32.totalorder %s41, 0
    %p132 = por %p130, %p131
    %s133 = ssub.s32 %s43, %s50
    %p134 = scmp.eq.s32.totalorder %s133, 0
    %s136 = sadd.s32 %s135, 1
    %s137 = scalar_select %p134, %s135, %s136
    %p140 = pneg %p134
    %p141 = scmp.eq.s32.totalorder %s35, 3
    %p142 = por %p140, %p141
    %p143 = scmp.ne.s32.totalorder %s135, %s138
    %p144 = scmp.eq.s32.totalorder %s35, 0
    %p145 = por %p143, %p144
    %p146 = scmp.ne.s32.totalorder %s135, %s138
    %p147 = scmp.eq.s32.totalorder %s40, 3
    %p148 = por %p146, %p147
    %p149 = scmp.ne.s32.totalorder %s138, %s139
    %p150 = scmp.eq.s32.totalorder %s40, 0
    %p151 = por %p149, %p150
    %p152 = scmp.ne.s32.totalorder %s138, %s139
    %p153 = scmp.eq.s32.totalorder %s41, 3
    %p154 = por %p152, %p153
    %p156 = scmp.ne.s32.totalorder %s139, %s155
    %p157 = scmp.eq.s32.totalorder %s41, 0
    %p158 = por %p156, %p157
    %s159 = ssub.s32 %s42, %s54
    %p160 = scmp.eq.s32.totalorder %s159, 0
    %s162 = sadd.s32 %s161, 1
    %s163 = scalar_select %p160, %s161, %s162
    %p166 = pneg %p160
    %p167 = scmp.eq.s32.totalorder %s35, 3
    %p168 = por %p166, %p167
    %p169 = scmp.ne.s32.totalorder %s161, %s164
    %p170 = scmp.eq.s32.totalorder %s35, 0
    %p171 = por %p169, %p170
    %p172 = scmp.ne.s32.totalorder %s161, %s164
    %p173 = scmp.eq.s32.totalorder %s40, 3
    %p174 = por %p172, %p173
    %p175 = scmp.ne.s32.totalorder %s164, %s165
    %p176 = scmp.eq.s32.totalorder %s40, 0
    %p177 = por %p175, %p176
    %p178 = scmp.ne.s32.totalorder %s164, %s165
    %p179 = scmp.eq.s32.totalorder %s41, 3
    %p180 = por %p178, %p179
    %p182 = scmp.ne.s32.totalorder %s165, %s181
    %p183 = scmp.eq.s32.totalorder %s41, 0
    %p184 = por %p182, %p183
    %s185 = ssub.s32 %s42, %s54
    %p186 = scmp.eq.s32.totalorder %s185, 0
    %s188 = sadd.s32 %s187, 1
    %s189 = scalar_select %p186, %s187, %s188
    %p192 = pneg %p186
    %p193 = scmp.eq.s32.totalorder %s35, 3
    %p194 = por %p192, %p193
    %p195 = scmp.ne.s32.totalorder %s187, %s190
    %p196 = scmp.eq.s32.totalorder %s35, 0
    %p197 = por %p195, %p196
    %p198 = scmp.ne.s32.totalorder %s187, %s190
    %p199 = scmp.eq.s32.totalorder %s40, 3
    %p200 = por %p198, %p199
    %p201 = scmp.ne.s32.totalorder %s190, %s191
    %p202 = scmp.eq.s32.totalorder %s40, 0
    %p203 = por %p201, %p202
    %p204 = scmp.ne.s32.totalorder %s190, %s191
    %p205 = scmp.eq.s32.totalorder %s41, 3
    %p206 = por %p204, %p205
    %p208 = scmp.ne.s32.totalorder %s191, %s207
    %p209 = scmp.eq.s32.totalorder %s41, 0
    %p210 = por %p208, %p209
    %s211 = ssub.s32 %s42, %s54
    %p212 = scmp.eq.s32.totalorder %s211, 0
    %s214 = sadd.s32 %s213, 1
    %s215 = scalar_select %p212, %s213, %s214
    %p218 = pneg %p212
    %p219 = scmp.eq.s32.totalorder %s35, 3
    %p220 = por %p218, %p219
    %p221 = scmp.ne.s32.totalorder %s213, %s216
    %p222 = scmp.eq.s32.totalorder %s35, 0
    %p223 = por %p221, %p222
    %p224 = scmp.ne.s32.totalorder %s213, %s216
    %p225 = scmp.eq.s32.totalorder %s40, 3
    %p226 = por %p224, %p225
    %p227 = scmp.ne.s32.totalorder %s216, %s217
    %p228 = scmp.eq.s32.totalorder %s40, 0
    %p229 = por %p227, %p228
    %p230 = scmp.ne.s32.totalorder %s216, %s217
    %p231 = scmp.eq.s32.totalorder %s41, 3
    %p232 = por %p230, %p231
    %p234 = scmp.ne.s32.totalorder %s217, %s233
    %p235 = scmp.eq.s32.totalorder %s41, 0
    %p236 = por %p234, %p235
    %s238 = sadd.s32 %s237, 1
    %p241 = scmp.eq.s32.totalorder %s35, 3
    %p242 = scmp.ne.s32.totalorder %s237, %s239
    %p243 = scmp.eq.s32.totalorder %s35, 0
    %p244 = por %p242, %p243
    %p245 = scmp.ne.s32.totalorder %s237, %s239
    %p246 = scmp.eq.s32.totalorder %s40, 3
    %p247 = por %p245, %p246
    %p248 = scmp.ne.s32.totalorder %s239, %s240
    %p249 = scmp.eq.s32.totalorder %s40, 0
    %p250 = por %p248, %p249
    %p251 = scmp.ne.s32.totalorder %s239, %s240
    %p252 = scmp.eq.s32.totalorder %s41, 3
    %p253 = por %p251, %p252
    %p255 = scmp.ne.s32.totalorder %s240, %s254
    %p256 = scmp.eq.s32.totalorder %s41, 0
    %p257 = por %p255, %p256
    %s259 = sadd.s32 %s258, 1
    %p262 = scmp.eq.s32.totalorder %s35, 3
    %p263 = scmp.ne.s32.totalorder %s258, %s260
    %p264 = scmp.eq.s32.totalorder %s35, 0
    %p265 = por %p263, %p264
    %p266 = scmp.ne.s32.totalorder %s258, %s260
    %p267 = scmp.eq.s32.totalorder %s40, 3
    %p268 = por %p266, %p267
    %p269 = scmp.ne.s32.totalorder %s260, %s261
    %p270 = scmp.eq.s32.totalorder %s40, 0
    %p271 = por %p269, %p270
    %p272 = scmp.ne.s32.totalorder %s260, %s261
    %p273 = scmp.eq.s32.totalorder %s41, 3
    %p274 = por %p272, %p273
    %p276 = scmp.ne.s32.totalorder %s261, %s275
    %p277 = scmp.eq.s32.totalorder %s41, 0
    %p278 = por %p276, %p277
    %s280 = sadd.s32 %s279, 1
    %p283 = scmp.eq.s32.totalorder %s35, 3
    %p284 = scmp.ne.s32.totalorder %s279, %s281
    %p285 = scmp.eq.s32.totalorder %s35, 0
    %p286 = por %p284, %p285
    %p287 = scmp.ne.s32.totalorder %s279, %s281
    %p288 = scmp.eq.s32.totalorder %s40, 3
    %p289 = por %p287, %p288
    %p290 = scmp.ne.s32.totalorder %s281, %s282
    %p291 = scmp.eq.s32.totalorder %s40, 0
    %p292 = por %p290, %p291
    %p293 = scmp.ne.s32.totalorder %s281, %s282
    %p294 = scmp.eq.s32.totalorder %s41, 3
    %p295 = por %p293, %p294
    %p297 = scmp.ne.s32.totalorder %s282, %s296
    %p298 = scmp.eq.s32.totalorder %s41, 0
    %p299 = por %p297, %p298
    %s301 = sadd.s32 %s300, 1
    %p304 = scmp.eq.s32.totalorder %s35, 3
    %p305 = scmp.ne.s32.totalorder %s300, %s302
    %p306 = scmp.eq.s32.totalorder %s35, 0
    %p307 = por %p305, %p306
    %p308 = scmp.ne.s32.totalorder %s300, %s302
    %p309 = scmp.eq.s32.totalorder %s40, 3
    %p310 = por %p308, %p309
    %p311 = scmp.ne.s32.totalorder %s302, %s303
    %p312 = scmp.eq.s32.totalorder %s40, 0
    %p313 = por %p311, %p312
    %p314 = scmp.ne.s32.totalorder %s302, %s303
    %p315 = scmp.eq.s32.totalorder %s41, 3
    %p316 = por %p314, %p315
    %p318 = scmp.ne.s32.totalorder %s303, %s317
    %p319 = scmp.eq.s32.totalorder %s41, 0
    %p320 = por %p318, %p319
    %s322 = sadd.s32 %s321, 1
    %p325 = scmp.eq.s32.totalorder %s35, 3
    %p326 = scmp.ne.s32.totalorder %s321, %s323
    %p327 = scmp.eq.s32.totalorder %s35, 0
    %p328 = por %p326, %p327
    %p329 = scmp.ne.s32.totalorder %s321, %s323
    %p330 = scmp.eq.s32.totalorder %s40, 3
    %p331 = por %p329, %p330
    %p332 = scmp.ne.s32.totalorder %s323, %s324
    %p333 = scmp.eq.s32.totalorder %s40, 0
    %p334 = por %p332, %p333
    %p335 = scmp.ne.s32.totalorder %s323, %s324
    %p336 = scmp.eq.s32.totalorder %s41, 3
    %p337 = por %p335, %p336
    %p339 = scmp.ne.s32.totalorder %s324, %s338
    %p340 = scmp.eq.s32.totalorder %s41, 0
    %p341 = por %p339, %p340
    %s343 = sadd.s32 %s342, 1
    %p346 = scmp.eq.s32.totalorder %s35, 3
    %p347 = scmp.ne.s32.totalorder %s342, %s344
    %p348 = scmp.eq.s32.totalorder %s35, 0
    %p349 = por %p347, %p348
    %p350 = scmp.ne.s32.totalorder %s342, %s344
    %p351 = scmp.eq.s32.totalorder %s40, 3
    %p352 = por %p350, %p351
    %p353 = scmp.ne.s32.totalorder %s344, %s345
    %p354 = scmp.eq.s32.totalorder %s40, 0
    %p355 = por %p353, %p354
    %p356 = scmp.ne.s32.totalorder %s344, %s345
    %p357 = scmp.eq.s32.totalorder %s41, 3
    %p358 = por %p356, %p357
    %p360 = scmp.ne.s32.totalorder %s345, %s359
    %p361 = scmp.eq.s32.totalorder %s41, 0
    %p362 = por %p360, %p361
    %s364 = sadd.s32 %s363, 1
    %p367 = scmp.eq.s32.totalorder %s35, 3
    %p368 = scmp.ne.s32.totalorder %s363, %s365
    %p369 = scmp.eq.s32.totalorder %s35, 0
    %p370 = por %p368, %p369
    %p371 = scmp.ne.s32.totalorder %s363, %s365
    %p372 = scmp.eq.s32.totalorder %s40, 3
    %p373 = por %p371, %p372
    %p374 = scmp.ne.s32.totalorder %s365, %s366
    %p375 = scmp.eq.s32.totalorder %s40, 0
    %p376 = por %p374, %p375
    %p377 = scmp.ne.s32.totalorder %s365, %s366
    %p378 = scmp.eq.s32.totalorder %s41, 3
    %p379 = por %p377, %p378
    %p381 = scmp.ne.s32.totalorder %s366, %s380
    %p382 = scmp.eq.s32.totalorder %s41, 0
    %p383 = por %p381, %p382
    %s385 = sadd.s32 %s384, 1
    %p388 = scmp.eq.s32.totalorder %s35, 3
    %p389 = scmp.ne.s32.totalorder %s384, %s386
    %p390 = scmp.eq.s32.totalorder %s35, 0
    %p391 = por %p389, %p390
    %p392 = scmp.ne.s32.totalorder %s384, %s386
    %p393 = scmp.eq.s32.totalorder %s40, 3
    %p394 = por %p392, %p393
    %p395 = scmp.ne.s32.totalorder %s386, %s387
    %p396 = scmp.eq.s32.totalorder %s40, 0
    %p397 = por %p395, %p396
    %p398 = scmp.ne.s32.totalorder %s386, %s387
    %p399 = scmp.eq.s32.totalorder %s41, 3
    %p400 = por %p398, %p399
    %p402 = scmp.ne.s32.totalorder %s387, %s401
    %p403 = scmp.eq.s32.totalorder %s41, 0
    %p404 = por %p402, %p403
    %s406 = sadd.s32 %s405, 1
    %p409 = scmp.eq.s32.totalorder %s35, 3
    %p410 = scmp.ne.s32.totalorder %s405, %s407
    %p411 = scmp.eq.s32.totalorder %s35, 0
    %p412 = por %p410, %p411
    %p413 = scmp.ne.s32.totalorder %s405, %s407
    %p414 = scmp.eq.s32.totalorder %s40, 3
    %p415 = por %p413, %p414
    %p416 = scmp.ne.s32.totalorder %s407, %s408
    %p417 = scmp.eq.s32.totalorder %s40, 0
    %p418 = por %p416, %p417
    %p419 = scmp.ne.s32.totalorder %s407, %s408
    %p420 = scmp.eq.s32.totalorder %s41, 3
    %p421 = por %p419, %p420
    %p423 = scmp.ne.s32.totalorder %s408, %s422
    %p424 = scmp.eq.s32.totalorder %s41, 0
    %p425 = por %p423, %p424
    %s427 = sadd.s32 %s426, 1
    %p430 = scmp.eq.s32.totalorder %s35, 3
    %p431 = scmp.ne.s32.totalorder %s426, %s428
    %p432 = scmp.eq.s32.totalorder %s35, 0
    %p433 = por %p431, %p432
    %p434 = scmp.ne.s32.totalorder %s426, %s428
    %p435 = scmp.eq.s32.totalorder %s40, 3
    %p436 = por %p434, %p435
    %p437 = scmp.ne.s32.totalorder %s428, %s429
    %p438 = scmp.eq.s32.totalorder %s40, 0
    %p439 = por %p437, %p438
    %p440 = scmp.ne.s32.totalorder %s428, %s429
    %p441 = scmp.eq.s32.totalorder %s41, 3
    %p442 = por %p440, %p441
    %p444 = scmp.ne.s32.totalorder %s429, %s443
    %p445 = scmp.eq.s32.totalorder %s41, 0
    %p446 = por %p444, %p445
    %s448 = sadd.s32 %s447, 1
    %p451 = scmp.eq.s32.totalorder %s35, 3
    %p452 = scmp.ne.s32.totalorder %s447, %s449
    %p453 = scmp.eq.s32.totalorder %s35, 0
    %p454 = por %p452, %p453
    %p455 = scmp.ne.s32.totalorder %s447, %s449
    %p456 = scmp.eq.s32.totalorder %s40, 3
    %p457 = por %p455, %p456
    %p458 = scmp.ne.s32.totalorder %s449, %s450
    %p459 = scmp.eq.s32.totalorder %s40, 0
    %p460 = por %p458, %p459
    %p461 = scmp.ne.s32.totalorder %s449, %s450
    %p462 = scmp.eq.s32.totalorder %s41, 3
    %p463 = por %p461, %p462
    %p465 = scmp.ne.s32.totalorder %s450, %s464
    %p466 = scmp.eq.s32.totalorder %s41, 0
    %p467 = por %p465, %p466
    %s469 = sadd.s32 %s468, 1
    %p472 = scmp.eq.s32.totalorder %s35, 3
    %p473 = scmp.ne.s32.totalorder %s468, %s470
    %p474 = scmp.eq.s32.totalorder %s35, 0
    %p475 = por %p473, %p474
    %p476 = scmp.ne.s32.totalorder %s468, %s470
    %p477 = scmp.eq.s32.totalorder %s40, 3
    %p478 = por %p476, %p477
    %p479 = scmp.ne.s32.totalorder %s470, %s471
    %p480 = scmp.eq.s32.totalorder %s40, 0
    %p481 = por %p479, %p480
    %p482 = scmp.ne.s32.totalorder %s470, %s471
    %p483 = scmp.eq.s32.totalorder %s41, 3
    %p484 = por %p482, %p483
    %p486 = scmp.ne.s32.totalorder %s471, %s485
    %p487 = scmp.eq.s32.totalorder %s41, 0
    %p488 = por %p486, %p487
    %s490 = sadd.s32 %s489, 1
    %p493 = scmp.eq.s32.totalorder %s35, 3
    %p494 = scmp.ne.s32.totalorder %s489, %s491
    %p495 = scmp.eq.s32.totalorder %s35, 0
    %p496 = por %p494, %p495
    %p497 = scmp.ne.s32.totalorder %s489, %s491
    %p498 = scmp.eq.s32.totalorder %s40, 3
    %p499 = por %p497, %p498
    %p500 = scmp.ne.s32.totalorder %s491, %s492
    %p501 = scmp.eq.s32.totalorder %s40, 0
    %p502 = por %p500, %p501
    %p503 = scmp.ne.s32.totalorder %s491, %s492
    %p504 = scmp.eq.s32.totalorder %s41, 3
    %p505 = por %p503, %p504
    %p507 = scmp.ne.s32.totalorder %s492, %s506
    %p508 = scmp.eq.s32.totalorder %s41, 0
    %p509 = por %p507, %p508
    %s511 = sadd.s32 %s510, 1
    %p514 = scmp.eq.s32.totalorder %s35, 3
    %p515 = scmp.ne.s32.totalorder %s510, %s512
    %p516 = scmp.eq.s32.totalorder %s35, 0
    %p517 = por %p515, %p516
    %p518 = scmp.ne.s32.totalorder %s510, %s512
    %p519 = scmp.eq.s32.totalorder %s40, 3
    %p520 = por %p518, %p519
    %p521 = scmp.ne.s32.totalorder %s512, %s513
    %p522 = scmp.eq.s32.totalorder %s40, 0
    %p523 = por %p521, %p522
    %p524 = scmp.ne.s32.totalorder %s512, %s513
    %p525 = scmp.eq.s32.totalorder %s41, 3
    %p526 = por %p524, %p525
    %p528 = scmp.ne.s32.totalorder %s513, %s527
    %p529 = scmp.eq.s32.totalorder %s41, 0
    %p530 = por %p528, %p529
    %s532 = sadd.s32 %s531, 1
    %p535 = scmp.eq.s32.totalorder %s35, 3
    %p536 = scmp.ne.s32.totalorder %s531, %s533
    %p537 = scmp.eq.s32.totalorder %s35, 0
    %p538 = por %p536, %p537
    %p539 = scmp.ne.s32.totalorder %s531, %s533
    %p540 = scmp.eq.s32.totalorder %s40, 3
    %p541 = por %p539, %p540
    %p542 = scmp.ne.s32.totalorder %s533, %s534
    %p543 = scmp.eq.s32.totalorder %s40, 0
    %p544 = por %p542, %p543
    %p545 = scmp.ne.s32.totalorder %s533, %s534
    %p546 = scmp.eq.s32.totalorder %s41, 3
    %p547 = por %p545, %p546
    %p549 = scmp.ne.s32.totalorder %s534, %s548
    %p550 = scmp.eq.s32.totalorder %s41, 0
    %p551 = por %p549, %p550
    %s553 = sadd.s32 %s552, 1
    %p556 = scmp.eq.s32.totalorder %s35, 3
    %p557 = scmp.ne.s32.totalorder %s552, %s554
    %p558 = scmp.eq.s32.totalorder %s35, 0
    %p559 = por %p557, %p558
    %p560 = scmp.ne.s32.totalorder %s552, %s554
    %p561 = scmp.eq.s32.totalorder %s40, 3
    %p562 = por %p560, %p561
    %p563 = scmp.ne.s32.totalorder %s554, %s555
    %p564 = scmp.eq.s32.totalorder %s40, 0
    %p565 = por %p563, %p564
    %p566 = scmp.ne.s32.totalorder %s554, %s555
    %p567 = scmp.eq.s32.totalorder %s41, 3
    %p568 = por %p566, %p567
    %p570 = scmp.ne.s32.totalorder %s555, %s569
    %p571 = scmp.eq.s32.totalorder %s41, 0
    %p572 = por %p570, %p571
    %s574 = sadd.s32 %s573, 1
    %p577 = scmp.eq.s32.totalorder %s35, 3
    %p578 = scmp.ne.s32.totalorder %s573, %s575
    %p579 = scmp.eq.s32.totalorder %s35, 0
    %p580 = por %p578, %p579
    %p581 = scmp.ne.s32.totalorder %s573, %s575
    %p582 = scmp.eq.s32.totalorder %s40, 3
    %p583 = por %p581, %p582
    %p584 = scmp.ne.s32.totalorder %s575, %s576
    %p585 = scmp.eq.s32.totalorder %s40, 0
    %p586 = por %p584, %p585
    %p587 = scmp.ne.s32.totalorder %s575, %s576
    %p588 = scmp.eq.s32.totalorder %s41, 3
    %p589 = por %p587, %p588
    %p591 = scmp.ne.s32.totalorder %s576, %s590
    %p592 = scmp.eq.s32.totalorder %s41, 0
    %p593 = por %p591, %p592
    %s595 = sadd.s32 %s594, 1
    %p598 = scmp.eq.s32.totalorder %s35, 3
    %p599 = scmp.ne.s32.totalorder %s594, %s596
    %p600 = scmp.eq.s32.totalorder %s35, 0
    %p601 = por %p599, %p600
    %p602 = scmp.ne.s32.totalorder %s594, %s596
    %p603 = scmp.eq.s32.totalorder %s40, 3
    %p604 = por %p602, %p603
    %p605 = scmp.ne.s32.totalorder %s596, %s597
    %p606 = scmp.eq.s32.totalorder %s40, 0
    %p607 = por %p605, %p606
    %p608 = scmp.ne.s32.totalorder %s596, %s597
    %p609 = scmp.eq.s32.totalorder %s41, 3
    %p610 = por %p608, %p609
    %p612 = scmp.ne.s32.totalorder %s597, %s611
    %p613 = scmp.eq.s32.totalorder %s41, 0
    %p614 = por %p612, %p613
    %s615 = ssub.s32 %s42, %s54
    %p616 = scmp.eq.s32.totalorder %s615, 0
    %s618 = sadd.s32 %s617, 1
    %s619 = scalar_select %p616, %s617, %s618
    %p622 = pneg %p616
    %p623 = scmp.eq.s32.totalorder %s35, 3
    %p624 = por %p622, %p623
    %p625 = scmp.ne.s32.totalorder %s617, %s620
    %p626 = scmp.eq.s32.totalorder %s35, 0
    %p627 = por %p625, %p626
    %p628 = scmp.ne.s32.totalorder %s617, %s620
    %p629 = scmp.eq.s32.totalorder %s40, 3
    %p630 = por %p628, %p629
    %p631 = scmp.ne.s32.totalorder %s620, %s621
    %p632 = scmp.eq.s32.totalorder %s40, 0
    %p633 = por %p631, %p632
    %p634 = scmp.ne.s32.totalorder %s620, %s621
    %p635 = scmp.eq.s32.totalorder %s41, 3
    %p636 = por %p634, %p635
    %p638 = scmp.ne.s32.totalorder %s621, %s637
    %p639 = scmp.eq.s32.totalorder %s41, 0
    %p640 = por %p638, %p639
    %s641 = ssub.s32 %s42, %s54
    %p642 = scmp.eq.s32.totalorder %s641, 0
    %s644 = sadd.s32 %s643, 1
    %s645 = scalar_select %p642, %s643, %s644
    %p648 = pneg %p642
    %p649 = scmp.eq.s32.totalorder %s35, 3
    %p650 = por %p648, %p649
    %p651 = scmp.ne.s32.totalorder %s643, %s646
    %p652 = scmp.eq.s32.totalorder %s35, 0
    %p653 = por %p651, %p652
    %p654 = scmp.ne.s32.totalorder %s643, %s646
    %p655 = scmp.eq.s32.totalorder %s40, 3
    %p656 = por %p654, %p655
    %p657 = scmp.ne.s32.totalorder %s646, %s647
    %p658 = scmp.eq.s32.totalorder %s40, 0
    %p659 = por %p657, %p658
    %p660 = scmp.ne.s32.totalorder %s646, %s647
    %p661 = scmp.eq.s32.totalorder %s41, 3
    %p662 = por %p660, %p661
    %p664 = scmp.ne.s32.totalorder %s647, %s663
    %p665 = scmp.eq.s32.totalorder %s41, 0
    %p666 = por %p664, %p665
    %p667 = scmp.le.s32.totalorder 1, %s35
    %p668 = scmp.lt.s32.totalorder %s35, 5
    %p669 = pnand %p667, %p668
    %p670 = pneg %p669
    // Predicated region
    $region9: #{egtf_forward.5} parent=5 // pred_check
      _
    $region10: #{egtf_forward.5} parent=5 // pred_check_branch
      %672 = sbr.rel (%p669) target = $region12
    $region11: #{egtf_forward.5} parent=5 // pred_region
      %s673 = ssub.s32 %s35, 1
      // Predicated region
      $region13: #{egtf_forward.5} parent=11 // pred_check
        %p674 = pneg %p250
      $region14: #{egtf_forward.5} parent=11 // pred_check_branch
        %676 = sbr.rel (%p674) target = $region16
      $region15: #{egtf_forward.5} parent=11 // pred_region
        _
      $region16: #{egtf_forward.5} parent=11 // pred_fallthru
        _
      // Predicated region
      $region17: #{egtf_forward.5} parent=11 // pred_check
        %p677 = pneg %p271
      $region18: #{egtf_forward.5} parent=11 // pred_check_branch
        %679 = sbr.rel (%p677) target = $region20
      $region19: #{egtf_forward.5} parent=11 // pred_region
        _
      $region20: #{egtf_forward.5} parent=11 // pred_fallthru
        _
      // Predicated region
      $region21: #{egtf_forward.5} parent=11 // pred_check
        %p680 = pneg %p292
      $region22: #{egtf_forward.5} parent=11 // pred_check_branch
        %682 = sbr.rel (%p680) target = $region24
      $region23: #{egtf_forward.5} parent=11 // pred_region
        _
      $region24: #{egtf_forward.5} parent=11 // pred_fallthru
        _
      // Predicated region
      $region25: #{egtf_forward.5} parent=11 // pred_check
        %p683 = pneg %p313
      $region26: #{egtf_forward.5} parent=11 // pred_check_branch
        %685 = sbr.rel (%p683) target = $region28
      $region27: #{egtf_forward.5} parent=11 // pred_region
        _
      $region28: #{egtf_forward.5} parent=11 // pred_fallthru
        _
      // Predicated region
      $region29: #{egtf_forward.5} parent=11 // pred_check
        %p686 = pneg %p334
      $region30: #{egtf_forward.5} parent=11 // pred_check_branch
        %688 = sbr.rel (%p686) target = $region32
      $region31: #{egtf_forward.5} parent=11 // pred_region
        _
      $region32: #{egtf_forward.5} parent=11 // pred_fallthru
        _
      // Predicated region
      $region33: #{egtf_forward.5} parent=11 // pred_check
        %p689 = pneg %p355
      $region34: #{egtf_forward.5} parent=11 // pred_check_branch
        %691 = sbr.rel (%p689) target = $region36
      $region35: #{egtf_forward.5} parent=11 // pred_region
        _
      $region36: #{egtf_forward.5} parent=11 // pred_fallthru
        _
      // Predicated region
      $region37: #{egtf_forward.5} parent=11 // pred_check
        %p692 = pneg %p376
      $region38: #{egtf_forward.5} parent=11 // pred_check_branch
        %694 = sbr.rel (%p692) target = $region40
      $region39: #{egtf_forward.5} parent=11 // pred_region
        _
      $region40: #{egtf_forward.5} parent=11 // pred_fallthru
        _
      // Predicated region
      $region41: #{egtf_forward.5} parent=11 // pred_check
        %p695 = pneg %p397
      $region42: #{egtf_forward.5} parent=11 // pred_check_branch
        %697 = sbr.rel (%p695) target = $region44
      $region43: #{egtf_forward.5} parent=11 // pred_region
        _
      $region44: #{egtf_forward.5} parent=11 // pred_fallthru
        _
      // Predicated region
      $region45: #{egtf_forward.5} parent=11 // pred_check
        %p698 = pneg %p418
      $region46: #{egtf_forward.5} parent=11 // pred_check_branch
        %700 = sbr.rel (%p698) target = $region48
      $region47: #{egtf_forward.5} parent=11 // pred_region
        _
      $region48: #{egtf_forward.5} parent=11 // pred_fallthru
        _
      // Predicated region
      $region49: #{egtf_forward.5} parent=11 // pred_check
        %p701 = pneg %p439
      $region50: #{egtf_forward.5} parent=11 // pred_check_branch
        %703 = sbr.rel (%p701) target = $region52
      $region51: #{egtf_forward.5} parent=11 // pred_region
        _
      $region52: #{egtf_forward.5} parent=11 // pred_fallthru
        _
      // Predicated region
      $region53: #{egtf_forward.5} parent=11 // pred_check
        %p704 = pneg %p460
      $region54: #{egtf_forward.5} parent=11 // pred_check_branch
        %706 = sbr.rel (%p704) target = $region56
      $region55: #{egtf_forward.5} parent=11 // pred_region
        _
      $region56: #{egtf_forward.5} parent=11 // pred_fallthru
        _
      // Predicated region
      $region57: #{egtf_forward.5} parent=11 // pred_check
        %p707 = pneg %p481
      $region58: #{egtf_forward.5} parent=11 // pred_check_branch
        %709 = sbr.rel (%p707) target = $region60
      $region59: #{egtf_forward.5} parent=11 // pred_region
        _
      $region60: #{egtf_forward.5} parent=11 // pred_fallthru
        _
      // Predicated region
      $region61: #{egtf_forward.5} parent=11 // pred_check
        %p710 = pneg %p502
      $region62: #{egtf_forward.5} parent=11 // pred_check_branch
        %712 = sbr.rel (%p710) target = $region64
      $region63: #{egtf_forward.5} parent=11 // pred_region
        _
      $region64: #{egtf_forward.5} parent=11 // pred_fallthru
        _
      // Predicated region
      $region65: #{egtf_forward.5} parent=11 // pred_check
        %p713 = pneg %p523
      $region66: #{egtf_forward.5} parent=11 // pred_check_branch
        %715 = sbr.rel (%p713) target = $region68
      $region67: #{egtf_forward.5} parent=11 // pred_region
        _
      $region68: #{egtf_forward.5} parent=11 // pred_fallthru
        _
      // Predicated region
      $region69: #{egtf_forward.5} parent=11 // pred_check
        %p716 = pneg %p544
      $region70: #{egtf_forward.5} parent=11 // pred_check_branch
        %718 = sbr.rel (%p716) target = $region72
      $region71: #{egtf_forward.5} parent=11 // pred_region
        _
      $region72: #{egtf_forward.5} parent=11 // pred_fallthru
        _
      // Predicated region
      $region73: #{egtf_forward.5} parent=11 // pred_check
        %p719 = pneg %p565
      $region74: #{egtf_forward.5} parent=11 // pred_check_branch
        %721 = sbr.rel (%p719) target = $region76
      $region75: #{egtf_forward.5} parent=11 // pred_region
        _
      $region76: #{egtf_forward.5} parent=11 // pred_fallthru
        _
      // Predicated region
      $region77: #{egtf_forward.5} parent=11 // pred_check
        %p722 = pneg %p586
      $region78: #{egtf_forward.5} parent=11 // pred_check_branch
        %724 = sbr.rel (%p722) target = $region80
      $region79: #{egtf_forward.5} parent=11 // pred_region
        _
      $region80: #{egtf_forward.5} parent=11 // pred_fallthru
        _
      // Predicated region
      $region81: #{egtf_forward.5} parent=11 // pred_check
        %p725 = pneg %p607
      $region82: #{egtf_forward.5} parent=11 // pred_check_branch
        %727 = sbr.rel (%p725) target = $region84
      $region83: #{egtf_forward.5} parent=11 // pred_region
        _
      $region84: #{egtf_forward.5} parent=11 // pred_fallthru
        _
    $region12: #{egtf_forward.5} parent=5 // pred_fallthru
      _
    %p728 = scmp.lt.s32.totalorder %s35, 4
    // Predicated region
    $region85: #{egtf_forward.5} parent=5 // pred_check
      %p729 = pneg %p728
    $region86: #{egtf_forward.5} parent=5 // pred_check_branch
      %731 = sbr.rel (%p729) target = $region88
    $region87: #{egtf_forward.5} parent=5 // pred_region
      // Predicated region
      $region89: #{egtf_forward.5} parent=87 // pred_check
        %p732 = pneg %p67
      $region90: #{egtf_forward.5} parent=87 // pred_check_branch
        %734 = sbr.rel (%p732) target = $region92
      $region91: #{egtf_forward.5} parent=87 // pred_region
        %s735 = smul.u32 4, %s43
        %p736 = scmp.lt.s32.totalorder %s735, 7
        %s737 = scalar_select %p736, %s735, 7
        %s738 = smul.addr %s737, 8
        %s739 = scalar_lea.vmem %s0, %s738
        %s740 = smul.u32 4, %s43
      $region92: #{egtf_forward.5} parent=87 // pred_fallthru
        _
      // Predicated region
      $region93: #{egtf_forward.5} parent=87 // pred_check
        %p741 = pneg %p93
      $region94: #{egtf_forward.5} parent=87 // pred_check_branch
        %743 = sbr.rel (%p741) target = $region96
      $region95: #{egtf_forward.5} parent=87 // pred_region
        %s744 = smul.u32 4, %s43
        %p745 = scmp.lt.s32.totalorder %s744, 7
        %s746 = scalar_select %p745, %s744, 7
        %s747 = smul.addr %s746, 8
        %s748 = scalar_lea.vmem %s1, %s747
        %s749 = smul.u32 4, %s43
      $region96: #{egtf_forward.5} parent=87 // pred_fallthru
        _
      // Predicated region
      $region97: #{egtf_forward.5} parent=87 // pred_check
        %p750 = pneg %p119
      $region98: #{egtf_forward.5} parent=87 // pred_check_branch
        %752 = sbr.rel (%p750) target = $region100
      $region99: #{egtf_forward.5} parent=87 // pred_region
        %s753 = smul.u32 4, %s43
        %p754 = scmp.lt.s32.totalorder %s753, 7
        %s755 = scalar_select %p754, %s753, 7
        %s756 = smul.addr %s755, 8
        %s757 = scalar_lea.vmem %s2, %s756
        %s758 = smul.u32 4, %s43
      $region100: #{egtf_forward.5} parent=87 // pred_fallthru
        _
      // Predicated region
      $region101: #{egtf_forward.5} parent=87 // pred_check
        %p759 = pneg %p145
      $region102: #{egtf_forward.5} parent=87 // pred_check_branch
        %761 = sbr.rel (%p759) target = $region104
      $region103: #{egtf_forward.5} parent=87 // pred_region
        %p762 = scmp.lt.s32.totalorder %s43, 1
        %s763 = scalar_select %p762, %s43, 1
        %s764 = scalar_lea.vmem %s3, %s763
      $region104: #{egtf_forward.5} parent=87 // pred_fallthru
        _
      // Predicated region
      $region105: #{egtf_forward.5} parent=87 // pred_check
        %p765 = pneg %p171
      $region106: #{egtf_forward.5} parent=87 // pred_check_branch
        %767 = sbr.rel (%p765) target = $region108
      $region107: #{egtf_forward.5} parent=87 // pred_region
        %p768 = scmp.lt.s32.totalorder %s42, 1
        %s769 = scalar_select %p768, %s42, 1
        %s770 = smul.addr %s769, 8
        %s771 = scalar_lea.vmem %s4, %s770
      $region108: #{egtf_forward.5} parent=87 // pred_fallthru
        _
      // Predicated region
      $region109: #{egtf_forward.5} parent=87 // pred_check
        %p772 = pneg %p197
      $region110: #{egtf_forward.5} parent=87 // pred_check_branch
        %774 = sbr.rel (%p772) target = $region112
      $region111: #{egtf_forward.5} parent=87 // pred_region
        %p775 = scmp.lt.s32.totalorder %s42, 1
        %s776 = scalar_select %p775, %s42, 1
        %s777 = smul.addr %s776, 8
        %s778 = scalar_lea.vmem %s5, %s777
      $region112: #{egtf_forward.5} parent=87 // pred_fallthru
        _
      // Predicated region
      $region113: #{egtf_forward.5} parent=87 // pred_check
        %p779 = pneg %p223
      $region114: #{egtf_forward.5} parent=87 // pred_check_branch
        %781 = sbr.rel (%p779) target = $region116
      $region115: #{egtf_forward.5} parent=87 // pred_region
        %p782 = scmp.lt.s32.totalorder %s42, 1
        %s783 = scalar_select %p782, %s42, 1
        %s784 = smul.addr %s783, 8
        %s785 = scalar_lea.vmem %s6, %s784
      $region116: #{egtf_forward.5} parent=87 // pred_fallthru
        _
    $region88: #{egtf_forward.5} parent=5 // pred_fallthru
      _
    %p786 = scmp.le.s32.totalorder 1, %s35
    %p787 = scmp.lt.s32.totalorder %s35, 5
    %p788 = pnand %p786, %p787
    %p789 = pneg %p788
    // Predicated region
    $region117: #{egtf_forward.5} parent=5 // pred_check
      _
    $region118: #{egtf_forward.5} parent=5 // pred_check_branch
      %791 = sbr.rel (%p788) target = $region120
    $region119: #{egtf_forward.5} parent=5 // pred_region
      %s792 = ssub.s32 %s35, 1
      %s793 = smul.u32 4, %s45
      %p794 = scmp.lt.s32.totalorder %s793, 7
      %s795 = scalar_select %p794, %s793, 7
      %s796 = smul.addr %s795, 8
      %s797 = scalar_lea.vmem %s0, %s796
      %p798 = pneg %p73
      %p799 = pneg %p70
      %s800 = smul.u32 4, %s45
      %p801 = scmp.lt.s32.totalorder %s800, 7
      %s802 = scalar_select %p801, %s800, 7
      %s803 = smul.addr %s802, 8
      %s804 = scalar_lea.vmem %s1, %s803
      %p805 = pneg %p99
      %p806 = pneg %p96
      %s807 = smul.u32 4, %s45
      %p808 = scmp.lt.s32.totalorder %s807, 7
      %s809 = scalar_select %p808, %s807, 7
      %s810 = smul.addr %s809, 8
      %s811 = scalar_lea.vmem %s2, %s810
      %p812 = pneg %p125
      %p813 = pneg %p122
      %p814 = scmp.lt.s32.totalorder %s45, 1
      %s815 = scalar_select %p814, %s45, 1
      %s816 = scalar_lea.vmem %s3, %s815
      %p817 = pneg %p151
      %p818 = pneg %p148
      %p819 = scmp.lt.s32.totalorder %s44, 1
      %s820 = scalar_select %p819, %s44, 1
      %s821 = smul.addr %s820, 8
      %s822 = scalar_lea.vmem %s4, %s821
      %p823 = pneg %p177
      %p824 = pneg %p174
      %p825 = scmp.lt.s32.totalorder %s44, 1
      %s826 = scalar_select %p825, %s44, 1
      %s827 = smul.addr %s826, 8
      %s828 = scalar_lea.vmem %s5, %s827
      %p829 = pneg %p203
      %p830 = pneg %p200
      %p831 = scmp.lt.s32.totalorder %s44, 1
      %s832 = scalar_select %p831, %s44, 1
      %s833 = smul.addr %s832, 8
      %s834 = scalar_lea.vmem %s6, %s833
      %p835 = pneg %p229
      %p836 = pneg %p226
      %p837 = pneg %p250
      %p838 = pneg %p247
      %p839 = pneg %p271
      %p840 = pneg %p268
      %p841 = pneg %p292
      %p842 = pneg %p289
      %p843 = pneg %p313
      %p844 = pneg %p310
      %p845 = pneg %p334
      %p846 = pneg %p331
      %p847 = pneg %p355
      %p848 = pneg %p352
      %p849 = pneg %p376
      %p850 = pneg %p373
      %p851 = pneg %p397
      %p852 = pneg %p394
      %p853 = pneg %p418
      %p854 = pneg %p415
      %p855 = pneg %p439
      %p856 = pneg %p436
      %p857 = pneg %p460
      %p858 = pneg %p457
      %p859 = pneg %p481
      %p860 = pneg %p478
      %p861 = pneg %p502
      %p862 = pneg %p499
      %p863 = pneg %p523
      %p864 = pneg %p520
      %p865 = pneg %p544
      %p866 = pneg %p541
      %p867 = pneg %p565
      %p868 = pneg %p562
      %p869 = pneg %p586
      %p870 = pneg %p583
      %p871 = pneg %p607
      %p872 = pneg %p604
      %p873 = pneg %p633
      %p874 = pneg %p630
      %p875 = scmp.lt.s32.totalorder %s44, 1
      %s876 = scalar_select %p875, %s44, 1
      %s877 = smul.addr %s876, 8
      %s878 = scalar_lea.vmem %s25, %s877
      %p879 = pneg %p659
      %p880 = pneg %p656
      %p881 = scmp.lt.s32.totalorder %s44, 1
      %s882 = scalar_select %p881, %s44, 1
      %s883 = smul.addr %s882, 8
      %s884 = scalar_lea.vmem %s26, %s883
      %s885 = smul.u32 4, %s45
      %p886 = scmp.lt.s32.totalorder %s885, 7
      %s887 = scalar_select %p886, %s885, 7
      %s888 = smul.addr %s887, 8
      %s889 = scalar_lea.vmem %s0, %s888
      %s890 = smul.u32 4, %s45
      %s891 = smul.u32 4, %s45
      %p892 = scmp.lt.s32.totalorder %s891, 7
      %s893 = scalar_select %p892, %s891, 7
      %s894 = smul.addr %s893, 8
      %s895 = scalar_lea.vmem %s1, %s894
      %s896 = smul.u32 4, %s45
      %s897 = smul.u32 4, %s45
      %p898 = scmp.lt.s32.totalorder %s897, 7
      %s899 = scalar_select %p898, %s897, 7
      %s900 = smul.addr %s899, 8
      %s901 = scalar_lea.vmem %s2, %s900
      %s902 = smul.u32 4, %s45
      %p903 = scmp.lt.s32.totalorder %s45, 1
      %s904 = scalar_select %p903, %s45, 1
      %s905 = scalar_lea.vmem %s3, %s904
      %p906 = scmp.lt.s32.totalorder %s44, 1
      %s907 = scalar_select %p906, %s44, 1
      %s908 = smul.addr %s907, 8
      %s909 = scalar_lea.vmem %s4, %s908
      %p910 = scmp.lt.s32.totalorder %s44, 1
      %s911 = scalar_select %p910, %s44, 1
      %s912 = smul.addr %s911, 8
      %s913 = scalar_lea.vmem %s5, %s912
      %p914 = scmp.lt.s32.totalorder %s44, 1
      %s915 = scalar_select %p914, %s44, 1
      %s916 = smul.addr %s915, 8
      %s917 = scalar_lea.vmem %s6, %s916
      %p918 = scmp.lt.s32.totalorder %s44, 1
      %s919 = scalar_select %p918, %s44, 1
      %s920 = smul.addr %s919, 8
      %s921 = scalar_lea.vmem %s25, %s920
      %p922 = scmp.lt.s32.totalorder %s44, 1
      %s923 = scalar_select %p922, %s44, 1
      %s924 = smul.addr %s923, 8
      %s925 = scalar_lea.vmem %s26, %s924
      %p927 = scmp.eq.s32.totalorder %s45, 0
      // Predicated region
      $region121: #{egtf_forward.5} parent=119 // pred_check
        %p928 = pneg %p927
      $region122: #{egtf_forward.5} parent=119 // pred_check_branch
        %930 = sbr.rel (%p928) target = $region124
      $region123: #{egtf_forward.5} parent=119 // pred_region
        %vm931 = vcmask 261120
        %932 = vst.msk [vmem:[#allocation2] sm:$0xff] %vm931, 0.0
        %vm933 = vcmask 23552
        %934 = vst.msk [vmem:[#allocation3] sm:$0xff] %vm933, 0.0
      $region124: #{egtf_forward.5} parent=119 // pred_fallthru
        _
      %v935 = vld [vmem:[%s889] sm:$0xff]
      %v936 = vld [vmem:[%s889 + $0x8] sm:$0xff]
      %v937 = vld [vmem:[%s889 + $0x10] sm:$0xff]
      %v938 = vld [vmem:[%s889 + $0x18] sm:$0xff]
      %v939 = vld [vmem:[%s895] sm:$0xff]
      %v940 = vld [vmem:[%s895 + $0x8] sm:$0xff]
      %v941 = vld [vmem:[%s895 + $0x10] sm:$0xff]
      %v942 = vld [vmem:[%s895 + $0x18] sm:$0xff]
      %v943 = vld [vmem:[%s901] sm:$0xff]
      %v944 = vld [vmem:[%s901 + $0x8] sm:$0xff]
      %v945 = vld [vmem:[%s901 + $0x10] sm:$0xff]
      %v946 = vld [vmem:[%s901 + $0x18] sm:$0xff]
      %v947 = vmul.f32 %v943, %v943
      %v948 = vmul.f32 %v944, %v944
      %v949 = vmul.f32 %v945, %v945
      %v950 = vmul.f32 %v946, %v946
      %vm951 = vcmask 23552
      %v952 = vsel %vm951, %v947, 0.0
      %953 = vadd.xlane.f32.xlu0 %v952
      %v954 = vpop.xlane.xlu0 %953
      %v955 = vsel %vm951, %v948, 0.0
      %956 = vadd.xlane.f32.xlu0 %v955
      %v957 = vpop.xlane.xlu0 %956
      %v958 = vsel %vm951, %v949, 0.0
      %959 = vadd.xlane.f32.xlu0 %v958
      %v960 = vpop.xlane.xlu0 %959
      %v961 = vsel %vm951, %v950, 0.0
      %962 = vadd.xlane.f32.xlu0 %v961
      %v963 = vpop.xlane.xlu0 %962
      %v964 = vadd.f32 %v954, 1e-08
      %v965 = vadd.f32 %v957, 1e-08
      %v966 = vadd.f32 %v960, 1e-08
      %v967 = vadd.f32 %v963, 1e-08
      %v968 = vrsqrt.pop %v964
      %v969 = vmul.f32 %v964, %v968
      %vm970 = vcmp.eq.f32.partialorder %v964, inf
      %v971 = vsel %vm970, %v964, %v969
      %vm972 = vcmp.eq.f32.partialorder %v964, 0.0
      %v973 = vand.u32 %v964, 2147483648
      %v974 = vsel %vm972, %v973, %v971
      %v975 = vrsqrt.pop %v965
      %v976 = vmul.f32 %v965, %v975
      %vm977 = vcmp.eq.f32.partialorder %v965, inf
      %v978 = vsel %vm977, %v965, %v976
      %vm979 = vcmp.eq.f32.partialorder %v965, 0.0
      %v980 = vand.u32 %v965, 2147483648
      %v981 = vsel %vm979, %v980, %v978
      %v982 = vrsqrt.pop %v966
      %v983 = vmul.f32 %v966, %v982
      %vm984 = vcmp.eq.f32.partialorder %v966, inf
      %v985 = vsel %vm984, %v966, %v983
      %vm986 = vcmp.eq.f32.partialorder %v966, 0.0
      %v987 = vand.u32 %v966, 2147483648
      %v988 = vsel %vm986, %v987, %v985
      %v989 = vrsqrt.pop %v967
      %v990 = vmul.f32 %v967, %v989
      %vm991 = vcmp.eq.f32.partialorder %v967, inf
      %v992 = vsel %vm991, %v967, %v990
      %vm993 = vcmp.eq.f32.partialorder %v967, 0.0
      %v994 = vand.u32 %v967, 2147483648
      %v995 = vsel %vm993, %v994, %v992
      %v996 = vld [vmem:[%s24] sm:$0x1]
      %v998 = vlaneseq
      %v999 = vshrl.u32 %v998, 7
      %v1000 = vsub.s32 0, %v999
      %v1001 = vrot.slane %v996, %v1000
      %v1003 = vsub.f32 %v974, %v1001
      %v1004 = vsub.f32 %v981, %v1001
      %v1005 = vsub.f32 %v988, %v1001
      %v1006 = vsub.f32 %v995, %v1001
      %v1007 = vmul.f32 %v1003, -1.125
      %v1008 = vmul.f32 %v1004, -1.125
      %v1009 = vmul.f32 %v1005, -1.125
      %v1010 = vmul.f32 %v1006, -1.125
      %v1011 = vmul.f32 %v1007, %v1003
      %v1012 = vmul.f32 %v1008, %v1004
      %v1013 = vmul.f32 %v1009, %v1005
      %v1014 = vmul.f32 %v1010, %v1006
      %v1015 = vmul.f32 %v1011, 1.442695
      %v1016 = vpow.pop %v1015
      %v1017 = vmul.f32 %v1012, 1.442695
      %v1018 = vpow.pop %v1017
      %v1019 = vmul.f32 %v1013, 1.442695
      %v1020 = vpow.pop %v1019
      %v1021 = vmul.f32 %v1014, 1.442695
      %v1022 = vpow.pop %v1021
      %v1023 = vld [vmem:[%s7] sm:$0xff]
      %v1024 = vld [vmem:[%s7 + $0x8] sm:$0xff]
      %v1025 = vld [vmem:[%s7 + $0x10] sm:$0xff]
      %v1026 = vld [vmem:[%s7 + $0x18] sm:$0xff]
      %v1027 = vpack.c.bf16 %v936, %v935
      %v1028 = vpack.c.bf16 %v938, %v937
      %v1029 = vpack.c.bf16 %v1024, %v1023
      %v1030 = vpack.c.bf16 %v1026, %v1025
      %v1031 = vld [vmem:[%s8] sm:$0xff]
      %v1032 = vld [vmem:[%s8 + $0x8] sm:$0xff]
      %v1033 = vld [vmem:[%s8 + $0x10] sm:$0xff]
      %v1034 = vld [vmem:[%s8 + $0x18] sm:$0xff]
      %v1035 = vpack.c.bf16 %v940, %v939
      %v1036 = vpack.c.bf16 %v942, %v941
      %v1037 = vpack.c.bf16 %v1032, %v1031
      %v1038 = vpack.c.bf16 %v1034, %v1033
      %vm1039 = vcmask 261120
      %v1041 = vsel %vm1039, %v1035, 0
      %v1044 = vsel %vm1039, %v1036, 0
      %1046 = vmatprep.subr.bf16.mxu0 0
      %1047 = vmatpush1.bf16.msra.mxu0 %v1037
      %1048 = vmatprep.subr.bf16.mxu0 0
      %1049 = vmatpush1.bf16.msra.mxu0 %v1038
      %1050 = vmatprep.subr.bf16.mxu0 0
      %1051 = vmatpush1.bf16.msra.mxu0 0
      %1052 = vmatprep.subr.bf16.mxu0 0
      %1053 = vmatpush1.bf16.msra.mxu0 0
      %1054 = vmatprep.subr.bf16.mxu0 0
      %1055 = vmatpush1.bf16.msra.mxu0 0
      %1056 = vmatprep.subr.bf16.mxu0 0
      %1057 = vmatpush1.bf16.msra.mxu0 0
      %1058 = vmatprep.subr.bf16.mxu0 0
      %1059 = vmatpush1.bf16.msra.mxu0 0
      %1060 = vmatprep.subr.bf16.mxu0 0
      %1061 = vmatpush1.bf16.msra.mxu0 0
      %1062 = vmatprep.subr.bf16.mxu0 0
      %1063 = vmatpush1.bf16.msra.mxu0 0
      %1064 = vmatprep.subr.bf16.mxu0 0
      %1065 = vmatpush1.bf16.msra.mxu0 0
      %1066 = vmatprep.subr.bf16.mxu0 0
      %1067 = vmatpush1.bf16.msra.mxu0 0
      %1068 = vmatprep.subr.bf16.mxu0 0
      %1069 = vmatpush1.bf16.msra.mxu0 0
      %1070 = vmatprep.subr.bf16.mxu0 0
      %1071 = vmatpush1.bf16.msra.mxu0 0
      %1072 = vmatprep.subr.bf16.mxu0 0
      %1073 = vmatpush1.bf16.msra.mxu0 0
      %1074 = vmatprep.subr.bf16.mxu0 0
      %1075 = vmatpush1.bf16.msra.mxu0 0
      %1076 = vmatprep.subr.bf16.mxu0 0
      %1077 = vmatpush1.bf16.msra.mxu0 0
      %1078 = vmatprep.mubr.bf16.mxu0 0
      %1079 = vmatmul.mubr.bf16.gmra.mrb[0].mxu0 %v1041
      %v1080 = vpop.f32.mrb[0].mxu0
      %v1081 = vadd.f32 0.0, %v1080
      %v1082 = vpop.f32.mrb[0].mxu0
      %v1083 = vpop.f32.mrb[0].mxu0
      %v1084 = vadd.f32 0.0, %v1083
      %v1085 = vpop.f32.mrb[0].mxu0
      %1086 = vmatprep.mubr.bf16.mxu0 0
      %1087 = vmatmul.mubr.bf16.gmra.mrb[0].mxu0 %v1044
      %v1088 = vpop.f32.mrb[0].mxu0
      %v1089 = vadd.f32 0.0, %v1088
      %v1090 = vpop.f32.mrb[0].mxu0
      %v1091 = vpop.f32.mrb[0].mxu0
      %v1092 = vadd.f32 0.0, %v1091
      %v1093 = vpop.f32.mrb[0].mxu0
      %1094 = vdwg.mxu0
      %v1096 = vsel %vm1039, %v1027, 0
      %v1099 = vsel %vm1039, %v1028, 0
      %1101 = vmatprep.subr.bf16.mxu0 0
      %1102 = vmatpush1.bf16.msra.mxu0 %v1029
      %1103 = vmatprep.subr.bf16.mxu0 0
      %1104 = vmatpush1.bf16.msra.mxu0 %v1030
      %1105 = vmatprep.subr.bf16.mxu0 0
      %1106 = vmatpush1.bf16.msra.mxu0 0
      %1107 = vmatprep.subr.bf16.mxu0 0
      %1108 = vmatpush1.bf16.msra.mxu0 0
      %1109 = vmatprep.subr.bf16.mxu0 0
      %1110 = vmatpush1.bf16.msra.mxu0 0
      %1111 = vmatprep.subr.bf16.mxu0 0
      %1112 = vmatpush1.bf16.msra.mxu0 0
      %1113 = vmatprep.subr.bf16.mxu0 0
      %1114 = vmatpush1.bf16.msra.mxu0 0
      %1115 = vmatprep.subr.bf16.mxu0 0
      %1116 = vmatpush1.bf16.msra.mxu0 0
      %1117 = vmatprep.subr.bf16.mxu0 0
      %1118 = vmatpush1.bf16.msra.mxu0 0
      %1119 = vmatprep.subr.bf16.mxu0 0
      %1120 = vmatpush1.bf16.msra.mxu0 0
      %1121 = vmatprep.subr.bf16.mxu0 0
      %1122 = vmatpush1.bf16.msra.mxu0 0
      %1123 = vmatprep.subr.bf16.mxu0 0
      %1124 = vmatpush1.bf16.msra.mxu0 0
      %1125 = vmatprep.subr.bf16.mxu0 0
      %1126 = vmatpush1.bf16.msra.mxu0 0
      %1127 = vmatprep.subr.bf16.mxu0 0
      %1128 = vmatpush1.bf16.msra.mxu0 0
      %1129 = vmatprep.subr.bf16.mxu0 0
      %1130 = vmatpush1.bf16.msra.mxu0 0
      %1131 = vmatprep.subr.bf16.mxu0 0
      %1132 = vmatpush1.bf16.msra.mxu0 0
      %1133 = vmatprep.mubr.bf16.mxu0 0
      %1134 = vmatmul.mubr.bf16.gmra.mrb[0].mxu0 %v1096
      %v1135 = vpop.f32.mrb[0].mxu0
      %v1136 = vadd.f32 %v1081, %v1135
      %v1137 = vpop.f32.mrb[0].mxu0
      %v1138 = vpop.f32.mrb[0].mxu0
      %v1139 = vadd.f32 %v1084, %v1138
      %v1140 = vpop.f32.mrb[0].mxu0
      %1141 = vmatprep.mubr.bf16.mxu0 0
      %1142 = vmatmul.mubr.bf16.gmra.mrb[0].mxu0 %v1099
      %v1143 = vpop.f32.mrb[0].mxu0
      %v1144 = vadd.f32 %v1089, %v1143
      %v1145 = vpop.f32.mrb[0].mxu0
      %v1146 = vpop.f32.mrb[0].mxu0
      %v1147 = vadd.f32 %v1092, %v1146
      %v1148 = vpop.f32.mrb[0].mxu0
      %1149 = vdwg.mxu0
      %v1150 = vld [vmem:[%s9] sm:$0xff]
      %v1151 = vld [vmem:[%s9 + $0x8] sm:$0xff]
      %v1152 = vpack.c.bf16 %v1018, %v1016
      %v1153 = vpack.c.bf16 %v1022, %v1020
      %v1154 = vpack.c.bf16 %v1151, %v1150
      %vm1155 = vcmask 130048
      %v1157 = vsel %vm1155, %v1152, 0
      %v1160 = vsel %vm1155, %v1153, 0
      %1162 = vmatprep.subr.bf16.mxu0 0
      %1163 = vmatpush1.bf16.msra.mxu0 %v1154
      %1164 = vmatprep.subr.bf16.mxu0 0
      %1165 = vmatpush1.bf16.msra.mxu0 0
      %1166 = vmatprep.subr.bf16.mxu0 0
      %1167 = vmatpush1.bf16.msra.mxu0 0
      %1168 = vmatprep.subr.bf16.mxu0 0
      %1169 = vmatpush1.bf16.msra.mxu0 0
      %1170 = vmatprep.subr.bf16.mxu0 0
      %1171 = vmatpush1.bf16.msra.mxu0 0
      %1172 = vmatprep.subr.bf16.mxu0 0
      %1173 = vmatpush1.bf16.msra.mxu0 0
      %1174 = vmatprep.subr.bf16.mxu0 0
      %1175 = vmatpush1.bf16.msra.mxu0 0
      %1176 = vmatprep.subr.bf16.mxu0 0
      %1177 = vmatpush1.bf16.msra.mxu0 0
      %1178 = vmatprep.subr.bf16.mxu0 0
      %1179 = vmatpush1.bf16.msra.mxu0 0
      %1180 = vmatprep.subr.bf16.mxu0 0
      %1181 = vmatpush1.bf16.msra.mxu0 0
      %1182 = vmatprep.subr.bf16.mxu0 0
      %1183 = vmatpush1.bf16.msra.mxu0 0
      %1184 = vmatprep.subr.bf16.mxu0 0
      %1185 = vmatpush1.bf16.msra.mxu0 0
      %1186 = vmatprep.subr.bf16.mxu0 0
      %1187 = vmatpush1.bf16.msra.mxu0 0
      %1188 = vmatprep.subr.bf16.mxu0 0
      %1189 = vmatpush1.bf16.msra.mxu0 0
      %1190 = vmatprep.subr.bf16.mxu0 0
      %1191 = vmatpush1.bf16.msra.mxu0 0
      %1192 = vmatprep.subr.bf16.mxu0 0
      %1193 = vmatpush1.bf16.msra.mxu0 0
      %1194 = vmatprep.mubr.bf16.mxu0 0
      %1195 = vmatmul.mubr.bf16.gmra.mrb[0].mxu0 %v1157
      %v1196 = vpop.f32.mrb[0].mxu0
      %v1197 = vadd.f32 0.0, %v1196
      %v1198 = vpop.f32.mrb[0].mxu0
      %v1199 = vpop.f32.mrb[0].mxu0
      %v1200 = vadd.f32 0.0, %v1199
      %v1201 = vpop.f32.mrb[0].mxu0
      %1202 = vmatprep.mubr.bf16.mxu0 0
      %1203 = vmatmul.mubr.bf16.gmra.mrb[0].mxu0 %v1160
      %v1204 = vpop.f32.mrb[0].mxu0
      %v1205 = vadd.f32 0.0, %v1204
      %v1206 = vpop.f32.mrb[0].mxu0
      %v1207 = vpop.f32.mrb[0].mxu0
      %v1208 = vadd.f32 0.0, %v1207
      %v1209 = vpop.f32.mrb[0].mxu0
      %1210 = vdwg.mxu0
      %v1211 = vadd.f32 %v1136, %v1197
      %v1212 = vadd.f32 %v1139, %v1200
      %v1213 = vadd.f32 %v1144, %v1205
      %v1214 = vadd.f32 %v1147, %v1208
      %v1215 = vld [vmem:[%s10] sm:$0xf]
      %v1216 = vpack.c.bf16 %v944, %v943
      %v1217 = vpack.c.bf16 %v946, %v945
      %v1218 = vpack.c.bf16 %v1215, %v1215
      %1221 = vrot.lane.b32.xlu0 %v1216, 125
      %v1222 = vpop.permute.xlu0 %1221
      %1223 = vrot.lane.b32.xlu0 %v1217, 125
      %v1224 = vpop.permute.xlu0 %1223
      %vm1225 = vcmask 31744
      %v1227 = vsel %vm1225, %v1222, 0
      %v1230 = vsel %vm1225, %v1224, 0
      %vm1232 = vcmask 1041408
      %v1234 = vsel %vm1232, %v1218, 0
      %1236 = vmatprep.subr.bf16.mxu0 0
      %1237 = vmatpush1.bf16.msra.mxu0 %v1234
      %1238 = vmatprep.subr.bf16.mxu0 0
      %1239 = vmatpush1.bf16.msra.mxu0 0
      %1240 = vmatprep.subr.bf16.mxu0 0
      %1241 = vmatpush1.bf16.msra.mxu0 0
      %1242 = vmatprep.subr.bf16.mxu0 0
      %1243 = vmatpush1.bf16.msra.mxu0 0
      %1244 = vmatprep.subr.bf16.mxu0 0
      %1245 = vmatpush1.bf16.msra.mxu0 0
      %1246 = vmatprep.subr.bf16.mxu0 0
      %1247 = vmatpush1.bf16.msra.mxu0 0
      %1248 = vmatprep.subr.bf16.mxu0 0
      %1249 = vmatpush1.bf16.msra.mxu0 0
      %1250 = vmatprep.subr.bf16.mxu0 0
      %1251 = vmatpush1.bf16.msra.mxu0 0
      %1252 = vmatprep.subr.bf16.mxu0 0
      %1253 = vmatpush1.bf16.msra.mxu0 0
      %1254 = vmatprep.subr.bf16.mxu0 0
      %1255 = vmatpush1.bf16.msra.mxu0 0
      %1256 = vmatprep.subr.bf16.mxu0 0
      %1257 = vmatpush1.bf16.msra.mxu0 0
      %1258 = vmatprep.subr.bf16.mxu0 0
      %1259 = vmatpush1.bf16.msra.mxu0 0
      %1260 = vmatprep.subr.bf16.mxu0 0
      %1261 = vmatpush1.bf16.msra.mxu0 0
      %1262 = vmatprep.subr.bf16.mxu0 0
      %1263 = vmatpush1.bf16.msra.mxu0 0
      %1264 = vmatprep.subr.bf16.mxu0 0
      %1265 = vmatpush1.bf16.msra.mxu0 0
      %1266 = vmatprep.subr.bf16.mxu0 0
      %1267 = vmatpush1.bf16.msra.mxu0 0
      %1268 = vmatprep.mubr.bf16.mxu0 0
      %1269 = vmatmul.mubr.bf16.gmra.mrb[0].mxu0 %v1227
      %v1270 = vpop.f32.mrb[0].mxu0
      %v1271 = vadd.f32 0.0, %v1270
      %v1272 = vpop.f32.mrb[0].mxu0
      %v1273 = vpop.f32.mrb[0].mxu0
      %v1274 = vadd.f32 0.0, %v1273
      %v1275 = vpop.f32.mrb[0].mxu0
      %1276 = vmatprep.mubr.bf16.mxu0 0
      %1277 = vmatmul.mubr.bf16.gmra.mrb[0].mxu0 %v1230
      %v1278 = vpop.f32.mrb[0].mxu0
      %v1279 = vadd.f32 0.0, %v1278
      %v1280 = vpop.f32.mrb[0].mxu0
      %v1281 = vpop.f32.mrb[0].mxu0
      %v1282 = vadd.f32 0.0, %v1281
      %v1283 = vpop.f32.mrb[0].mxu0
      %1284 = vdwg.mxu0
      %v1285 = vadd.f32 %v1211, %v1271
      %v1286 = vadd.f32 %v1212, %v1274
      %v1287 = vadd.f32 %v1213, %v1279
      %v1288 = vadd.f32 %v1214, %v1282
      %v1289 = vld [vmem:[%s11] sm:$0x1]
      %v1291 = vlaneseq
      %v1292 = vshrl.u32 %v1291, 7
      %v1293 = vsub.s32 0, %v1292
      %v1294 = vrot.slane %v1289, %v1293
      %v1296 = vadd.f32 %v1285, %v1294
      %v1297 = vadd.f32 %v1286, %v1294
      %v1298 = vadd.f32 %v1287, %v1294
      %v1299 = vadd.f32 %v1288, %v1294
      %v1300 = vxor.u32 %v1296, 2147483648
      %v1301 = vxor.u32 %v1297, 2147483648
      %v1302 = vxor.u32 %v1298, 2147483648
      %v1303 = vxor.u32 %v1299, 2147483648
      %v1304 = vmul.f32 %v1300, 1.442695
      %v1305 = vpow.pop %v1304
      %v1306 = vmul.f32 %v1301, 1.442695
      %v1307 = vpow.pop %v1306
      %v1308 = vmul.f32 %v1302, 1.442695
      %v1309 = vpow.pop %v1308
      %v1310 = vmul.f32 %v1303, 1.442695
      %v1311 = vpow.pop %v1310
      %v1312 = vadd.f32 %v1305, 1.0
      %v1313 = vadd.f32 %v1307, 1.0
      %v1314 = vadd.f32 %v1309, 1.0
      %v1315 = vadd.f32 %v1311, 1.0
      %v1316 = vrcp.pop %v1312
      %v1317 = vmul.f32 1.0, %v1316
      %v1318 = vrcp.pop %v1313
      %v1319 = vmul.f32 1.0, %v1318
      %v1320 = vrcp.pop %v1314
      %v1321 = vmul.f32 1.0, %v1320
      %v1322 = vrcp.pop %v1315
      %v1323 = vmul.f32 1.0, %v1322
      %v1324 = vmul.f32 %v1296, %v1317
      %v1325 = vmul.f32 %v1297, %v1319
      %v1326 = vmul.f32 %v1298, %v1321
      %v1327 = vmul.f32 %v1299, %v1323
      %v1328 = vld [vmem:[%s12] sm:$0xff]
      %v1329 = vld [vmem:[%s12 + $0x8] sm:$0xff]
      %v1330 = vld [vmem:[%s12 + $0x10] sm:$0xff]
      %v1331 = vld [vmem:[%s12 + $0x18] sm:$0xff]
      %v1332 = vpack.c.bf16 %v1325, %v1324
      %v1333 = vpack.c.bf16 %v1327, %v1326
      %v1334 = vpack.c.bf16 %v1329, %v1328
      %v1335 = vpack.c.bf16 %v1331, %v1330
      %v1336 = vld [vmem:[%s13] sm:$0x1]
      %v1338 = vlaneseq
      %v1339 = vshrl.u32 %v1338, 7
      %v1340 = vsub.s32 0, %v1339
      %v1341 = vrot.slane %v1336, %v1340
      %v1344 = vsel %vm1039, %v1332, 0
      %v1347 = vsel %vm1039, %v1333, 0
      %1349 = vmatprep.subr.bf16.mxu0 0
      %1350 = vmatpush1.bf16.msra.mxu0 %v1334
      %1351 = vmatprep.subr.bf16.mxu0 0
      %1352 = vmatpush1.bf16.msra.mxu0 %v1335
      %1353 = vmatprep.subr.bf16.mxu0 0
      %1354 = vmatpush1.bf16.msra.mxu0 0
      %1355 = vmatprep.subr.bf16.mxu0 0
      %1356 = vmatpush1.bf16.msra.mxu0 0
      %1357 = vmatprep.subr.bf16.mxu0 0
      %1358 = vmatpush1.bf16.msra.mxu0 0
      %1359 = vmatprep.subr.bf16.mxu0 0
      %1360 = vmatpush1.bf16.msra.mxu0 0
      %1361 = vmatprep.subr.bf16.mxu0 0
      %1362 = vmatpush1.bf16.msra.mxu0 0
      %1363 = vmatprep.subr.bf16.mxu0 0
      %1364 = vmatpush1.bf16.msra.mxu0 0
      %1365 = vmatprep.subr.bf16.mxu0 0
      %1366 = vmatpush1.bf16.msra.mxu0 0
      %1367 = vmatprep.subr.bf16.mxu0 0
      %1368 = vmatpush1.bf16.msra.mxu0 0
      %1369 = vmatprep.subr.bf16.mxu0 0
      %1370 = vmatpush1.bf16.msra.mxu0 0
      %1371 = vmatprep.subr.bf16.mxu0 0
      %1372 = vmatpush1.bf16.msra.mxu0 0
      %1373 = vmatprep.subr.bf16.mxu0 0
      %1374 = vmatpush1.bf16.msra.mxu0 0
      %1375 = vmatprep.subr.bf16.mxu0 0
      %1376 = vmatpush1.bf16.msra.mxu0 0
      %1377 = vmatprep.subr.bf16.mxu0 0
      %1378 = vmatpush1.bf16.msra.mxu0 0
      %1379 = vmatprep.subr.bf16.mxu0 0
      %1380 = vmatpush1.bf16.msra.mxu0 0
      %1381 = vmatprep.mubr.bf16.mxu0 0
      %1382 = vmatmul.mubr.bf16.gmra.mrb[0].mxu0 %v1344
      %v1383 = vpop.f32.mrb[0].mxu0
      %v1384 = vadd.f32 %v1341, %v1383
      %v1385 = vpop.f32.mrb[0].mxu0
      %v1386 = vpop.f32.mrb[0].mxu0
      %v1387 = vadd.f32 %v1341, %v1386
      %v1388 = vpop.f32.mrb[0].mxu0
      %1389 = vmatprep.mubr.bf16.mxu0 0
      %1390 = vmatmul.mubr.bf16.gmra.mrb[0].mxu0 %v1347
      %v1391 = vpop.f32.mrb[0].mxu0
      %v1392 = vadd.f32 %v1341, %v1391
      %v1393 = vpop.f32.mrb[0].mxu0
      %v1394 = vpop.f32.mrb[0].mxu0
      %v1395 = vadd.f32 %v1341, %v1394
      %v1396 = vpop.f32.mrb[0].mxu0
      %1397 = vdwg.mxu0
      %v1398 = vxor.u32 %v1384, 2147483648
      %v1399 = vxor.u32 %v1387, 2147483648
      %v1400 = vxor.u32 %v1392, 2147483648
      %v1401 = vxor.u32 %v1395, 2147483648
      %v1402 = vmul.f32 %v1398, 1.442695
      %v1403 = vpow.pop %v1402
      %v1404 = vmul.f32 %v1399, 1.442695
      %v1405 = vpow.pop %v1404
      %v1406 = vmul.f32 %v1400, 1.442695
      %v1407 = vpow.pop %v1406
      %v1408 = vmul.f32 %v1401, 1.442695
      %v1409 = vpow.pop %v1408
      %v1410 = vadd.f32 %v1403, 1.0
      %v1411 = vadd.f32 %v1405, 1.0
      %v1412 = vadd.f32 %v1407, 1.0
      %v1413 = vadd.f32 %v1409, 1.0
      %v1414 = vrcp.pop %v1410
      %v1415 = vmul.f32 1.0, %v1414
      %v1416 = vrcp.pop %v1411
      %v1417 = vmul.f32 1.0, %v1416
      %v1418 = vrcp.pop %v1412
      %v1419 = vmul.f32 1.0, %v1418
      %v1420 = vrcp.pop %v1413
      %v1421 = vmul.f32 1.0, %v1420
      %v1422 = vmul.f32 %v1384, %v1415
      %v1423 = vmul.f32 %v1387, %v1417
      %v1424 = vmul.f32 %v1392, %v1419
      %v1425 = vmul.f32 %v1395, %v1421
      %v1426 = vld [vmem:[%s14] sm:$0xff]
      %v1427 = vld [vmem:[%s14 + $0x8] sm:$0xff]
      %v1428 = vld [vmem:[%s14 + $0x10] sm:$0xff]
      %v1429 = vld [vmem:[%s14 + $0x18] sm:$0xff]
      %v1430 = vpack.c.bf16 %v1423, %v1422
      %v1431 = vpack.c.bf16 %v1425, %v1424
      %v1432 = vpack.c.bf16 %v1427, %v1426
      %v1433 = vpack.c.bf16 %v1429, %v1428
      %v1434 = vld [vmem:[#allocation4] sm:$0x1]
      %v1436 = vlaneseq
      %v1437 = vshrl.u32 %v1436, 7
      %v1438 = vsub.s32 0, %v1437
      %v1439 = vrot.slane %v1434, %v1438
      %v1442 = vsel %vm1039, %v1430, 0
      %v1445 = vsel %vm1039, %v1431, 0
      %1447 = vmatprep.subr.bf16.mxu0 0
      %1448 = vmatpush1.bf16.msra.mxu0 %v1432
      %1449 = vmatprep.subr.bf16.mxu0 0
      %1450 = vmatpush1.bf16.msra.mxu0 %v1433
      %1451 = vmatprep.subr.bf16.mxu0 0
      %1452 = vmatpush1.bf16.msra.mxu0 0
      %1453 = vmatprep.subr.bf16.mxu0 0
      %1454 = vmatpush1.bf16.msra.mxu0 0
      %1455 = vmatprep.subr.bf16.mxu0 0
      %1456 = vmatpush1.bf16.msra.mxu0 0
      %1457 = vmatprep.subr.bf16.mxu0 0
      %1458 = vmatpush1.bf16.msra.mxu0 0
      %1459 = vmatprep.subr.bf16.mxu0 0
      %1460 = vmatpush1.bf16.msra.mxu0 0
      %1461 = vmatprep.subr.bf16.mxu0 0
      %1462 = vmatpush1.bf16.msra.mxu0 0
      %1463 = vmatprep.subr.bf16.mxu0 0
      %1464 = vmatpush1.bf16.msra.mxu0 0
      %1465 = vmatprep.subr.bf16.mxu0 0
      %1466 = vmatpush1.bf16.msra.mxu0 0
      %1467 = vmatprep.subr.bf16.mxu0 0
      %1468 = vmatpush1.bf16.msra.mxu0 0
      %1469 = vmatprep.subr.bf16.mxu0 0
      %1470 = vmatpush1.bf16.msra.mxu0 0
      %1471 = vmatprep.subr.bf16.mxu0 0
      %1472 = vmatpush1.bf16.msra.mxu0 0
      %1473 = vmatprep.subr.bf16.mxu0 0
      %1474 = vmatpush1.bf16.msra.mxu0 0
      %1475 = vmatprep.subr.bf16.mxu0 0
      %1476 = vmatpush1.bf16.msra.mxu0 0
      %1477 = vmatprep.subr.bf16.mxu0 0
      %1478 = vmatpush1.bf16.msra.mxu0 0
      %1479 = vmatprep.mubr.bf16.mxu0 0
      %1480 = vmatmul.mubr.bf16.gmra.mrb[0].mxu0 %v1442
      %v1481 = vpop.f32.mrb[0].mxu0
      %v1482 = vadd.f32 %v1439, %v1481
      %v1483 = vpop.f32.mrb[0].mxu0
      %v1484 = vpop.f32.mrb[0].mxu0
      %v1485 = vadd.f32 %v1439, %v1484
      %v1486 = vpop.f32.mrb[0].mxu0
      %1487 = vmatprep.mubr.bf16.mxu0 0
      %1488 = vmatmul.mubr.bf16.gmra.mrb[0].mxu0 %v1445
      %v1489 = vpop.f32.mrb[0].mxu0
      %v1490 = vadd.f32 %v1439, %v1489
      %v1491 = vpop.f32.mrb[0].mxu0
      %v1492 = vpop.f32.mrb[0].mxu0
      %v1493 = vadd.f32 %v1439, %v1492
      %v1494 = vpop.f32.mrb[0].mxu0
      %1495 = vdwg.mxu0
      %v1496 = vxor.u32 %v1482, 2147483648
      %v1497 = vxor.u32 %v1485, 2147483648
      %v1498 = vxor.u32 %v1490, 2147483648
      %v1499 = vxor.u32 %v1493, 2147483648
      %v1500 = vmul.f32 %v1496, 1.442695
      %v1501 = vpow.pop %v1500
      %v1502 = vmul.f32 %v1497, 1.442695
      %v1503 = vpow.pop %v1502
      %v1504 = vmul.f32 %v1498, 1.442695
      %v1505 = vpow.pop %v1504
      %v1506 = vmul.f32 %v1499, 1.442695
      %v1507 = vpow.pop %v1506
      %v1508 = vadd.f32 %v1501, 1.0
      %v1509 = vadd.f32 %v1503, 1.0
      %v1510 = vadd.f32 %v1505, 1.0
      %v1511 = vadd.f32 %v1507, 1.0
      %v1512 = vrcp.pop %v1508
      %v1513 = vmul.f32 1.0, %v1512
      %v1514 = vrcp.pop %v1509
      %v1515 = vmul.f32 1.0, %v1514
      %v1516 = vrcp.pop %v1510
      %v1517 = vmul.f32 1.0, %v1516
      %v1518 = vrcp.pop %v1511
      %v1519 = vmul.f32 1.0, %v1518
      %v1520 = vld [vmem:[%s16] sm:$0xff]
      %v1521 = vld [vmem:[%s16 + $0x8] sm:$0xff]
      %v1522 = vld [vmem:[%s16 + $0x10] sm:$0xff]
      %v1523 = vld [vmem:[%s16 + $0x18] sm:$0xff]
      %v1524 = vpack.c.bf16 %v1521, %v1520
      %v1525 = vpack.c.bf16 %v1523, %v1522
      %v1526 = vld [vmem:[%s17] sm:$0x1]
      %v1528 = vlaneseq
      %v1529 = vshrl.u32 %v1528, 7
      %v1530 = vsub.s32 0, %v1529
      %v1531 = vrot.slane %v1526, %v1530
      %1533 = vmatprep.subr.bf16.mxu0 0
      %1534 = vmatpush1.bf16.msra.mxu0 %v1524
      %1535 = vmatprep.subr.bf16.mxu0 0
      %1536 = vmatpush1.bf16.msra.mxu0 %v1525
      %1537 = vmatprep.subr.bf16.mxu0 0
      %1538 = vmatpush1.bf16.msra.mxu0 0
      %1539 = vmatprep.subr.bf16.mxu0 0
      %1540 = vmatpush1.bf16.msra.mxu0 0
      %1541 = vmatprep.subr.bf16.mxu0 0
      %1542 = vmatpush1.bf16.msra.mxu0 0
      %1543 = vmatprep.subr.bf16.mxu0 0
      %1544 = vmatpush1.bf16.msra.mxu0 0
      %1545 = vmatprep.subr.bf16.mxu0 0
      %1546 = vmatpush1.bf16.msra.mxu0 0
      %1547 = vmatprep.subr.bf16.mxu0 0
      %1548 = vmatpush1.bf16.msra.mxu0 0
      %1549 = vmatprep.subr.bf16.mxu0 0
      %1550 = vmatpush1.bf16.msra.mxu0 0
      %1551 = vmatprep.subr.bf16.mxu0 0
      %1552 = vmatpush1.bf16.msra.mxu0 0
      %1553 = vmatprep.subr.bf16.mxu0 0
      %1554 = vmatpush1.bf16.msra.mxu0 0
      %1555 = vmatprep.subr.bf16.mxu0 0
      %1556 = vmatpush1.bf16.msra.mxu0 0
      %1557 = vmatprep.subr.bf16.mxu0 0
      %1558 = vmatpush1.bf16.msra.mxu0 0
      %1559 = vmatprep.subr.bf16.mxu0 0
      %1560 = vmatpush1.bf16.msra.mxu0 0
      %1561 = vmatprep.subr.bf16.mxu0 0
      %1562 = vmatpush1.bf16.msra.mxu0 0
      %1563 = vmatprep.subr.bf16.mxu0 0
      %1564 = vmatpush1.bf16.msra.mxu0 0
      %1565 = vmatprep.mubr.bf16.mxu0 0
      %1566 = vmatmul.mubr.bf16.gmra.mrb[0].mxu0 %v1442
      %v1567 = vpop.f32.mrb[0].mxu0
      %v1568 = vadd.f32 %v1531, %v1567
      %v1569 = vpop.f32.mrb[0].mxu0
      %v1570 = vpop.f32.mrb[0].mxu0
      %v1571 = vadd.f32 %v1531, %v1570
      %v1572 = vpop.f32.mrb[0].mxu0
      %1573 = vmatprep.mubr.bf16.mxu0 0
      %1574 = vmatmul.mubr.bf16.gmra.mrb[0].mxu0 %v1445
      %v1575 = vpop.f32.mrb[0].mxu0
      %v1576 = vadd.f32 %v1531, %v1575
      %v1577 = vpop.f32.mrb[0].mxu0
      %v1578 = vpop.f32.mrb[0].mxu0
      %v1579 = vadd.f32 %v1531, %v1578
      %v1580 = vpop.f32.mrb[0].mxu0
      %1581 = vdwg.mxu0
      %v1582 = vxor.u32 %v1568, 2147483648
      %v1583 = vxor.u32 %v1571, 2147483648
      %v1584 = vxor.u32 %v1576, 2147483648
      %v1585 = vxor.u32 %v1579, 2147483648
      %v1586 = vmul.f32 %v1582, 1.442695
      %v1587 = vpow.pop %v1586
      %v1588 = vmul.f32 %v1583, 1.442695
      %v1589 = vpow.pop %v1588
      %v1590 = vmul.f32 %v1584, 1.442695
      %v1591 = vpow.pop %v1590
      %v1592 = vmul.f32 %v1585, 1.442695
      %v1593 = vpow.pop %v1592
      %v1594 = vadd.f32 %v1587, 1.0
      %v1595 = vadd.f32 %v1589, 1.0
      %v1596 = vadd.f32 %v1591, 1.0
      %v1597 = vadd.f32 %v1593, 1.0
      %v1598 = vrcp.pop %v1594
      %v1599 = vmul.f32 1.0, %v1598
      %v1600 = vrcp.pop %v1595
      %v1601 = vmul.f32 1.0, %v1600
      %v1602 = vrcp.pop %v1596
      %v1603 = vmul.f32 1.0, %v1602
      %v1604 = vrcp.pop %v1597
      %v1605 = vmul.f32 1.0, %v1604
      %v1606 = vmul.f32 %v1568, %v1599
      %v1607 = vmul.f32 %v1571, %v1601
      %v1608 = vmul.f32 %v1576, %v1603
      %v1609 = vmul.f32 %v1579, %v1605
      %v1610 = vld [vmem:[%s18] sm:$0xff]
      %v1611 = vld [vmem:[%s18 + $0x8] sm:$0xff]
      %v1612 = vld [vmem:[%s18 + $0x10] sm:$0xff]
      %v1613 = vld [vmem:[%s18 + $0x18] sm:$0xff]
      %v1614 = vpack.c.bf16 %v1607, %v1606
      %v1615 = vpack.c.bf16 %v1609, %v1608
      %v1616 = vpack.c.bf16 %v1611, %v1610
      %v1617 = vpack.c.bf16 %v1613, %v1612
      %v1619 = vsel %vm1039, %v1614, 0
      %v1622 = vsel %vm1039, %v1615, 0
      %1624 = vmatprep.subr.bf16.mxu0 0
      %1625 = vmatpush1.bf16.msra.mxu0 %v1616
      %1626 = vmatprep.subr.bf16.mxu0 0
      %1627 = vmatpush1.bf16.msra.mxu0 %v1617
      %1628 = vmatprep.subr.bf16.mxu0 0
      %1629 = vmatpush1.bf16.msra.mxu0 0
      %1630 = vmatprep.subr.bf16.mxu0 0
      %1631 = vmatpush1.bf16.msra.mxu0 0
      %1632 = vmatprep.subr.bf16.mxu0 0
      %1633 = vmatpush1.bf16.msra.mxu0 0
      %1634 = vmatprep.subr.bf16.mxu0 0
      %1635 = vmatpush1.bf16.msra.mxu0 0
      %1636 = vmatprep.subr.bf16.mxu0 0
      %1637 = vmatpush1.bf16.msra.mxu0 0
      %1638 = vmatprep.subr.bf16.mxu0 0
      %1639 = vmatpush1.bf16.msra.mxu0 0
      %1640 = vmatprep.subr.bf16.mxu0 0
      %1641 = vmatpush1.bf16.msra.mxu0 0
      %1642 = vmatprep.subr.bf16.mxu0 0
      %1643 = vmatpush1.bf16.msra.mxu0 0
      %1644 = vmatprep.subr.bf16.mxu0 0
      %1645 = vmatpush1.bf16.msra.mxu0 0
      %1646 = vmatprep.subr.bf16.mxu0 0
      %1647 = vmatpush1.bf16.msra.mxu0 0
      %1648 = vmatprep.subr.bf16.mxu0 0
      %1649 = vmatpush1.bf16.msra.mxu0 0
      %1650 = vmatprep.subr.bf16.mxu0 0
      %1651 = vmatpush1.bf16.msra.mxu0 0
      %1652 = vmatprep.subr.bf16.mxu0 0
      %1653 = vmatpush1.bf16.msra.mxu0 0
      %1654 = vmatprep.subr.bf16.mxu0 0
      %1655 = vmatpush1.bf16.msra.mxu0 0
      %1656 = vmatprep.mubr.bf16.mxu0 0
      %1657 = vmatmul.mubr.bf16.gmra.mrb[0].mxu0 %v1619
      %v1658 = vpop.f32.mrb[0].mxu0
      %v1659 = vadd.f32 0.0, %v1658
      %v1660 = vpop.f32.mrb[0].mxu0
      %v1661 = vpop.f32.mrb[0].mxu0
      %v1662 = vadd.f32 0.0, %v1661
      %v1663 = vpop.f32.mrb[0].mxu0
      %1664 = vmatprep.mubr.bf16.mxu0 0
      %1665 = vmatmul.mubr.bf16.gmra.mrb[0].mxu0 %v1622
      %v1666 = vpop.f32.mrb[0].mxu0
      %v1667 = vadd.f32 0.0, %v1666
      %v1668 = vpop.f32.mrb[0].mxu0
      %v1669 = vpop.f32.mrb[0].mxu0
      %v1670 = vadd.f32 0.0, %v1669
      %v1671 = vpop.f32.mrb[0].mxu0
      %1672 = vdwg.mxu0
      %v1673 = vtanh.pop %v1659
      %v1674 = vtanh.pop %v1662
      %v1675 = vtanh.pop %v1667
      %v1676 = vtanh.pop %v1670
      %s1677 = smul.u32 %s44, 8
      %v1678 = vlaneseq
      %v1679 = vshrl.u32 %v1678, 7
      %v1680 = vstv %s1677
      %v1681 = vadd.s32 %v1680, %v1679
      %v1682 = vld [vmem:[%s905] sm:$0x1]
      %v1683 = vlaneseq
      %v1684 = vshrl.u32 %v1683, 7
      %v1685 = vsub.s32 0, %v1684
      %v1686 = vrot.slane %v1682, %v1685
      %vm1687 = vcmp.eq.s32.totalorder %v1681, %v1686
      %v1688 = vsel %vm1687, 1, 0
      %v1689 = vcvt.s32.f32 %v1688
      %v1690 = vld [vmem:[#allocation2] sm:$0xff]
      %v1691 = vpack.c.bf16 %v1689, %v1689
      %1693 = vset.pattern.permute.xlu0 0
      %1694 = vperm.xlu0 %1693, %v1513
      %v1695 = vpop.permute.xlu0 %1694
      %1698 = vset.pattern.permute.xlu0 0
      %1699 = vperm.xlu0 %1698, %v1515
      %v1700 = vpop.permute.xlu0 %1699
      %1703 = vset.pattern.permute.xlu0 0
      %1704 = vperm.xlu0 %1703, %v1517
      %v1705 = vpop.permute.xlu0 %1704
      %1708 = vset.pattern.permute.xlu0 0
      %1709 = vperm.xlu0 %1708, %v1519
      %v1710 = vpop.permute.xlu0 %1709
      %v1712 = vmul.f32 %v1422, %v1695
      %v1713 = vmul.f32 %v1423, %v1700
      %v1714 = vmul.f32 %v1424, %v1705
      %v1715 = vmul.f32 %v1425, %v1710
      %v1716 = vpack.c.bf16 %v1713, %v1712
      %v1717 = vpack.c.bf16 %v1715, %v1714
      %v1719 = vsel %vm1039, %v1691, 0
      %1721 = vmatprep.subr.bf16.mxu0 0
      %1722 = vmatpush1.bf16.msra.mxu0 %v1716
      %1723 = vmatprep.subr.bf16.mxu0 0
      %1724 = vmatpush1.bf16.msra.mxu0 %v1717
      %1725 = vmatprep.subr.bf16.mxu0 0
      %1726 = vmatpush1.bf16.msra.mxu0 0
      %1727 = vmatprep.subr.bf16.mxu0 0
      %1728 = vmatpush1.bf16.msra.mxu0 0
      %1729 = vmatprep.subr.bf16.mxu0 0
      %1730 = vmatpush1.bf16.msra.mxu0 0
      %1731 = vmatprep.subr.bf16.mxu0 0
      %1732 = vmatpush1.bf16.msra.mxu0 0
      %1733 = vmatprep.subr.bf16.mxu0 0
      %1734 = vmatpush1.bf16.msra.mxu0 0
      %1735 = vmatprep.subr.bf16.mxu0 0
      %1736 = vmatpush1.bf16.msra.mxu0 0
      %1737 = vmatprep.subr.bf16.mxu0 0
      %1738 = vmatpush1.bf16.msra.mxu0 0
      %1739 = vmatprep.subr.bf16.mxu0 0
      %1740 = vmatpush1.bf16.msra.mxu0 0
      %1741 = vmatprep.subr.bf16.mxu0 0
      %1742 = vmatpush1.bf16.msra.mxu0 0
      %1743 = vmatprep.subr.bf16.mxu0 0
      %1744 = vmatpush1.bf16.msra.mxu0 0
      %1745 = vmatprep.subr.bf16.mxu0 0
      %1746 = vmatpush1.bf16.msra.mxu0 0
      %1747 = vmatprep.subr.bf16.mxu0 0
      %1748 = vmatpush1.bf16.msra.mxu0 0
      %1749 = vmatprep.subr.bf16.mxu0 0
      %1750 = vmatpush1.bf16.msra.mxu0 0
      %1751 = vmatprep.subr.bf16.mxu0 0
      %1752 = vmatpush1.bf16.msra.mxu0 0
      %1753 = vmatprep.mubr.bf16.mxu0 0
      %1754 = vmatmul.mubr.bf16.gmra.mrb[0].mxu0 %v1719
      %v1755 = vpop.f32.mrb[0].mxu0
      %v1756 = vadd.f32 0.0, %v1755
      %v1757 = vpop.f32.mrb[0].mxu0
      %v1758 = vpop.f32.mrb[0].mxu0
      %v1759 = vpop.f32.mrb[0].mxu0
      %1760 = vdwg.mxu0
      %v1761 = vadd.f32 %v1690, %v1756
      %1762 = vst.msk [vmem:[#allocation2] sm:$0xff] %vm1039, %v1761
      %v1763 = vadd.f32 %v974, 1.0
      %v1764 = vadd.f32 %v981, 1.0
      %v1765 = vadd.f32 %v988, 1.0
      %v1766 = vadd.f32 %v995, 1.0
      %v1767 = vrcp.pop %v1763
      %v1768 = vmul.f32 1.0, %v1767
      %v1769 = vrcp.pop %v1764
      %v1770 = vmul.f32 1.0, %v1769
      %v1771 = vrcp.pop %v1765
      %v1772 = vmul.f32 1.0, %v1771
      %v1773 = vrcp.pop %v1766
      %v1774 = vmul.f32 1.0, %v1773
      %v1775 = vld [vmem:[#allocation3] sm:$0xff]
      %v1776 = vmul.f32 %v1768, %v1673
      %v1777 = vmul.f32 %v1770, %v1674
      %v1778 = vmul.f32 %v1772, %v1675
      %v1779 = vmul.f32 %v1774, %v1676
      %1781 = vset.pattern.permute.xlu0 0
      %1782 = vperm.xlu0 %1781, %v1776
      %v1783 = vpop.permute.xlu0 %1782
      %1786 = vset.pattern.permute.xlu0 0
      %1787 = vperm.xlu0 %1786, %v1777
      %v1788 = vpop.permute.xlu0 %1787
      %1791 = vset.pattern.permute.xlu0 0
      %1792 = vperm.xlu0 %1791, %v1778
      %v1793 = vpop.permute.xlu0 %1792
      %1796 = vset.pattern.permute.xlu0 0
      %1797 = vperm.xlu0 %1796, %v1779
      %v1798 = vpop.permute.xlu0 %1797
      %v1800 = vmul.f32 %v943, %v1783
      %v1801 = vmul.f32 %v944, %v1788
      %v1802 = vmul.f32 %v945, %v1793
      %v1803 = vmul.f32 %v946, %v1798
      %v1805 = vsel %vm1039, %v1689, 0
      %1807 = vmatprep.subr.mxu0 0.0
      %1808 = vmatpush1.msra.mxu0 %v1800
      %1809 = vmatprep.subr.mxu0 0.0
      %1810 = vmatpush1.msra.mxu0 %v1801
      %1811 = vmatprep.subr.mxu0 0.0
      %1812 = vmatpush1.msra.mxu0 %v1802
      %1813 = vmatprep.subr.mxu0 0.0
      %1814 = vmatpush1.msra.mxu0 %v1803
      %1815 = vmatprep.subr.mxu0 0.0
      %1816 = vmatpush1.msra.mxu0 0.0
      %1817 = vmatprep.subr.mxu0 0.0
      %1818 = vmatpush1.msra.mxu0 0.0
      %1819 = vmatprep.subr.mxu0 0.0
      %1820 = vmatpush1.msra.mxu0 0.0
      %1821 = vmatprep.subr.mxu0 0.0
      %1822 = vmatpush1.msra.mxu0 0.0
      %1823 = vmatprep.subr.mxu0 0.0
      %1824 = vmatpush1.msra.mxu0 0.0
      %1825 = vmatprep.subr.mxu0 0.0
      %1826 = vmatpush1.msra.mxu0 0.0
      %1827 = vmatprep.subr.mxu0 0.0
      %1828 = vmatpush1.msra.mxu0 0.0
      %1829 = vmatprep.subr.mxu0 0.0
      %1830 = vmatpush1.msra.mxu0 0.0
      %1831 = vmatprep.subr.mxu0 0.0
      %1832 = vmatpush1.msra.mxu0 0.0
      %1833 = vmatprep.subr.mxu0 0.0
      %1834 = vmatpush1.msra.mxu0 0.0
      %1835 = vmatprep.subr.mxu0 0.0
      %1836 = vmatpush1.msra.mxu0 0.0
      %1837 = vmatprep.subr.mxu0 0.0
      %1838 = vmatpush1.msra.mxu0 0.0
      %1839 = vmatprep.subr.mxu0 0.0
      %1840 = vmatpush1.msra.mxu0 0.0
      %1841 = vmatprep.subr.mxu0 0.0
      %1842 = vmatpush1.msra.mxu0 0.0
      %1843 = vmatprep.subr.mxu0 0.0
      %1844 = vmatpush1.msra.mxu0 0.0
      %1845 = vmatprep.subr.mxu0 0.0
      %1846 = vmatpush1.msra.mxu0 0.0
      %1847 = vmatprep.subr.mxu0 0.0
      %1848 = vmatpush1.msra.mxu0 0.0
      %1849 = vmatprep.subr.mxu0 0.0
      %1850 = vmatpush1.msra.mxu0 0.0
      %1851 = vmatprep.subr.mxu0 0.0
      %1852 = vmatpush1.msra.mxu0 0.0
      %1853 = vmatprep.subr.mxu0 0.0
      %1854 = vmatpush1.msra.mxu0 0.0
      %1855 = vmatprep.subr.mxu0 0.0
      %1856 = vmatpush1.msra.mxu0 0.0
      %1857 = vmatprep.subr.mxu0 0.0
      %1858 = vmatpush1.msra.mxu0 0.0
      %1859 = vmatprep.subr.mxu0 0.0
      %1860 = vmatpush1.msra.mxu0 0.0
      %1861 = vmatprep.subr.mxu0 0.0
      %1862 = vmatpush1.msra.mxu0 0.0
      %1863 = vmatprep.subr.mxu0 0.0
      %1864 = vmatpush1.msra.mxu0 0.0
      %1865 = vmatprep.subr.mxu0 0.0
      %1866 = vmatpush1.msra.mxu0 0.0
      %1867 = vmatprep.subr.mxu0 0.0
      %1868 = vmatpush1.msra.mxu0 0.0
      %1869 = vmatprep.subr.mxu0 0.0
      %1870 = vmatpush1.msra.mxu0 0.0
      %1871 = vmatprep.mubr.f32.mxu0 0.0
      %1872 = vmatmul.mubr.f32.gmra.mrb[0].mxu0 %v1805
      %v1873 = vpop.f32.mrb[0].mxu0
      %v1874 = vadd.f32 0.0, %v1873
      %v1875 = vpop.f32.mrb[0].mxu0
      %1876 = vdwg.mxu0
      %v1877 = vadd.f32 %v1775, %v1874
      %1878 = vst.msk [vmem:[#allocation3] sm:$0xff] %vm951, %v1877
      %p1879 = scmp.eq.s32.totalorder %s45, 1
      // Predicated region
      $region125: #{egtf_forward.5} parent=119 // pred_check
        %p1880 = pneg %p1879
      $region126: #{egtf_forward.5} parent=119 // pred_check_branch
        %1882 = sbr.rel (%p1880) target = $region128
      $region127: #{egtf_forward.5} parent=119 // pred_region
        %v1883 = vld [vmem:[#allocation2] sm:$0xff]
        %v1884 = vld [vmem:[%s909] sm:$0xff]
        %v1885 = vld [vmem:[%s19] sm:$0xff]
        %v1886 = vld [vmem:[%s19 + $0x8] sm:$0xff]
        %v1887 = vld [vmem:[%s19 + $0x10] sm:$0xff]
        %v1888 = vld [vmem:[%s19 + $0x18] sm:$0xff]
        %v1889 = vpack.c.bf16 %v1883, %v1883
        %v1890 = vpack.c.bf16 %v1886, %v1885
        %v1891 = vpack.c.bf16 %v1888, %v1887
        %v1892 = vld [vmem:[%s20] sm:$0xff]
        %v1893 = vld [vmem:[%s20 + $0x8] sm:$0xff]
        %v1894 = vld [vmem:[%s20 + $0x10] sm:$0xff]
        %v1895 = vld [vmem:[%s20 + $0x18] sm:$0xff]
        %v1896 = vpack.c.bf16 %v1884, %v1884
        %v1897 = vpack.c.bf16 %v1893, %v1892
        %v1898 = vpack.c.bf16 %v1895, %v1894
        %v1900 = vsel %vm1039, %v1896, 0
        %1902 = vmatprep.subr.bf16.mxu0 0
        %1903 = vmatpush1.bf16.msra.mxu0 %v1897
        %1904 = vmatprep.subr.bf16.mxu0 0
        %1905 = vmatpush1.bf16.msra.mxu0 %v1898
        %1906 = vmatprep.subr.bf16.mxu0 0
        %1907 = vmatpush1.bf16.msra.mxu0 0
        %1908 = vmatprep.subr.bf16.mxu0 0
        %1909 = vmatpush1.bf16.msra.mxu0 0
        %1910 = vmatprep.subr.bf16.mxu0 0
        %1911 = vmatpush1.bf16.msra.mxu0 0
        %1912 = vmatprep.subr.bf16.mxu0 0
        %1913 = vmatpush1.bf16.msra.mxu0 0
        %1914 = vmatprep.subr.bf16.mxu0 0
        %1915 = vmatpush1.bf16.msra.mxu0 0
        %1916 = vmatprep.subr.bf16.mxu0 0
        %1917 = vmatpush1.bf16.msra.mxu0 0
        %1918 = vmatprep.subr.bf16.mxu0 0
        %1919 = vmatpush1.bf16.msra.mxu0 0
        %1920 = vmatprep.subr.bf16.mxu0 0
        %1921 = vmatpush1.bf16.msra.mxu0 0
        %1922 = vmatprep.subr.bf16.mxu0 0
        %1923 = vmatpush1.bf16.msra.mxu0 0
        %1924 = vmatprep.subr.bf16.mxu0 0
        %1925 = vmatpush1.bf16.msra.mxu0 0
        %1926 = vmatprep.subr.bf16.mxu0 0
        %1927 = vmatpush1.bf16.msra.mxu0 0
        %1928 = vmatprep.subr.bf16.mxu0 0
        %1929 = vmatpush1.bf16.msra.mxu0 0
        %1930 = vmatprep.subr.bf16.mxu0 0
        %1931 = vmatpush1.bf16.msra.mxu0 0
        %1932 = vmatprep.subr.bf16.mxu0 0
        %1933 = vmatpush1.bf16.msra.mxu0 0
        %1934 = vmatprep.mubr.bf16.mxu0 0
        %1935 = vmatmul.mubr.bf16.gmra.mrb[0].mxu0 %v1900
        %v1936 = vpop.f32.mrb[0].mxu0
        %v1937 = vadd.f32 0.0, %v1936
        %v1938 = vpop.f32.mrb[0].mxu0
        %v1939 = vpop.f32.mrb[0].mxu0
        %v1940 = vpop.f32.mrb[0].mxu0
        %1941 = vdwg.mxu0
        %v1943 = vsel %vm1039, %v1889, 0
        %1945 = vmatprep.subr.bf16.mxu0 0
        %1946 = vmatpush1.bf16.msra.mxu0 %v1890
        %1947 = vmatprep.subr.bf16.mxu0 0
        %1948 = vmatpush1.bf16.msra.mxu0 %v1891
        %1949 = vmatprep.subr.bf16.mxu0 0
        %1950 = vmatpush1.bf16.msra.mxu0 0
        %1951 = vmatprep.subr.bf16.mxu0 0
        %1952 = vmatpush1.bf16.msra.mxu0 0
        %1953 = vmatprep.subr.bf16.mxu0 0
        %1954 = vmatpush1.bf16.msra.mxu0 0
        %1955 = vmatprep.subr.bf16.mxu0 0
        %1956 = vmatpush1.bf16.msra.mxu0 0
        %1957 = vmatprep.subr.bf16.mxu0 0
        %1958 = vmatpush1.bf16.msra.mxu0 0
        %1959 = vmatprep.subr.bf16.mxu0 0
        %1960 = vmatpush1.bf16.msra.mxu0 0
        %1961 = vmatprep.subr.bf16.mxu0 0
        %1962 = vmatpush1.bf16.msra.mxu0 0
        %1963 = vmatprep.subr.bf16.mxu0 0
        %1964 = vmatpush1.bf16.msra.mxu0 0
        %1965 = vmatprep.subr.bf16.mxu0 0
        %1966 = vmatpush1.bf16.msra.mxu0 0
        %1967 = vmatprep.subr.bf16.mxu0 0
        %1968 = vmatpush1.bf16.msra.mxu0 0
        %1969 = vmatprep.subr.bf16.mxu0 0
        %1970 = vmatpush1.bf16.msra.mxu0 0
        %1971 = vmatprep.subr.bf16.mxu0 0
        %1972 = vmatpush1.bf16.msra.mxu0 0
        %1973 = vmatprep.subr.bf16.mxu0 0
        %1974 = vmatpush1.bf16.msra.mxu0 0
        %1975 = vmatprep.subr.bf16.mxu0 0
        %1976 = vmatpush1.bf16.msra.mxu0 0
        %1977 = vmatprep.mubr.bf16.mxu0 0
        %1978 = vmatmul.mubr.bf16.gmra.mrb[0].mxu0 %v1943
        %v1979 = vpop.f32.mrb[0].mxu0
        %v1980 = vadd.f32 %v1937, %v1979
        %v1981 = vpop.f32.mrb[0].mxu0
        %v1982 = vpop.f32.mrb[0].mxu0
        %v1983 = vpop.f32.mrb[0].mxu0
        %1984 = vdwg.mxu0
        %v1985 = vld [vmem:[%s21] sm:$0x1]
        %v1987 = vlaneseq
        %v1988 = vshrl.u32 %v1987, 7
        %v1989 = vsub.s32 0, %v1988
        %v1990 = vrot.slane %v1985, %v1989
        %v1992 = vadd.f32 %v1980, %v1990
        %v1993 = vxor.u32 %v1992, 2147483648
        %v1994 = vmul.f32 %v1993, 1.442695
        %v1995 = vpow.pop %v1994
        %v1996 = vadd.f32 %v1995, 1.0
        %v1997 = vrcp.pop %v1996
        %v1998 = vmul.f32 1.0, %v1997
        %v1999 = vmul.f32 %v1992, %v1998
        %v2000 = vld [vmem:[%s22] sm:$0xff]
        %v2001 = vld [vmem:[%s22 + $0x8] sm:$0xff]
        %v2002 = vld [vmem:[%s22 + $0x10] sm:$0xff]
        %v2003 = vld [vmem:[%s22 + $0x18] sm:$0xff]
        %v2004 = vpack.c.bf16 %v1999, %v1999
        %v2005 = vpack.c.bf16 %v2001, %v2000
        %v2006 = vpack.c.bf16 %v2003, %v2002
        %v2008 = vsel %vm1039, %v2004, 0
        %2010 = vmatprep.subr.bf16.mxu0 0
        %2011 = vmatpush1.bf16.msra.mxu0 %v2005
        %2012 = vmatprep.subr.bf16.mxu0 0
        %2013 = vmatpush1.bf16.msra.mxu0 %v2006
        %2014 = vmatprep.subr.bf16.mxu0 0
        %2015 = vmatpush1.bf16.msra.mxu0 0
        %2016 = vmatprep.subr.bf16.mxu0 0
        %2017 = vmatpush1.bf16.msra.mxu0 0
        %2018 = vmatprep.subr.bf16.mxu0 0
        %2019 = vmatpush1.bf16.msra.mxu0 0
        %2020 = vmatprep.subr.bf16.mxu0 0
        %2021 = vmatpush1.bf16.msra.mxu0 0
        %2022 = vmatprep.subr.bf16.mxu0 0
        %2023 = vmatpush1.bf16.msra.mxu0 0
        %2024 = vmatprep.subr.bf16.mxu0 0
        %2025 = vmatpush1.bf16.msra.mxu0 0
        %2026 = vmatprep.subr.bf16.mxu0 0
        %2027 = vmatpush1.bf16.msra.mxu0 0
        %2028 = vmatprep.subr.bf16.mxu0 0
        %2029 = vmatpush1.bf16.msra.mxu0 0
        %2030 = vmatprep.subr.bf16.mxu0 0
        %2031 = vmatpush1.bf16.msra.mxu0 0
        %2032 = vmatprep.subr.bf16.mxu0 0
        %2033 = vmatpush1.bf16.msra.mxu0 0
        %2034 = vmatprep.subr.bf16.mxu0 0
        %2035 = vmatpush1.bf16.msra.mxu0 0
        %2036 = vmatprep.subr.bf16.mxu0 0
        %2037 = vmatpush1.bf16.msra.mxu0 0
        %2038 = vmatprep.subr.bf16.mxu0 0
        %2039 = vmatpush1.bf16.msra.mxu0 0
        %2040 = vmatprep.subr.bf16.mxu0 0
        %2041 = vmatpush1.bf16.msra.mxu0 0
        %2042 = vmatprep.mubr.bf16.mxu0 0
        %2043 = vmatmul.mubr.bf16.gmra.mrb[0].mxu0 %v2008
        %v2044 = vpop.f32.mrb[0].mxu0
        %v2045 = vadd.f32 0.0, %v2044
        %v2046 = vpop.f32.mrb[0].mxu0
        %v2047 = vpop.f32.mrb[0].mxu0
        %v2048 = vpop.f32.mrb[0].mxu0
        %2049 = vdwg.mxu0
        %v2050 = vadd.f32 %v1884, %v2045
        %v2051 = vld [vmem:[%s23] sm:$0x1]
        %v2053 = vlaneseq
        %v2054 = vshrl.u32 %v2053, 7
        %v2055 = vsub.s32 0, %v2054
        %v2056 = vrot.slane %v2051, %v2055
        %v2058 = vadd.f32 %v2050, %v2056
        %2059 = vst.msk [vmem:[%s921] sm:$0xff] %vm1039, %v2058
        %v2060 = vld [vmem:[%s913] sm:$0xff]
        %v2061 = vld [vmem:[#allocation3] sm:$0xff]
        %v2062 = vld [vmem:[%s917] sm:$0xff]
        %2064 = vset.pattern.permute.xlu0 0
        %2065 = vperm.xlu0 %2064, %v2062
        %v2066 = vpop.permute.xlu0 %2065
        %v2068 = vmul.f32 %v2061, %v2066
        %v2069 = vadd.f32 %v2060, %v2068
        %2070 = vst.msk [vmem:[%s925] sm:$0xff] %vm951, %v2069
      $region128: #{egtf_forward.5} parent=119 // pred_fallthru
        _
      %p2071 = scmp.lt.s32.totalorder %s44, 1
      %s2072 = scalar_select %p2071, %s44, 1
      %s2073 = smul.addr %s2072, 8
      %s2074 = scalar_lea.vmem %s25, %s2073
      %p2075 = scmp.lt.s32.totalorder %s44, 1
      %s2076 = scalar_select %p2075, %s44, 1
      %s2077 = smul.addr %s2076, 8
      %s2078 = scalar_lea.vmem %s26, %s2077
      // Predicated region
      $region129: #{egtf_forward.5} parent=119 // pred_check
        %p2079 = pneg %p630
      $region130: #{egtf_forward.5} parent=119 // pred_check_branch
        %2081 = sbr.rel (%p2079) target = $region132
      $region131: #{egtf_forward.5} parent=119 // pred_region
        _
      $region132: #{egtf_forward.5} parent=119 // pred_fallthru
        _
      // Predicated region
      $region133: #{egtf_forward.5} parent=119 // pred_check
        %p2082 = pneg %p656
      $region134: #{egtf_forward.5} parent=119 // pred_check_branch
        %2084 = sbr.rel (%p2082) target = $region136
      $region135: #{egtf_forward.5} parent=119 // pred_region
        _
      $region136: #{egtf_forward.5} parent=119 // pred_fallthru
        _
    $region120: #{egtf_forward.5} parent=5 // pred_fallthru
      _
    %p2085 = scmp.le.s32.totalorder 2, %s35
    // Predicated region
    $region137: #{egtf_forward.5} parent=5 // pred_check
      %p2086 = pneg %p2085
    $region138: #{egtf_forward.5} parent=5 // pred_check_branch
      %2088 = sbr.rel (%p2086) target = $region140
    $region139: #{egtf_forward.5} parent=5 // pred_region
      %s2089 = ssub.s32 %s35, 2
      // Predicated region
      $region141: #{egtf_forward.5} parent=139 // pred_check
        %p2090 = pneg %p636
      $region142: #{egtf_forward.5} parent=139 // pred_check_branch
        %2092 = sbr.rel (%p2090) target = $region144
      $region143: #{egtf_forward.5} parent=139 // pred_region
        %p2093 = scmp.lt.s32.totalorder %s46, 1
        %s2094 = scalar_select %p2093, %s46, 1
        %s2095 = smul.addr %s2094, 8
        %s2096 = scalar_lea.vmem %s25, %s2095
      $region144: #{egtf_forward.5} parent=139 // pred_fallthru
        _
      // Predicated region
      $region145: #{egtf_forward.5} parent=139 // pred_check
        %p2097 = pneg %p662
      $region146: #{egtf_forward.5} parent=139 // pred_check_branch
        %2099 = sbr.rel (%p2097) target = $region148
      $region147: #{egtf_forward.5} parent=139 // pred_region
        %p2100 = scmp.lt.s32.totalorder %s46, 1
        %s2101 = scalar_select %p2100, %s46, 1
        %s2102 = smul.addr %s2101, 8
        %s2103 = scalar_lea.vmem %s26, %s2102
      $region148: #{egtf_forward.5} parent=139 // pred_fallthru
        _
    $region140: #{egtf_forward.5} parent=5 // pred_fallthru
      _
  $region6: #{egtf_forward.5} parent=0 // loop_footer
    %s39 = sadd.s32 1, %s35
  $region7: #{egtf_forward.5} parent=0 // loop_footer_branch
    %34 = sbr.rel target = $region3
  $region8: #{egtf_forward.5} parent=0 // loop_exit
    _

</llo_original>
